<compile_context>
chip_gen: v7x
topology: tpu7x:2x2x1
jax: 0.10.0
libtpu: 0.0.40
codegen_flags: <defaults>
</compile_context>

<pallas_src>
import functools

import jax
import jax.numpy as jnp
import numpy as np
from jax import lax
from jax.experimental import pallas as pl
from jax.experimental.pallas import tpu as pltpu

_MIB = 1024 * 1024


def _mosaic_params(semantics, needed_bytes):
  # Floor at the v6e/v7x scoped default, cap at physical v5e/v6e VMEM.
  limit = int(min(max(needed_bytes * 3 // 2, 32 * _MIB), 128 * _MIB))
  return pltpu.CompilerParams(dimension_semantics=semantics,
                              vmem_limit_bytes=limit)


# ----------------------------------------------------------------------------
# Kernel A: fused tanh + layer-0 input projection
#   gx0 = bf16( tanh(x) @ W_ih0 + (b_ih0 + b_hh0) )   x: (T*B, W) -> (T*B, 4H)
# ----------------------------------------------------------------------------
def _input_proj_kernel(x_ref, w_ref, b_ref, o_ref):
  xb = jnp.tanh(x_ref[...]).astype(jnp.bfloat16)      # tanh in f32, cast for MXU
  o_ref[...] = (jnp.dot(xb, w_ref[...], preferred_element_type=jnp.float32)
                + b_ref[...]).astype(jnp.bfloat16)


def input_projection(x_flat, w_ih0_t_bf16, b0_2d):
  TB, W = x_flat.shape
  G = w_ih0_t_bf16.shape[1]                           # 4H
  tm = min(TB, 512)                                   # ~512-row, lane-dense tiles
  TB_pad = pl.cdiv(TB, tm) * tm                       # pad rows instead of one
  if TB_pad != TB:                                    # giant single tile
    x_flat = jnp.pad(x_flat, ((0, TB_pad - TB), (0, 0)))
  grid = (TB_pad // tm,)

  vmem_needed = (2 * tm * W * 4                       # x blocks (f32, x2 buffers)
                 + W * G * 2 + G * 4                  # weights + bias (x1 buffer)
                 + 2 * tm * G * 2)                    # out blocks (bf16, x2)

  out = pl.pallas_call(
      _input_proj_kernel,
      grid_spec=pltpu.PrefetchScalarGridSpec(
          num_scalar_prefetch=0,
          grid=grid,
          in_specs=[
              pl.BlockSpec((tm, W), lambda i: (i, 0)),
              pl.BlockSpec((W, G), lambda i: (0, 0),
                           pipeline_mode=pl.Buffered(1)),
              pl.BlockSpec((1, G), lambda i: (0, 0),
                           pipeline_mode=pl.Buffered(1)),
          ],
          out_specs=pl.BlockSpec((tm, G), lambda i: (i, 0)),
      ),
      out_shape=jax.ShapeDtypeStruct((TB_pad, G), jnp.bfloat16),
      compiler_params=_mosaic_params(("parallel",), vmem_needed),
  )(x_flat, w_ih0_t_bf16, b0_2d)
  return out[:TB]


# ----------------------------------------------------------------------------
# Kernel B: fused multi-layer LSTM recurrence + cat(h,c) + tanh + fc
# ----------------------------------------------------------------------------
def _lstm_stack_fc_kernel(gx0_ref, wih_ref, whh_ref, b_ref, fcw_ref, fcb_ref,
                          out_ref, hseq_sc, gx_sc, hc_sc, *, T, Bc, H, L):
  """gx0_ref : (T, Bc, 4H) bf16  precomputed layer-0 gates (bias folded in)
     wih_ref : (max(L-1,1), H, 4H) bf16  input weights, layers 1..L-1
     whh_ref : (L, H, 4H) bf16           recurrent weights, all layers
     b_ref   : (max(L-1,1), 4H) f32      combined biases, layers 1..L-1
     fcw_ref : (2*L*H, E) bf16, fcb_ref: (1, E) f32
     out_ref : (Bc, E) f32
     hseq_sc : (T, Bc, H)  bf16  hidden sequence of current layer (VMEM only)
     gx_sc   : (T, Bc, 4H) bf16  precomputed input gates, layers >= 1
     hc_sc   : (Bc, 2*L*H) f32   cat(h, c) feature, PyTorch layout
  """
  unroll = T if T <= 8 else 4      # full unroll only for short sequences

  def run_layer(gates_fn, layer, store_hseq):
    whh = whh_ref[layer]                                  # (H, 4H) bf16, once

    def step(t, carry):
      h, c = carry
      # bf16 gates + f32 recurrent matmul -> f32 gate math (no bf16 VPU on v5e)
      g = gates_fn(t) + jnp.dot(h.astype(jnp.bfloat16), whh,
                                preferred_element_type=jnp.float32)
      i_g = jax.nn.sigmoid(g[:, 0 * H:1 * H])
      f_g = jax.nn.sigmoid(g[:, 1 * H:2 * H])
      g_g = jnp.tanh(g[:, 2 * H:3 * H])
      o_g = jax.nn.sigmoid(g[:, 3 * H:4 * H])
      c_new = f_g * c + i_g * g_g
      h_new = o_g * jnp.tanh(c_new)
      if store_hseq:                  # static python bool: last layer skips it
        hseq_sc[t] = h_new.astype(jnp.bfloat16)
      return (h_new, c_new)

    zeros = jnp.zeros((Bc, H), jnp.float32)
    h_T, c_T = lax.fori_loop(0, T, step, (zeros, zeros), unroll=unroll)
    # cat((hidden, cell), dim=2).transpose(0,1).reshape(B,-1) layout:
    hc_sc[:, layer * 2 * H: layer * 2 * H + H] = h_T
    hc_sc[:, layer * 2 * H + H: (layer + 1) * 2 * H] = c_T

  # Layer 0: input projection precomputed by kernel A.
  run_layer(lambda t: gx0_ref[t], 0, store_hseq=(L > 1))

  # Layers 1..L-1: hoist the whole-sequence input projection into ONE large
  # (T*Bc, H) x (H, 4H) MXU matmul before the cheap recurrence.
  for l in range(1, L):
    hs = hseq_sc[...].reshape(T * Bc, H)                  # bf16, aligned no-op
    gx = (jnp.dot(hs, wih_ref[l - 1], preferred_element_type=jnp.float32)
          + b_ref[pl.ds(l - 1, 1), :])
    gx_sc[...] = gx.astype(jnp.bfloat16).reshape(T, Bc, 4 * H)
    run_layer(lambda t: gx_sc[t], l, store_hseq=(l < L - 1))

  # Final tanh + Linear, fused (lane-dense output, E multiple of 128).
  out_ref[...] = (jnp.dot(jnp.tanh(hc_sc[...]).astype(jnp.bfloat16),
                          fcw_ref[...], preferred_element_type=jnp.float32)
                  + fcb_ref[...])


def lstm_stack_fc(gx0, wih_rest, whh_all, b_rest, fc_w_t, fc_b2d,
                  *, T, B, H, L, Bc):
  nb = B // Bc
  Lm1 = wih_rest.shape[0]
  E = fc_w_t.shape[1]
  G = 4 * H
  F = 2 * L * H
  kernel = functools.partial(_lstm_stack_fc_kernel, T=T, Bc=Bc, H=H, L=L)

  one = pl.Buffered(1)      # one long step per chunk -> double-buffering is waste
  vmem_needed = (
      T * Bc * G * 2                      # gx0 block (bf16, single-buffered)
      + (Lm1 + L) * H * G * 2             # LSTM weights (bf16)
      + Lm1 * G * 4 + E * 4               # biases (f32)
      + F * E * 2                         # fc weights (bf16)
      + 2 * Bc * E * 4                    # output block (x2 buffers)
      + T * Bc * H * 2                    # hseq scratch (bf16)
      + T * Bc * G * 2                    # gate scratch (bf16)
      + Bc * F * 4)                       # cat(h, c) scratch (f32)

  return pl.pallas_call(
      kernel,
      grid_spec=pltpu.PrefetchScalarGridSpec(
          num_scalar_prefetch=0,
          grid=(nb,),                     # batch-chunk axis (2 TCs on v7x)
          in_specs=[
              pl.BlockSpec((T, Bc, G), lambda b: (0, b, 0), pipeline_mode=one),
              pl.BlockSpec((Lm1, H, G), lambda b: (0, 0, 0), pipeline_mode=one),
              pl.BlockSpec((L, H, G), lambda b: (0, 0, 0), pipeline_mode=one),
              pl.BlockSpec((Lm1, G), lambda b: (0, 0), pipeline_mode=one),
              pl.BlockSpec((F, E), lambda b: (0, 0), pipeline_mode=one),
              pl.BlockSpec((1, E), lambda b: (0, 0), pipeline_mode=one),
          ],
          out_specs=pl.BlockSpec((Bc, E), lambda b: (b, 0)),
          scratch_shapes=[
              pltpu.VMEM((T, Bc, H), jnp.bfloat16),   # hidden sequence
              pltpu.VMEM((T, Bc, G), jnp.bfloat16),   # gates, layers >= 1
              pltpu.VMEM((Bc, F), jnp.float32),       # cat(h, c)
          ],
      ),
      out_shape=jax.ShapeDtypeStruct((B, E), jnp.float32),
      compiler_params=_mosaic_params(("parallel",), vmem_needed),
  )(gx0, wih_rest, whh_all, b_rest, fc_w_t, fc_b2d)


# ----------------------------------------------------------------------------
# Forward pass (gather + padding glue in JAX, everything else in Pallas)
# ----------------------------------------------------------------------------
@jax.jit
def qst_encoder_forward(prep, question):
  """question: (batch, seq) int32 -> (batch, embed_size) float32."""
  B, T = question.shape
  # Time-major gather: transpose the tiny index matrix, not the activations.
  x = jnp.take(prep["embedding"], question.T, axis=0)        # (T, B, W) f32
  W = x.shape[-1]
  # Pad batch to a multiple of 16 sublanes: keeps bf16 scratch tiles dense and
  # feeds the per-step recurrence matmul a few more MXU rows.
  B_k = ((B + 15) // 16) * 16
  if B_k != B:
    x = jnp.pad(x, ((0, 0), (0, B_k - B), (0, 0)))
  x_flat = x.reshape(T * B_k, W)                             # row = t*B_k + b

  gx0 = input_projection(x_flat, prep["w_ih0_t"], prep["b0"])  # (T*B_k,4H) bf16

  L, H, _ = prep["whh_all"].shape
  gx0 = gx0.reshape(T, B_k, 4 * H)

  # Split the batch across grid steps only when it is big enough to matter.
  Bc = B_k // 2 if (B_k >= 256 and B_k % 32 == 0) else B_k
  out = lstm_stack_fc(gx0, prep["wih_rest"], prep["whh_all"], prep["b_rest"],
                      prep["fc_w_t"], prep["fc_b"], T=T, B=B_k, H=H, L=L, Bc=Bc)
  return out[:B]


# ----------------------------------------------------------------------------
# Parameters (PyTorch layout) and kernel-ready preparation
# ----------------------------------------------------------------------------
def init_params(key, qst_vocab_size, word_embed_size, embed_size,
                num_layers, hidden_size):
  keys = jax.random.split(key, 3 + 4 * num_layers)
  raw = {"embedding": 0.1 * jax.random.normal(
      keys[0], (qst_vocab_size, word_embed_size), jnp.float32)}
  layers, k, in_size = [], 1, word_embed_size
  for _ in range(num_layers):
    layers.append({
        "w_ih": 0.1 * jax.random.normal(keys[k], (4 * hidden_size, in_size), jnp.float32),
        "w_hh": 0.1 * jax.random.normal(keys[k + 1], (4 * hidden_size, hidden_size), jnp.float32),
        "b_ih": 0.1 * jax.random.normal(keys[k + 2], (4 * hidden_size,), jnp.float32),
        "b_hh": 0.1 * jax.random.normal(keys[k + 3], (4 * hidden_size,), jnp.float32),
    })
    k += 4
    in_size = hidden_size
  raw["lstm"] = layers
  raw["fc_w"] = 0.1 * jax.random.normal(
      keys[k], (embed_size, 2 * num_layers * hidden_size), jnp.float32)
  raw["fc_b"] = 0.1 * jax.random.normal(keys[k + 1], (embed_size,), jnp.float32)
  return raw


def prepare_params(raw):
  """Transpose / stack / cast weights into the kernel layout (bf16 matmuls)."""
  L = len(raw["lstm"])
  H = raw["lstm"][0]["w_hh"].shape[1]
  l0 = raw["lstm"][0]
  prep = {
      "embedding": raw["embedding"].astype(jnp.float32),
      "w_ih0_t": l0["w_ih"].T.astype(jnp.bfloat16),                     # (W, 4H)
      "b0": (l0["b_ih"] + l0["b_hh"]).reshape(1, 4 * H).astype(jnp.float32),
      "whh_all": jnp.stack([ly["w_hh"].T for ly in raw["lstm"]], 0
                           ).astype(jnp.bfloat16),                      # (L, H, 4H)
  }
  if L > 1:
    prep["wih_rest"] = jnp.stack([ly["w_ih"].T for ly in raw["lstm"][1:]], 0
                                 ).astype(jnp.bfloat16)                 # (L-1, H, 4H)
    prep["b_rest"] = jnp.stack([ly["b_ih"] + ly["b_hh"] for ly in raw["lstm"][1:]],
                               0).astype(jnp.float32)                   # (L-1, 4H)
  else:
    prep["wih_rest"] = jnp.zeros((1, H, 4 * H), jnp.bfloat16)           # never read
    prep["b_rest"] = jnp.zeros((1, 4 * H), jnp.float32)
  prep["fc_w_t"] = raw["fc_w"].T.astype(jnp.bfloat16)                   # (2LH, E)
  prep["fc_b"] = raw["fc_b"].reshape(1, -1).astype(jnp.float32)
  return prep


# ----------------------------------------------------------------------------
# Pure-JAX f32 reference (lax.scan LSTM) for correctness check
# ----------------------------------------------------------------------------
def qst_encoder_reference(raw, question):
  emb = jnp.tanh(jnp.take(raw["embedding"], question, axis=0))   # (B, T, W)
  x = jnp.transpose(emb, (1, 0, 2)).astype(jnp.float32)          # (T, B, W)
  T, B, _ = x.shape
  hs, cs = [], []
  for layer in raw["lstm"]:
    H = layer["w_hh"].shape[1]
    w_ih_t, w_hh_t = layer["w_ih"].T, layer["w_hh"].T
    bias = layer["b_ih"] + layer["b_hh"]

    def step(carry, x_t, w_ih_t=w_ih_t, w_hh_t=w_hh_t, bias=bias, H=H):
      h, c = carry
      g = x_t @ w_ih_t + h @ w_hh_t + bias
      i = jax.nn.sigmoid(g[:, 0 * H:1 * H])
      f = jax.nn.sigmoid(g[:, 1 * H:2 * H])
      gg = jnp.tanh(g[:, 2 * H:3 * H])
      o = jax.nn.sigmoid(g[:, 3 * H:4 * H])
      c = f * c + i * gg
      h = o * jnp.tanh(c)
      return (h, c), h

    init = (jnp.zeros((B, H), jnp.float32), jnp.zeros((B, H), jnp.float32))
    (h_T, c_T), h_seq = lax.scan(step, init, x)
    x = h_seq
    hs.append(h_T)
    cs.append(c_T)
  hidden, cell = jnp.stack(hs, 0), jnp.stack(cs, 0)
  feat = jnp.concatenate([hidden, cell], 2)
  feat = jnp.transpose(feat, (1, 0, 2)).reshape(B, -1)
  return jnp.tanh(feat) @ raw["fc_w"].T + raw["fc_b"]


if __name__ == "__main__":
  # Small, lane-aligned demo shapes (real model: H=512, E=512 — also aligned).
  QST_VOCAB = 60
  WORD_EMBED = 128
  EMBED = 128
  NUM_LAYERS = 2
  HIDDEN = 128
  BATCH = 2
  SEQ = 8

  key = jax.random.PRNGKey(0)
  pkey, qkey = jax.random.split(key)
  raw = init_params(pkey, QST_VOCAB, WORD_EMBED, EMBED, NUM_LAYERS, HIDDEN)
  prep = prepare_params(raw)
  question = jax.random.randint(qkey, (BATCH, SEQ), 0, QST_VOCAB, dtype=jnp.int32)

  out = jax.block_until_ready(qst_encoder_forward(prep, question))
  assert out.shape == (BATCH, EMBED)

  ref = jax.block_until_ready(qst_encoder_reference(raw, question))
  # bf16 matmul weights / activations / gate scratch vs f32 reference.
  np.testing.assert_allclose(np.asarray(out), np.asarray(ref),
                             rtol=4e-2, atol=4e-2)
  print("KERNEL_OK")
</pallas_src>

<mosaic_0001>
module attributes {stable_mosaic.version = 11 : i64} {
  func.func @_input_proj_kernel(%arg0: i32, %arg1: memref<128x128xf32, #tpu.memory_space<vmem>>, %arg2: memref<128x512xbf16, #tpu.memory_space<vmem>>, %arg3: memref<1x512xf32, #tpu.memory_space<vmem>>, %arg4: memref<128x512xbf16, #tpu.memory_space<vmem>>) attributes {dimension_semantics = [#tpu.dimension_semantics<parallel>], iteration_bounds = array<i64: 1>, scalar_prefetch = 0 : i64, scratch_operands = 0 : i64, tpu.core_type = #tpu.core_type<tc>, window_params = [{transform_indices = @transform_0, window_bounds = array<i64: 128, 128>}, {pipeline_mode = #tpu.pipeline_mode<synchronous>, transform_indices = @transform_1, window_bounds = array<i64: 128, 512>}, {pipeline_mode = #tpu.pipeline_mode<synchronous>, transform_indices = @transform_2, window_bounds = array<i64: 1, 512>}, {transform_indices = @transform_3, window_bounds = array<i64: 128, 512>}]} {
    %c0 = arith.constant 0 : index
    %c0_0 = arith.constant 0 : index
    %0 = vector.load %arg1[%c0, %c0_0] : memref<128x128xf32, #tpu.memory_space<vmem>>, vector<128x128xf32>
    %1 = math.tanh %0 : vector<128x128xf32>
    %2 = arith.truncf %1 : vector<128x128xf32> to vector<128x128xbf16>
    %c0_1 = arith.constant 0 : index
    %c0_2 = arith.constant 0 : index
    %3 = vector.load %arg2[%c0_1, %c0_2] : memref<128x512xbf16, #tpu.memory_space<vmem>>, vector<128x512xbf16>
    %cst = arith.constant dense<0.000000e+00> : vector<128x512xf32>
    %4 = tpu.matmul %2, %3, %cst {dimension_numbers = #tpu.dot_dimension_numbers<[1], [0], [0], [1], [0, 0, 1, 1], [], []>} : vector<128x128xbf16>, vector<128x512xbf16>, vector<128x512xf32> -> vector<128x512xf32>
    %c0_3 = arith.constant 0 : index
    %c0_4 = arith.constant 0 : index
    %5 = vector.load %arg3[%c0_3, %c0_4] : memref<1x512xf32, #tpu.memory_space<vmem>>, vector<1x512xf32>
    %6 = vector.broadcast %5 : vector<1x512xf32> to vector<128x512xf32>
    %7 = arith.addf %4, %6 : vector<128x512xf32>
    %8 = arith.truncf %7 : vector<128x512xf32> to vector<128x512xbf16>
    %c0_5 = arith.constant 0 : index
    %c0_6 = arith.constant 0 : index
    %9 = vector.load %arg4[%c0_5, %c0_6] : memref<128x512xbf16, #tpu.memory_space<vmem>>, vector<128x512xbf16>
    tpu.vector_store %arg4[%c0_5, %c0_6], %8 {strides = array<i32>} : memref<128x512xbf16, #tpu.memory_space<vmem>>, vector<128x512xbf16>,
    return
  }
  func.func @transform_0(%arg0: i32) -> (i32, i32) {
    %c0_i32 = arith.constant 0 : i32
    %c0_i32_0 = arith.constant 0 : i32
    return %arg0, %c0_i32 : i32, i32
  }
  func.func @transform_1(%arg0: i32) -> (i32, i32) {
    %c0_i32 = arith.constant 0 : i32
    %c0_i32_0 = arith.constant 0 : i32
    %c0_i32_1 = arith.constant 0 : i32
    return %c0_i32, %c0_i32_0 : i32, i32
  }
  func.func @transform_2(%arg0: i32) -> (i32, i32) {
    %c0_i32 = arith.constant 0 : i32
    %c0_i32_0 = arith.constant 0 : i32
    %c0_i32_1 = arith.constant 0 : i32
    return %c0_i32, %c0_i32_0 : i32, i32
  }
  func.func @transform_3(%arg0: i32) -> (i32, i32) {
    %c0_i32 = arith.constant 0 : i32
    %c0_i32_0 = arith.constant 0 : i32
    return %arg0, %c0_i32 : i32, i32
  }
}

module attributes {stable_mosaic.version = 11 : i64} {
  func.func @_lstm_stack_fc_kernel(%arg0: i32, %arg1: memref<8x16x512xbf16, #tpu.memory_space<vmem>>, %arg2: memref<1x128x512xbf16, #tpu.memory_space<vmem>>, %arg3: memref<2x128x512xbf16, #tpu.memory_space<vmem>>, %arg4: memref<1x512xf32, #tpu.memory_space<vmem>>, %arg5: memref<512x128xbf16, #tpu.memory_space<vmem>>, %arg6: memref<1x128xf32, #tpu.memory_space<vmem>>, %arg7: memref<16x128xf32, #tpu.memory_space<vmem>>, %arg8: memref<8x16x128xbf16, #tpu.memory_space<vmem>>, %arg9: memref<8x16x512xbf16, #tpu.memory_space<vmem>>, %arg10: memref<16x512xf32, #tpu.memory_space<vmem>>) attributes {dimension_semantics = [#tpu.dimension_semantics<parallel>], iteration_bounds = array<i64: 1>, scalar_prefetch = 0 : i64, scratch_operands = 3 : i64, tpu.core_type = #tpu.core_type<tc>, window_params = [{pipeline_mode = #tpu.pipeline_mode<synchronous>, transform_indices = @transform_0, window_bounds = array<i64: 8, 16, 512>}, {pipeline_mode = #tpu.pipeline_mode<synchronous>, transform_indices = @transform_1, window_bounds = array<i64: 1, 128, 512>}, {pipeline_mode = #tpu.pipeline_mode<synchronous>, transform_indices = @transform_2, window_bounds = array<i64: 2, 128, 512>}, {pipeline_mode = #tpu.pipeline_mode<synchronous>, transform_indices = @transform_3, window_bounds = array<i64: 1, 512>}, {pipeline_mode = #tpu.pipeline_mode<synchronous>, transform_indices = @transform_4, window_bounds = array<i64: 512, 128>}, {pipeline_mode = #tpu.pipeline_mode<synchronous>, transform_indices = @transform_5, window_bounds = array<i64: 1, 128>}, {transform_indices = @transform_6, window_bounds = array<i64: 16, 128>}]} {
    %c0 = arith.constant 0 : index
    %c0_0 = arith.constant 0 : index
    %c0_1 = arith.constant 0 : index
    %0 = vector.load %arg3[%c0, %c0_0, %c0_1] : memref<2x128x512xbf16, #tpu.memory_space<vmem>>, vector<1x128x512xbf16>
    %1 = vector.shape_cast %0 : vector<1x128x512xbf16> to vector<128x512xbf16>
    %cst = arith.constant 0.000000e+00 : f32
    %2 = vector.broadcast %cst : f32 to vector<16x128xf32>
    %c0_i32 = arith.constant 0 : i32
    %3 = arith.index_cast %c0_i32 : i32 to index
    %c0_2 = arith.constant 0 : index
    %c0_3 = arith.constant 0 : index
    %4 = vector.load %arg1[%3, %c0_2, %c0_3] : memref<8x16x512xbf16, #tpu.memory_space<vmem>>, vector<1x16x512xbf16>
    %5 = vector.shape_cast %4 : vector<1x16x512xbf16> to vector<16x512xbf16>
    %6 = arith.truncf %2 : vector<16x128xf32> to vector<16x128xbf16>
    %cst_4 = arith.constant dense<0.000000e+00> : vector<16x512xf32>
    %7 = tpu.matmul %6, %1, %cst_4 {dimension_numbers = #tpu.dot_dimension_numbers<[1], [0], [0], [1], [0, 0, 1, 1], [], []>} : vector<16x128xbf16>, vector<128x512xbf16>, vector<16x512xf32> -> vector<16x512xf32>
    %8 = arith.extf %5 : vector<16x512xbf16> to vector<16x512xf32>
    %9 = arith.addf %8, %7 : vector<16x512xf32>
    %10 = vector.extract_strided_slice %9 {offsets = [0, 0], sizes = [16, 128], strides = [1, 1]} : vector<16x512xf32> to vector<16x128xf32>
    %11 = arith.negf %10 : vector<16x128xf32>
    %12 = math.exp %11 : vector<16x128xf32>
    %cst_5 = arith.constant 1.000000e+00 : f32
    %13 = vector.broadcast %cst_5 : f32 to vector<16x128xf32>
    %14 = arith.addf %13, %12 : vector<16x128xf32>
    %15 = arith.divf %13, %14 : vector<16x128xf32>
    %16 = vector.extract_strided_slice %9 {offsets = [0, 128], sizes = [16, 128], strides = [1, 1]} : vector<16x512xf32> to vector<16x128xf32>
    %17 = arith.negf %16 : vector<16x128xf32>
    %18 = math.exp %17 : vector<16x128xf32>
    %cst_6 = arith.constant 1.000000e+00 : f32
    %19 = vector.broadcast %cst_6 : f32 to vector<16x128xf32>
    %20 = arith.addf %19, %18 : vector<16x128xf32>
    %21 = arith.divf %19, %20 : vector<16x128xf32>
    %22 = vector.extract_strided_slice %9 {offsets = [0, 256], sizes = [16, 128], strides = [1, 1]} : vector<16x512xf32> to vector<16x128xf32>
    %23 = math.tanh %22 : vector<16x128xf32>
    %24 = vector.extract_strided_slice %9 {offsets = [0, 384], sizes = [16, 128], strides = [1, 1]} : vector<16x512xf32> to vector<16x128xf32>
    %25 = arith.negf %24 : vector<16x128xf32>
    %26 = math.exp %25 : vector<16x128xf32>
    %cst_7 = arith.constant 1.000000e+00 : f32
    %27 = vector.broadcast %cst_7 : f32 to vector<16x128xf32>
    %28 = arith.addf %27, %26 : vector<16x128xf32>
    %29 = arith.divf %27, %28 : vector<16x128xf32>
    %30 = arith.mulf %21, %2 : vector<16x128xf32>
    %31 = arith.mulf %15, %23 : vector<16x128xf32>
    %32 = arith.addf %30, %31 : vector<16x128xf32>
    %33 = math.tanh %32 : vector<16x128xf32>
    %34 = arith.mulf %29, %33 : vector<16x128xf32>
    %35 = arith.truncf %34 : vector<16x128xf32> to vector<16x128xbf16>
    %36 = arith.index_cast %c0_i32 : i32 to index
    %c0_8 = arith.constant 0 : index
    %c0_9 = arith.constant 0 : index
    %37 = vector.load %arg8[%36, %c0_8, %c0_9] : memref<8x16x128xbf16, #tpu.memory_space<vmem>>, vector<1x16x128xbf16>
    %38 = vector.shape_cast %37 : vector<1x16x128xbf16> to vector<16x128xbf16>
    %39 = vector.shape_cast %35 : vector<16x128xbf16> to vector<1x16x128xbf16>
    tpu.vector_store %arg8[%36, %c0_8, %c0_9], %39 {strides = array<i32>} : memref<8x16x128xbf16, #tpu.memory_space<vmem>>, vector<1x16x128xbf16>,
    %c1_i32 = arith.constant 1 : i32
    %40 = arith.index_cast %c1_i32 : i32 to index
    %c0_10 = arith.constant 0 : index
    %c0_11 = arith.constant 0 : index
    %41 = vector.load %arg1[%40, %c0_10, %c0_11] : memref<8x16x512xbf16, #tpu.memory_space<vmem>>, vector<1x16x512xbf16>
    %42 = vector.shape_cast %41 : vector<1x16x512xbf16> to vector<16x512xbf16>
    %43 = arith.truncf %34 : vector<16x128xf32> to vector<16x128xbf16>
    %cst_12 = arith.constant dense<0.000000e+00> : vector<16x512xf32>
    %44 = tpu.matmul %43, %1, %cst_12 {dimension_numbers = #tpu.dot_dimension_numbers<[1], [0], [0], [1], [0, 0, 1, 1], [], []>} : vector<16x128xbf16>, vector<128x512xbf16>, vector<16x512xf32> -> vector<16x512xf32>
    %45 = arith.extf %42 : vector<16x512xbf16> to vector<16x512xf32>
    %46 = arith.addf %45, %44 : vector<16x512xf32>
    %47 = vector.extract_strided_slice %46 {offsets = [0, 0], sizes = [16, 128], strides = [1, 1]} : vector<16x512xf32> to vector<16x128xf32>
    %48 = arith.negf %47 : vector<16x128xf32>
    %49 = math.exp %48 : vector<16x128xf32>
    %cst_13 = arith.constant 1.000000e+00 : f32
    %50 = vector.broadcast %cst_13 : f32 to vector<16x128xf32>
    %51 = arith.addf %50, %49 : vector<16x128xf32>
    %52 = arith.divf %50, %51 : vector<16x128xf32>
    %53 = vector.extract_strided_slice %46 {offsets = [0, 128], sizes = [16, 128], strides = [1, 1]} : vector<16x512xf32> to vector<16x128xf32>
    %54 = arith.negf %53 : vector<16x128xf32>
    %55 = math.exp %54 : vector<16x128xf32>
    %cst_14 = arith.constant 1.000000e+00 : f32
    %56 = vector.broadcast %cst_14 : f32 to vector<16x128xf32>
    %57 = arith.addf %56, %55 : vector<16x128xf32>
    %58 = arith.divf %56, %57 : vector<16x128xf32>
    %59 = vector.extract_strided_slice %46 {offsets = [0, 256], sizes = [16, 128], strides = [1, 1]} : vector<16x512xf32> to vector<16x128xf32>
    %60 = math.tanh %59 : vector<16x128xf32>
    %61 = vector.extract_strided_slice %46 {offsets = [0, 384], sizes = [16, 128], strides = [1, 1]} : vector<16x512xf32> to vector<16x128xf32>
    %62 = arith.negf %61 : vector<16x128xf32>
    %63 = math.exp %62 : vector<16x128xf32>
    %cst_15 = arith.constant 1.000000e+00 : f32
    %64 = vector.broadcast %cst_15 : f32 to vector<16x128xf32>
    %65 = arith.addf %64, %63 : vector<16x128xf32>
    %66 = arith.divf %64, %65 : vector<16x128xf32>
    %67 = arith.mulf %58, %32 : vector<16x128xf32>
    %68 = arith.mulf %52, %60 : vector<16x128xf32>
    %69 = arith.addf %67, %68 : vector<16x128xf32>
    %70 = math.tanh %69 : vector<16x128xf32>
    %71 = arith.mulf %66, %70 : vector<16x128xf32>
    %72 = arith.truncf %71 : vector<16x128xf32> to vector<16x128xbf16>
    %73 = arith.index_cast %c1_i32 : i32 to index
    %c0_16 = arith.constant 0 : index
    %c0_17 = arith.constant 0 : index
    %74 = vector.load %arg8[%73, %c0_16, %c0_17] : memref<8x16x128xbf16, #tpu.memory_space<vmem>>, vector<1x16x128xbf16>
    %75 = vector.shape_cast %74 : vector<1x16x128xbf16> to vector<16x128xbf16>
    %76 = vector.shape_cast %72 : vector<16x128xbf16> to vector<1x16x128xbf16>
    tpu.vector_store %arg8[%73, %c0_16, %c0_17], %76 {strides = array<i32>} : memref<8x16x128xbf16, #tpu.memory_space<vmem>>, vector<1x16x128xbf16>,
    %c2_i32 = arith.constant 2 : i32
    %77 = arith.index_cast %c2_i32 : i32 to index
    %c0_18 = arith.constant 0 : index
    %c0_19 = arith.constant 0 : index
    %78 = vector.load %arg1[%77, %c0_18, %c0_19] : memref<8x16x512xbf16, #tpu.memory_space<vmem>>, vector<1x16x512xbf16>
    %79 = vector.shape_cast %78 : vector<1x16x512xbf16> to vector<16x512xbf16>
    %80 = arith.truncf %71 : vector<16x128xf32> to vector<16x128xbf16>
    %cst_20 = arith.constant dense<0.000000e+00> : vector<16x512xf32>
    %81 = tpu.matmul %80, %1, %cst_20 {dimension_numbers = #tpu.dot_dimension_numbers<[1], [0], [0], [1], [0, 0, 1, 1], [], []>} : vector<16x128xbf16>, vector<128x512xbf16>, vector<16x512xf32> -> vector<16x512xf32>
    %82 = arith.extf %79 : vector<16x512xbf16> to vector<16x512xf32>
    %83 = arith.addf %82, %81 : vector<16x512xf32>
    %84 = vector.extract_strided_slice %83 {offsets = [0, 0], sizes = [16, 128], strides = [1, 1]} : vector<16x512xf32> to vector<16x128xf32>
    %85 = arith.negf %84 : vector<16x128xf32>
    %86 = math.exp %85 : vector<16x128xf32>
    %cst_21 = arith.constant 1.000000e+00 : f32
    %87 = vector.broadcast %cst_21 : f32 to vector<16x128xf32>
    %88 = arith.addf %87, %86 : vector<16x128xf32>
    %89 = arith.divf %87, %88 : vector<16x128xf32>
    %90 = vector.extract_strided_slice %83 {offsets = [0, 128], sizes = [16, 128], strides = [1, 1]} : vector<16x512xf32> to vector<16x128xf32>
    %91 = arith.negf %90 : vector<16x128xf32>
    %92 = math.exp %91 : vector<16x128xf32>
    %cst_22 = arith.constant 1.000000e+00 : f32
    %93 = vector.broadcast %cst_22 : f32 to vector<16x128xf32>
    %94 = arith.addf %93, %92 : vector<16x128xf32>
    %95 = arith.divf %93, %94 : vector<16x128xf32>
    %96 = vector.extract_strided_slice %83 {offsets = [0, 256], sizes = [16, 128], strides = [1, 1]} : vector<16x512xf32> to vector<16x128xf32>
    %97 = math.tanh %96 : vector<16x128xf32>
    %98 = vector.extract_strided_slice %83 {offsets = [0, 384], sizes = [16, 128], strides = [1, 1]} : vector<16x512xf32> to vector<16x128xf32>
    %99 = arith.negf %98 : vector<16x128xf32>
    %100 = math.exp %99 : vector<16x128xf32>
    %cst_23 = arith.constant 1.000000e+00 : f32
    %101 = vector.broadcast %cst_23 : f32 to vector<16x128xf32>
    %102 = arith.addf %101, %100 : vector<16x128xf32>
    %103 = arith.divf %101, %102 : vector<16x128xf32>
    %104 = arith.mulf %95, %69 : vector<16x128xf32>
    %105 = arith.mulf %89, %97 : vector<16x128xf32>
    %106 = arith.addf %104, %105 : vector<16x128xf32>
    %107 = math.tanh %106 : vector<16x128xf32>
    %108 = arith.mulf %103, %107 : vector<16x128xf32>
    %109 = arith.truncf %108 : vector<16x128xf32> to vector<16x128xbf16>
    %110 = arith.index_cast %c2_i32 : i32 to index
    %c0_24 = arith.constant 0 : index
    %c0_25 = arith.constant 0 : index
    %111 = vector.load %arg8[%110, %c0_24, %c0_25] : memref<8x16x128xbf16, #tpu.memory_space<vmem>>, vector<1x16x128xbf16>
    %112 = vector.shape_cast %111 : vector<1x16x128xbf16> to vector<16x128xbf16>
    %113 = vector.shape_cast %109 : vector<16x128xbf16> to vector<1x16x128xbf16>
    tpu.vector_store %arg8[%110, %c0_24, %c0_25], %113 {strides = array<i32>} : memref<8x16x128xbf16, #tpu.memory_space<vmem>>, vector<1x16x128xbf16>,
    %c3_i32 = arith.constant 3 : i32
    %114 = arith.index_cast %c3_i32 : i32 to index
    %c0_26 = arith.constant 0 : index
    %c0_27 = arith.constant 0 : index
    %115 = vector.load %arg1[%114, %c0_26, %c0_27] : memref<8x16x512xbf16, #tpu.memory_space<vmem>>, vector<1x16x512xbf16>
    %116 = vector.shape_cast %115 : vector<1x16x512xbf16> to vector<16x512xbf16>
    %117 = arith.truncf %108 : vector<16x128xf32> to vector<16x128xbf16>
    %cst_28 = arith.constant dense<0.000000e+00> : vector<16x512xf32>
    %118 = tpu.matmul %117, %1, %cst_28 {dimension_numbers = #tpu.dot_dimension_numbers<[1], [0], [0], [1], [0, 0, 1, 1], [], []>} : vector<16x128xbf16>, vector<128x512xbf16>, vector<16x512xf32> -> vector<16x512xf32>
    %119 = arith.extf %116 : vector<16x512xbf16> to vector<16x512xf32>
    %120 = arith.addf %119, %118 : vector<16x512xf32>
    %121 = vector.extract_strided_slice %120 {offsets = [0, 0], sizes = [16, 128], strides = [1, 1]} : vector<16x512xf32> to vector<16x128xf32>
    %122 = arith.negf %121 : vector<16x128xf32>
    %123 = math.exp %122 : vector<16x128xf32>
    %cst_29 = arith.constant 1.000000e+00 : f32
    %124 = vector.broadcast %cst_29 : f32 to vector<16x128xf32>
    %125 = arith.addf %124, %123 : vector<16x128xf32>
    %126 = arith.divf %124, %125 : vector<16x128xf32>
    %127 = vector.extract_strided_slice %120 {offsets = [0, 128], sizes = [16, 128], strides = [1, 1]} : vector<16x512xf32> to vector<16x128xf32>
    %128 = arith.negf %127 : vector<16x128xf32>
    %129 = math.exp %128 : vector<16x128xf32>
    %cst_30 = arith.constant 1.000000e+00 : f32
    %130 = vector.broadcast %cst_30 : f32 to vector<16x128xf32>
    %131 = arith.addf %130, %129 : vector<16x128xf32>
    %132 = arith.divf %130, %131 : vector<16x128xf32>
    %133 = vector.extract_strided_slice %120 {offsets = [0, 256], sizes = [16, 128], strides = [1, 1]} : vector<16x512xf32> to vector<16x128xf32>
    %134 = math.tanh %133 : vector<16x128xf32>
    %135 = vector.extract_strided_slice %120 {offsets = [0, 384], sizes = [16, 128], strides = [1, 1]} : vector<16x512xf32> to vector<16x128xf32>
    %136 = arith.negf %135 : vector<16x128xf32>
    %137 = math.exp %136 : vector<16x128xf32>
    %cst_31 = arith.constant 1.000000e+00 : f32
    %138 = vector.broadcast %cst_31 : f32 to vector<16x128xf32>
    %139 = arith.addf %138, %137 : vector<16x128xf32>
    %140 = arith.divf %138, %139 : vector<16x128xf32>
    %141 = arith.mulf %132, %106 : vector<16x128xf32>
    %142 = arith.mulf %126, %134 : vector<16x128xf32>
    %143 = arith.addf %141, %142 : vector<16x128xf32>
    %144 = math.tanh %143 : vector<16x128xf32>
    %145 = arith.mulf %140, %144 : vector<16x128xf32>
    %146 = arith.truncf %145 : vector<16x128xf32> to vector<16x128xbf16>
    %147 = arith.index_cast %c3_i32 : i32 to index
    %c0_32 = arith.constant 0 : index
    %c0_33 = arith.constant 0 : index
    %148 = vector.load %arg8[%147, %c0_32, %c0_33] : memref<8x16x128xbf16, #tpu.memory_space<vmem>>, vector<1x16x128xbf16>
    %149 = vector.shape_cast %148 : vector<1x16x128xbf16> to vector<16x128xbf16>
    %150 = vector.shape_cast %146 : vector<16x128xbf16> to vector<1x16x128xbf16>
    tpu.vector_store %arg8[%147, %c0_32, %c0_33], %150 {strides = array<i32>} : memref<8x16x128xbf16, #tpu.memory_space<vmem>>, vector<1x16x128xbf16>,
    %c4_i32 = arith.constant 4 : i32
    %151 = arith.index_cast %c4_i32 : i32 to index
    %c0_34 = arith.constant 0 : index
    %c0_35 = arith.constant 0 : index
    %152 = vector.load %arg1[%151, %c0_34, %c0_35] : memref<8x16x512xbf16, #tpu.memory_space<vmem>>, vector<1x16x512xbf16>
    %153 = vector.shape_cast %152 : vector<1x16x512xbf16> to vector<16x512xbf16>
    %154 = arith.truncf %145 : vector<16x128xf32> to vector<16x128xbf16>
    %cst_36 = arith.constant dense<0.000000e+00> : vector<16x512xf32>
    %155 = tpu.matmul %154, %1, %cst_36 {dimension_numbers = #tpu.dot_dimension_numbers<[1], [0], [0], [1], [0, 0, 1, 1], [], []>} : vector<16x128xbf16>, vector<128x512xbf16>, vector<16x512xf32> -> vector<16x512xf32>
    %156 = arith.extf %153 : vector<16x512xbf16> to vector<16x512xf32>
    %157 = arith.addf %156, %155 : vector<16x512xf32>
    %158 = vector.extract_strided_slice %157 {offsets = [0, 0], sizes = [16, 128], strides = [1, 1]} : vector<16x512xf32> to vector<16x128xf32>
    %159 = arith.negf %158 : vector<16x128xf32>
    %160 = math.exp %159 : vector<16x128xf32>
    %cst_37 = arith.constant 1.000000e+00 : f32
    %161 = vector.broadcast %cst_37 : f32 to vector<16x128xf32>
    %162 = arith.addf %161, %160 : vector<16x128xf32>
    %163 = arith.divf %161, %162 : vector<16x128xf32>
    %164 = vector.extract_strided_slice %157 {offsets = [0, 128], sizes = [16, 128], strides = [1, 1]} : vector<16x512xf32> to vector<16x128xf32>
    %165 = arith.negf %164 : vector<16x128xf32>
    %166 = math.exp %165 : vector<16x128xf32>
    %cst_38 = arith.constant 1.000000e+00 : f32
    %167 = vector.broadcast %cst_38 : f32 to vector<16x128xf32>
    %168 = arith.addf %167, %166 : vector<16x128xf32>
    %169 = arith.divf %167, %168 : vector<16x128xf32>
    %170 = vector.extract_strided_slice %157 {offsets = [0, 256], sizes = [16, 128], strides = [1, 1]} : vector<16x512xf32> to vector<16x128xf32>
    %171 = math.tanh %170 : vector<16x128xf32>
    %172 = vector.extract_strided_slice %157 {offsets = [0, 384], sizes = [16, 128], strides = [1, 1]} : vector<16x512xf32> to vector<16x128xf32>
    %173 = arith.negf %172 : vector<16x128xf32>
    %174 = math.exp %173 : vector<16x128xf32>
    %cst_39 = arith.constant 1.000000e+00 : f32
    %175 = vector.broadcast %cst_39 : f32 to vector<16x128xf32>
    %176 = arith.addf %175, %174 : vector<16x128xf32>
    %177 = arith.divf %175, %176 : vector<16x128xf32>
    %178 = arith.mulf %169, %143 : vector<16x128xf32>
    %179 = arith.mulf %163, %171 : vector<16x128xf32>
    %180 = arith.addf %178, %179 : vector<16x128xf32>
    %181 = math.tanh %180 : vector<16x128xf32>
    %182 = arith.mulf %177, %181 : vector<16x128xf32>
    %183 = arith.truncf %182 : vector<16x128xf32> to vector<16x128xbf16>
    %184 = arith.index_cast %c4_i32 : i32 to index
    %c0_40 = arith.constant 0 : index
    %c0_41 = arith.constant 0 : index
    %185 = vector.load %arg8[%184, %c0_40, %c0_41] : memref<8x16x128xbf16, #tpu.memory_space<vmem>>, vector<1x16x128xbf16>
    %186 = vector.shape_cast %185 : vector<1x16x128xbf16> to vector<16x128xbf16>
    %187 = vector.shape_cast %183 : vector<16x128xbf16> to vector<1x16x128xbf16>
    tpu.vector_store %arg8[%184, %c0_40, %c0_41], %187 {strides = array<i32>} : memref<8x16x128xbf16, #tpu.memory_space<vmem>>, vector<1x16x128xbf16>,
    %c5_i32 = arith.constant 5 : i32
    %188 = arith.index_cast %c5_i32 : i32 to index
    %c0_42 = arith.constant 0 : index
    %c0_43 = arith.constant 0 : index
    %189 = vector.load %arg1[%188, %c0_42, %c0_43] : memref<8x16x512xbf16, #tpu.memory_space<vmem>>, vector<1x16x512xbf16>
    %190 = vector.shape_cast %189 : vector<1x16x512xbf16> to vector<16x512xbf16>
    %191 = arith.truncf %182 : vector<16x128xf32> to vector<16x128xbf16>
    %cst_44 = arith.constant dense<0.000000e+00> : vector<16x512xf32>
    %192 = tpu.matmul %191, %1, %cst_44 {dimension_numbers = #tpu.dot_dimension_numbers<[1], [0], [0], [1], [0, 0, 1, 1], [], []>} : vector<16x128xbf16>, vector<128x512xbf16>, vector<16x512xf32> -> vector<16x512xf32>
    %193 = arith.extf %190 : vector<16x512xbf16> to vector<16x512xf32>
    %194 = arith.addf %193, %192 : vector<16x512xf32>
    %195 = vector.extract_strided_slice %194 {offsets = [0, 0], sizes = [16, 128], strides = [1, 1]} : vector<16x512xf32> to vector<16x128xf32>
    %196 = arith.negf %195 : vector<16x128xf32>
    %197 = math.exp %196 : vector<16x128xf32>
    %cst_45 = arith.constant 1.000000e+00 : f32
    %198 = vector.broadcast %cst_45 : f32 to vector<16x128xf32>
    %199 = arith.addf %198, %197 : vector<16x128xf32>
    %200 = arith.divf %198, %199 : vector<16x128xf32>
    %201 = vector.extract_strided_slice %194 {offsets = [0, 128], sizes = [16, 128], strides = [1, 1]} : vector<16x512xf32> to vector<16x128xf32>
    %202 = arith.negf %201 : vector<16x128xf32>
    %203 = math.exp %202 : vector<16x128xf32>
    %cst_46 = arith.constant 1.000000e+00 : f32
    %204 = vector.broadcast %cst_46 : f32 to vector<16x128xf32>
    %205 = arith.addf %204, %203 : vector<16x128xf32>
    %206 = arith.divf %204, %205 : vector<16x128xf32>
    %207 = vector.extract_strided_slice %194 {offsets = [0, 256], sizes = [16, 128], strides = [1, 1]} : vector<16x512xf32> to vector<16x128xf32>
    %208 = math.tanh %207 : vector<16x128xf32>
    %209 = vector.extract_strided_slice %194 {offsets = [0, 384], sizes = [16, 128], strides = [1, 1]} : vector<16x512xf32> to vector<16x128xf32>
    %210 = arith.negf %209 : vector<16x128xf32>
    %211 = math.exp %210 : vector<16x128xf32>
    %cst_47 = arith.constant 1.000000e+00 : f32
    %212 = vector.broadcast %cst_47 : f32 to vector<16x128xf32>
    %213 = arith.addf %212, %211 : vector<16x128xf32>
    %214 = arith.divf %212, %213 : vector<16x128xf32>
    %215 = arith.mulf %206, %180 : vector<16x128xf32>
    %216 = arith.mulf %200, %208 : vector<16x128xf32>
    %217 = arith.addf %215, %216 : vector<16x128xf32>
    %218 = math.tanh %217 : vector<16x128xf32>
    %219 = arith.mulf %214, %218 : vector<16x128xf32>
    %220 = arith.truncf %219 : vector<16x128xf32> to vector<16x128xbf16>
    %221 = arith.index_cast %c5_i32 : i32 to index
    %c0_48 = arith.constant 0 : index
    %c0_49 = arith.constant 0 : index
    %222 = vector.load %arg8[%221, %c0_48, %c0_49] : memref<8x16x128xbf16, #tpu.memory_space<vmem>>, vector<1x16x128xbf16>
    %223 = vector.shape_cast %222 : vector<1x16x128xbf16> to vector<16x128xbf16>
    %224 = vector.shape_cast %220 : vector<16x128xbf16> to vector<1x16x128xbf16>
    tpu.vector_store %arg8[%221, %c0_48, %c0_49], %224 {strides = array<i32>} : memref<8x16x128xbf16, #tpu.memory_space<vmem>>, vector<1x16x128xbf16>,
    %c6_i32 = arith.constant 6 : i32
    %225 = arith.index_cast %c6_i32 : i32 to index
    %c0_50 = arith.constant 0 : index
    %c0_51 = arith.constant 0 : index
    %226 = vector.load %arg1[%225, %c0_50, %c0_51] : memref<8x16x512xbf16, #tpu.memory_space<vmem>>, vector<1x16x512xbf16>
    %227 = vector.shape_cast %226 : vector<1x16x512xbf16> to vector<16x512xbf16>
    %228 = arith.truncf %219 : vector<16x128xf32> to vector<16x128xbf16>
    %cst_52 = arith.constant dense<0.000000e+00> : vector<16x512xf32>
    %229 = tpu.matmul %228, %1, %cst_52 {dimension_numbers = #tpu.dot_dimension_numbers<[1], [0], [0], [1], [0, 0, 1, 1], [], []>} : vector<16x128xbf16>, vector<128x512xbf16>, vector<16x512xf32> -> vector<16x512xf32>
    %230 = arith.extf %227 : vector<16x512xbf16> to vector<16x512xf32>
    %231 = arith.addf %230, %229 : vector<16x512xf32>
    %232 = vector.extract_strided_slice %231 {offsets = [0, 0], sizes = [16, 128], strides = [1, 1]} : vector<16x512xf32> to vector<16x128xf32>
    %233 = arith.negf %232 : vector<16x128xf32>
    %234 = math.exp %233 : vector<16x128xf32>
    %cst_53 = arith.constant 1.000000e+00 : f32
    %235 = vector.broadcast %cst_53 : f32 to vector<16x128xf32>
    %236 = arith.addf %235, %234 : vector<16x128xf32>
    %237 = arith.divf %235, %236 : vector<16x128xf32>
    %238 = vector.extract_strided_slice %231 {offsets = [0, 128], sizes = [16, 128], strides = [1, 1]} : vector<16x512xf32> to vector<16x128xf32>
    %239 = arith.negf %238 : vector<16x128xf32>
    %240 = math.exp %239 : vector<16x128xf32>
    %cst_54 = arith.constant 1.000000e+00 : f32
    %241 = vector.broadcast %cst_54 : f32 to vector<16x128xf32>
    %242 = arith.addf %241, %240 : vector<16x128xf32>
    %243 = arith.divf %241, %242 : vector<16x128xf32>
    %244 = vector.extract_strided_slice %231 {offsets = [0, 256], sizes = [16, 128], strides = [1, 1]} : vector<16x512xf32> to vector<16x128xf32>
    %245 = math.tanh %244 : vector<16x128xf32>
    %246 = vector.extract_strided_slice %231 {offsets = [0, 384], sizes = [16, 128], strides = [1, 1]} : vector<16x512xf32> to vector<16x128xf32>
    %247 = arith.negf %246 : vector<16x128xf32>
    %248 = math.exp %247 : vector<16x128xf32>
    %cst_55 = arith.constant 1.000000e+00 : f32
    %249 = vector.broadcast %cst_55 : f32 to vector<16x128xf32>
    %250 = arith.addf %249, %248 : vector<16x128xf32>
    %251 = arith.divf %249, %250 : vector<16x128xf32>
    %252 = arith.mulf %243, %217 : vector<16x128xf32>
    %253 = arith.mulf %237, %245 : vector<16x128xf32>
    %254 = arith.addf %252, %253 : vector<16x128xf32>
    %255 = math.tanh %254 : vector<16x128xf32>
    %256 = arith.mulf %251, %255 : vector<16x128xf32>
    %257 = arith.truncf %256 : vector<16x128xf32> to vector<16x128xbf16>
    %258 = arith.index_cast %c6_i32 : i32 to index
    %c0_56 = arith.constant 0 : index
    %c0_57 = arith.constant 0 : index
    %259 = vector.load %arg8[%258, %c0_56, %c0_57] : memref<8x16x128xbf16, #tpu.memory_space<vmem>>, vector<1x16x128xbf16>
    %260 = vector.shape_cast %259 : vector<1x16x128xbf16> to vector<16x128xbf16>
    %261 = vector.shape_cast %257 : vector<16x128xbf16> to vector<1x16x128xbf16>
    tpu.vector_store %arg8[%258, %c0_56, %c0_57], %261 {strides = array<i32>} : memref<8x16x128xbf16, #tpu.memory_space<vmem>>, vector<1x16x128xbf16>,
    %c7_i32 = arith.constant 7 : i32
    %262 = arith.index_cast %c7_i32 : i32 to index
    %c0_58 = arith.constant 0 : index
    %c0_59 = arith.constant 0 : index
    %263 = vector.load %arg1[%262, %c0_58, %c0_59] : memref<8x16x512xbf16, #tpu.memory_space<vmem>>, vector<1x16x512xbf16>
    %264 = vector.shape_cast %263 : vector<1x16x512xbf16> to vector<16x512xbf16>
    %265 = arith.truncf %256 : vector<16x128xf32> to vector<16x128xbf16>
    %cst_60 = arith.constant dense<0.000000e+00> : vector<16x512xf32>
    %266 = tpu.matmul %265, %1, %cst_60 {dimension_numbers = #tpu.dot_dimension_numbers<[1], [0], [0], [1], [0, 0, 1, 1], [], []>} : vector<16x128xbf16>, vector<128x512xbf16>, vector<16x512xf32> -> vector<16x512xf32>
    %267 = arith.extf %264 : vector<16x512xbf16> to vector<16x512xf32>
    %268 = arith.addf %267, %266 : vector<16x512xf32>
    %269 = vector.extract_strided_slice %268 {offsets = [0, 0], sizes = [16, 128], strides = [1, 1]} : vector<16x512xf32> to vector<16x128xf32>
    %270 = arith.negf %269 : vector<16x128xf32>
    %271 = math.exp %270 : vector<16x128xf32>
    %cst_61 = arith.constant 1.000000e+00 : f32
    %272 = vector.broadcast %cst_61 : f32 to vector<16x128xf32>
    %273 = arith.addf %272, %271 : vector<16x128xf32>
    %274 = arith.divf %272, %273 : vector<16x128xf32>
    %275 = vector.extract_strided_slice %268 {offsets = [0, 128], sizes = [16, 128], strides = [1, 1]} : vector<16x512xf32> to vector<16x128xf32>
    %276 = arith.negf %275 : vector<16x128xf32>
    %277 = math.exp %276 : vector<16x128xf32>
    %cst_62 = arith.constant 1.000000e+00 : f32
    %278 = vector.broadcast %cst_62 : f32 to vector<16x128xf32>
    %279 = arith.addf %278, %277 : vector<16x128xf32>
    %280 = arith.divf %278, %279 : vector<16x128xf32>
    %281 = vector.extract_strided_slice %268 {offsets = [0, 256], sizes = [16, 128], strides = [1, 1]} : vector<16x512xf32> to vector<16x128xf32>
    %282 = math.tanh %281 : vector<16x128xf32>
    %283 = vector.extract_strided_slice %268 {offsets = [0, 384], sizes = [16, 128], strides = [1, 1]} : vector<16x512xf32> to vector<16x128xf32>
    %284 = arith.negf %283 : vector<16x128xf32>
    %285 = math.exp %284 : vector<16x128xf32>
    %cst_63 = arith.constant 1.000000e+00 : f32
    %286 = vector.broadcast %cst_63 : f32 to vector<16x128xf32>
    %287 = arith.addf %286, %285 : vector<16x128xf32>
    %288 = arith.divf %286, %287 : vector<16x128xf32>
    %289 = arith.mulf %280, %254 : vector<16x128xf32>
    %290 = arith.mulf %274, %282 : vector<16x128xf32>
    %291 = arith.addf %289, %290 : vector<16x128xf32>
    %292 = math.tanh %291 : vector<16x128xf32>
    %293 = arith.mulf %288, %292 : vector<16x128xf32>
    %294 = arith.truncf %293 : vector<16x128xf32> to vector<16x128xbf16>
    %295 = arith.index_cast %c7_i32 : i32 to index
    %c0_64 = arith.constant 0 : index
    %c0_65 = arith.constant 0 : index
    %296 = vector.load %arg8[%295, %c0_64, %c0_65] : memref<8x16x128xbf16, #tpu.memory_space<vmem>>, vector<1x16x128xbf16>
    %297 = vector.shape_cast %296 : vector<1x16x128xbf16> to vector<16x128xbf16>
    %298 = vector.shape_cast %294 : vector<16x128xbf16> to vector<1x16x128xbf16>
    tpu.vector_store %arg8[%295, %c0_64, %c0_65], %298 {strides = array<i32>} : memref<8x16x128xbf16, #tpu.memory_space<vmem>>, vector<1x16x128xbf16>,
    %c8_i32 = arith.constant 8 : i32
    %c0_66 = arith.constant 0 : index
    %c0_67 = arith.constant 0 : index
    %299 = vector.load %arg10[%c0_66, %c0_67] : memref<16x512xf32, #tpu.memory_space<vmem>>, vector<16x128xf32>
    tpu.vector_store %arg10[%c0_66, %c0_67], %293 {strides = array<i32>} : memref<16x512xf32, #tpu.memory_space<vmem>>, vector<16x128xf32>,
    %c0_68 = arith.constant 0 : index
    %c128 = arith.constant 128 : index
    %300 = vector.load %arg10[%c0_68, %c128] : memref<16x512xf32, #tpu.memory_space<vmem>>, vector<16x128xf32>
    tpu.vector_store %arg10[%c0_68, %c128], %291 {strides = array<i32>} : memref<16x512xf32, #tpu.memory_space<vmem>>, vector<16x128xf32>,
    %c0_69 = arith.constant 0 : index
    %c0_70 = arith.constant 0 : index
    %c0_71 = arith.constant 0 : index
    %301 = vector.load %arg8[%c0_69, %c0_70, %c0_71] : memref<8x16x128xbf16, #tpu.memory_space<vmem>>, vector<8x16x128xbf16>
    %302 = vector.shape_cast %301 : vector<8x16x128xbf16> to vector<128x128xbf16>
    %c0_72 = arith.constant 0 : index
    %c0_73 = arith.constant 0 : index
    %c0_74 = arith.constant 0 : index
    %303 = vector.load %arg2[%c0_72, %c0_73, %c0_74] : memref<1x128x512xbf16, #tpu.memory_space<vmem>>, vector<1x128x512xbf16>
    %304 = vector.shape_cast %303 : vector<1x128x512xbf16> to vector<128x512xbf16>
    %cst_75 = arith.constant dense<0.000000e+00> : vector<128x512xf32>
    %305 = tpu.matmul %302, %304, %cst_75 {dimension_numbers = #tpu.dot_dimension_numbers<[1], [0], [0], [1], [0, 0, 1, 1], [], []>} : vector<128x128xbf16>, vector<128x512xbf16>, vector<128x512xf32> -> vector<128x512xf32>
    %c0_76 = arith.constant 0 : index
    %c0_77 = arith.constant 0 : index
    %306 = vector.load %arg4[%c0_76, %c0_77] : memref<1x512xf32, #tpu.memory_space<vmem>>, vector<1x512xf32>
    %307 = vector.broadcast %306 : vector<1x512xf32> to vector<128x512xf32>
    %308 = arith.addf %305, %307 : vector<128x512xf32>
    %309 = arith.truncf %308 : vector<128x512xf32> to vector<128x512xbf16>
    %310 = vector.shape_cast %309 : vector<128x512xbf16> to vector<8x16x512xbf16>
    %c0_78 = arith.constant 0 : index
    %c0_79 = arith.constant 0 : index
    %c0_80 = arith.constant 0 : index
    %311 = vector.load %arg9[%c0_78, %c0_79, %c0_80] : memref<8x16x512xbf16, #tpu.memory_space<vmem>>, vector<8x16x512xbf16>
    tpu.vector_store %arg9[%c0_78, %c0_79, %c0_80], %310 {strides = array<i32>} : memref<8x16x512xbf16, #tpu.memory_space<vmem>>, vector<8x16x512xbf16>,
    %c1 = arith.constant 1 : index
    %c0_81 = arith.constant 0 : index
    %c0_82 = arith.constant 0 : index
    %312 = vector.load %arg3[%c1, %c0_81, %c0_82] : memref<2x128x512xbf16, #tpu.memory_space<vmem>>, vector<1x128x512xbf16>
    %313 = vector.shape_cast %312 : vector<1x128x512xbf16> to vector<128x512xbf16>
    %cst_83 = arith.constant 0.000000e+00 : f32
    %314 = vector.broadcast %cst_83 : f32 to vector<16x128xf32>
    %c0_i32_84 = arith.constant 0 : i32
    %315 = arith.index_cast %c0_i32_84 : i32 to index
    %c0_85 = arith.constant 0 : index
    %c0_86 = arith.constant 0 : index
    %316 = vector.load %arg9[%315, %c0_85, %c0_86] : memref<8x16x512xbf16, #tpu.memory_space<vmem>>, vector<1x16x512xbf16>
    %317 = vector.shape_cast %316 : vector<1x16x512xbf16> to vector<16x512xbf16>
    %318 = arith.truncf %314 : vector<16x128xf32> to vector<16x128xbf16>
    %cst_87 = arith.constant dense<0.000000e+00> : vector<16x512xf32>
    %319 = tpu.matmul %318, %313, %cst_87 {dimension_numbers = #tpu.dot_dimension_numbers<[1], [0], [0], [1], [0, 0, 1, 1], [], []>} : vector<16x128xbf16>, vector<128x512xbf16>, vector<16x512xf32> -> vector<16x512xf32>
    %320 = arith.extf %317 : vector<16x512xbf16> to vector<16x512xf32>
    %321 = arith.addf %320, %319 : vector<16x512xf32>
    %322 = vector.extract_strided_slice %321 {offsets = [0, 0], sizes = [16, 128], strides = [1, 1]} : vector<16x512xf32> to vector<16x128xf32>
    %323 = arith.negf %322 : vector<16x128xf32>
    %324 = math.exp %323 : vector<16x128xf32>
    %cst_88 = arith.constant 1.000000e+00 : f32
    %325 = vector.broadcast %cst_88 : f32 to vector<16x128xf32>
    %326 = arith.addf %325, %324 : vector<16x128xf32>
    %327 = arith.divf %325, %326 : vector<16x128xf32>
    %328 = vector.extract_strided_slice %321 {offsets = [0, 128], sizes = [16, 128], strides = [1, 1]} : vector<16x512xf32> to vector<16x128xf32>
    %329 = arith.negf %328 : vector<16x128xf32>
    %330 = math.exp %329 : vector<16x128xf32>
    %cst_89 = arith.constant 1.000000e+00 : f32
    %331 = vector.broadcast %cst_89 : f32 to vector<16x128xf32>
    %332 = arith.addf %331, %330 : vector<16x128xf32>
    %333 = arith.divf %331, %332 : vector<16x128xf32>
    %334 = vector.extract_strided_slice %321 {offsets = [0, 256], sizes = [16, 128], strides = [1, 1]} : vector<16x512xf32> to vector<16x128xf32>
    %335 = math.tanh %334 : vector<16x128xf32>
    %336 = vector.extract_strided_slice %321 {offsets = [0, 384], sizes = [16, 128], strides = [1, 1]} : vector<16x512xf32> to vector<16x128xf32>
    %337 = arith.negf %336 : vector<16x128xf32>
    %338 = math.exp %337 : vector<16x128xf32>
    %cst_90 = arith.constant 1.000000e+00 : f32
    %339 = vector.broadcast %cst_90 : f32 to vector<16x128xf32>
    %340 = arith.addf %339, %338 : vector<16x128xf32>
    %341 = arith.divf %339, %340 : vector<16x128xf32>
    %342 = arith.mulf %333, %314 : vector<16x128xf32>
    %343 = arith.mulf %327, %335 : vector<16x128xf32>
    %344 = arith.addf %342, %343 : vector<16x128xf32>
    %345 = math.tanh %344 : vector<16x128xf32>
    %346 = arith.mulf %341, %345 : vector<16x128xf32>
    %c1_i32_91 = arith.constant 1 : i32
    %347 = arith.index_cast %c1_i32_91 : i32 to index
    %c0_92 = arith.constant 0 : index
    %c0_93 = arith.constant 0 : index
    %348 = vector.load %arg9[%347, %c0_92, %c0_93] : memref<8x16x512xbf16, #tpu.memory_space<vmem>>, vector<1x16x512xbf16>
    %349 = vector.shape_cast %348 : vector<1x16x512xbf16> to vector<16x512xbf16>
    %350 = arith.truncf %346 : vector<16x128xf32> to vector<16x128xbf16>
    %cst_94 = arith.constant dense<0.000000e+00> : vector<16x512xf32>
    %351 = tpu.matmul %350, %313, %cst_94 {dimension_numbers = #tpu.dot_dimension_numbers<[1], [0], [0], [1], [0, 0, 1, 1], [], []>} : vector<16x128xbf16>, vector<128x512xbf16>, vector<16x512xf32> -> vector<16x512xf32>
    %352 = arith.extf %349 : vector<16x512xbf16> to vector<16x512xf32>
    %353 = arith.addf %352, %351 : vector<16x512xf32>
    %354 = vector.extract_strided_slice %353 {offsets = [0, 0], sizes = [16, 128], strides = [1, 1]} : vector<16x512xf32> to vector<16x128xf32>
    %355 = arith.negf %354 : vector<16x128xf32>
    %356 = math.exp %355 : vector<16x128xf32>
    %cst_95 = arith.constant 1.000000e+00 : f32
    %357 = vector.broadcast %cst_95 : f32 to vector<16x128xf32>
    %358 = arith.addf %357, %356 : vector<16x128xf32>
    %359 = arith.divf %357, %358 : vector<16x128xf32>
    %360 = vector.extract_strided_slice %353 {offsets = [0, 128], sizes = [16, 128], strides = [1, 1]} : vector<16x512xf32> to vector<16x128xf32>
    %361 = arith.negf %360 : vector<16x128xf32>
    %362 = math.exp %361 : vector<16x128xf32>
    %cst_96 = arith.constant 1.000000e+00 : f32
    %363 = vector.broadcast %cst_96 : f32 to vector<16x128xf32>
    %364 = arith.addf %363, %362 : vector<16x128xf32>
    %365 = arith.divf %363, %364 : vector<16x128xf32>
    %366 = vector.extract_strided_slice %353 {offsets = [0, 256], sizes = [16, 128], strides = [1, 1]} : vector<16x512xf32> to vector<16x128xf32>
    %367 = math.tanh %366 : vector<16x128xf32>
    %368 = vector.extract_strided_slice %353 {offsets = [0, 384], sizes = [16, 128], strides = [1, 1]} : vector<16x512xf32> to vector<16x128xf32>
    %369 = arith.negf %368 : vector<16x128xf32>
    %370 = math.exp %369 : vector<16x128xf32>
    %cst_97 = arith.constant 1.000000e+00 : f32
    %371 = vector.broadcast %cst_97 : f32 to vector<16x128xf32>
    %372 = arith.addf %371, %370 : vector<16x128xf32>
    %373 = arith.divf %371, %372 : vector<16x128xf32>
    %374 = arith.mulf %365, %344 : vector<16x128xf32>
    %375 = arith.mulf %359, %367 : vector<16x128xf32>
    %376 = arith.addf %374, %375 : vector<16x128xf32>
    %377 = math.tanh %376 : vector<16x128xf32>
    %378 = arith.mulf %373, %377 : vector<16x128xf32>
    %c2_i32_98 = arith.constant 2 : i32
    %379 = arith.index_cast %c2_i32_98 : i32 to index
    %c0_99 = arith.constant 0 : index
    %c0_100 = arith.constant 0 : index
    %380 = vector.load %arg9[%379, %c0_99, %c0_100] : memref<8x16x512xbf16, #tpu.memory_space<vmem>>, vector<1x16x512xbf16>
    %381 = vector.shape_cast %380 : vector<1x16x512xbf16> to vector<16x512xbf16>
    %382 = arith.truncf %378 : vector<16x128xf32> to vector<16x128xbf16>
    %cst_101 = arith.constant dense<0.000000e+00> : vector<16x512xf32>
    %383 = tpu.matmul %382, %313, %cst_101 {dimension_numbers = #tpu.dot_dimension_numbers<[1], [0], [0], [1], [0, 0, 1, 1], [], []>} : vector<16x128xbf16>, vector<128x512xbf16>, vector<16x512xf32> -> vector<16x512xf32>
    %384 = arith.extf %381 : vector<16x512xbf16> to vector<16x512xf32>
    %385 = arith.addf %384, %383 : vector<16x512xf32>
    %386 = vector.extract_strided_slice %385 {offsets = [0, 0], sizes = [16, 128], strides = [1, 1]} : vector<16x512xf32> to vector<16x128xf32>
    %387 = arith.negf %386 : vector<16x128xf32>
    %388 = math.exp %387 : vector<16x128xf32>
    %cst_102 = arith.constant 1.000000e+00 : f32
    %389 = vector.broadcast %cst_102 : f32 to vector<16x128xf32>
    %390 = arith.addf %389, %388 : vector<16x128xf32>
    %391 = arith.divf %389, %390 : vector<16x128xf32>
    %392 = vector.extract_strided_slice %385 {offsets = [0, 128], sizes = [16, 128], strides = [1, 1]} : vector<16x512xf32> to vector<16x128xf32>
    %393 = arith.negf %392 : vector<16x128xf32>
    %394 = math.exp %393 : vector<16x128xf32>
    %cst_103 = arith.constant 1.000000e+00 : f32
    %395 = vector.broadcast %cst_103 : f32 to vector<16x128xf32>
    %396 = arith.addf %395, %394 : vector<16x128xf32>
    %397 = arith.divf %395, %396 : vector<16x128xf32>
    %398 = vector.extract_strided_slice %385 {offsets = [0, 256], sizes = [16, 128], strides = [1, 1]} : vector<16x512xf32> to vector<16x128xf32>
    %399 = math.tanh %398 : vector<16x128xf32>
    %400 = vector.extract_strided_slice %385 {offsets = [0, 384], sizes = [16, 128], strides = [1, 1]} : vector<16x512xf32> to vector<16x128xf32>
    %401 = arith.negf %400 : vector<16x128xf32>
    %402 = math.exp %401 : vector<16x128xf32>
    %cst_104 = arith.constant 1.000000e+00 : f32
    %403 = vector.broadcast %cst_104 : f32 to vector<16x128xf32>
    %404 = arith.addf %403, %402 : vector<16x128xf32>
    %405 = arith.divf %403, %404 : vector<16x128xf32>
    %406 = arith.mulf %397, %376 : vector<16x128xf32>
    %407 = arith.mulf %391, %399 : vector<16x128xf32>
    %408 = arith.addf %406, %407 : vector<16x128xf32>
    %409 = math.tanh %408 : vector<16x128xf32>
    %410 = arith.mulf %405, %409 : vector<16x128xf32>
    %c3_i32_105 = arith.constant 3 : i32
    %411 = arith.index_cast %c3_i32_105 : i32 to index
    %c0_106 = arith.constant 0 : index
    %c0_107 = arith.constant 0 : index
    %412 = vector.load %arg9[%411, %c0_106, %c0_107] : memref<8x16x512xbf16, #tpu.memory_space<vmem>>, vector<1x16x512xbf16>
    %413 = vector.shape_cast %412 : vector<1x16x512xbf16> to vector<16x512xbf16>
    %414 = arith.truncf %410 : vector<16x128xf32> to vector<16x128xbf16>
    %cst_108 = arith.constant dense<0.000000e+00> : vector<16x512xf32>
    %415 = tpu.matmul %414, %313, %cst_108 {dimension_numbers = #tpu.dot_dimension_numbers<[1], [0], [0], [1], [0, 0, 1, 1], [], []>} : vector<16x128xbf16>, vector<128x512xbf16>, vector<16x512xf32> -> vector<16x512xf32>
    %416 = arith.extf %413 : vector<16x512xbf16> to vector<16x512xf32>
    %417 = arith.addf %416, %415 : vector<16x512xf32>
    %418 = vector.extract_strided_slice %417 {offsets = [0, 0], sizes = [16, 128], strides = [1, 1]} : vector<16x512xf32> to vector<16x128xf32>
    %419 = arith.negf %418 : vector<16x128xf32>
    %420 = math.exp %419 : vector<16x128xf32>
    %cst_109 = arith.constant 1.000000e+00 : f32
    %421 = vector.broadcast %cst_109 : f32 to vector<16x128xf32>
    %422 = arith.addf %421, %420 : vector<16x128xf32>
    %423 = arith.divf %421, %422 : vector<16x128xf32>
    %424 = vector.extract_strided_slice %417 {offsets = [0, 128], sizes = [16, 128], strides = [1, 1]} : vector<16x512xf32> to vector<16x128xf32>
    %425 = arith.negf %424 : vector<16x128xf32>
    %426 = math.exp %425 : vector<16x128xf32>
    %cst_110 = arith.constant 1.000000e+00 : f32
    %427 = vector.broadcast %cst_110 : f32 to vector<16x128xf32>
    %428 = arith.addf %427, %426 : vector<16x128xf32>
    %429 = arith.divf %427, %428 : vector<16x128xf32>
    %430 = vector.extract_strided_slice %417 {offsets = [0, 256], sizes = [16, 128], strides = [1, 1]} : vector<16x512xf32> to vector<16x128xf32>
    %431 = math.tanh %430 : vector<16x128xf32>
    %432 = vector.extract_strided_slice %417 {offsets = [0, 384], sizes = [16, 128], strides = [1, 1]} : vector<16x512xf32> to vector<16x128xf32>
    %433 = arith.negf %432 : vector<16x128xf32>
    %434 = math.exp %433 : vector<16x128xf32>
    %cst_111 = arith.constant 1.000000e+00 : f32
    %435 = vector.broadcast %cst_111 : f32 to vector<16x128xf32>
    %436 = arith.addf %435, %434 : vector<16x128xf32>
    %437 = arith.divf %435, %436 : vector<16x128xf32>
    %438 = arith.mulf %429, %408 : vector<16x128xf32>
    %439 = arith.mulf %423, %431 : vector<16x128xf32>
    %440 = arith.addf %438, %439 : vector<16x128xf32>
    %441 = math.tanh %440 : vector<16x128xf32>
    %442 = arith.mulf %437, %441 : vector<16x128xf32>
    %c4_i32_112 = arith.constant 4 : i32
    %443 = arith.index_cast %c4_i32_112 : i32 to index
    %c0_113 = arith.constant 0 : index
    %c0_114 = arith.constant 0 : index
    %444 = vector.load %arg9[%443, %c0_113, %c0_114] : memref<8x16x512xbf16, #tpu.memory_space<vmem>>, vector<1x16x512xbf16>
    %445 = vector.shape_cast %444 : vector<1x16x512xbf16> to vector<16x512xbf16>
    %446 = arith.truncf %442 : vector<16x128xf32> to vector<16x128xbf16>
    %cst_115 = arith.constant dense<0.000000e+00> : vector<16x512xf32>
    %447 = tpu.matmul %446, %313, %cst_115 {dimension_numbers = #tpu.dot_dimension_numbers<[1], [0], [0], [1], [0, 0, 1, 1], [], []>} : vector<16x128xbf16>, vector<128x512xbf16>, vector<16x512xf32> -> vector<16x512xf32>
    %448 = arith.extf %445 : vector<16x512xbf16> to vector<16x512xf32>
    %449 = arith.addf %448, %447 : vector<16x512xf32>
    %450 = vector.extract_strided_slice %449 {offsets = [0, 0], sizes = [16, 128], strides = [1, 1]} : vector<16x512xf32> to vector<16x128xf32>
    %451 = arith.negf %450 : vector<16x128xf32>
    %452 = math.exp %451 : vector<16x128xf32>
    %cst_116 = arith.constant 1.000000e+00 : f32
    %453 = vector.broadcast %cst_116 : f32 to vector<16x128xf32>
    %454 = arith.addf %453, %452 : vector<16x128xf32>
    %455 = arith.divf %453, %454 : vector<16x128xf32>
    %456 = vector.extract_strided_slice %449 {offsets = [0, 128], sizes = [16, 128], strides = [1, 1]} : vector<16x512xf32> to vector<16x128xf32>
    %457 = arith.negf %456 : vector<16x128xf32>
    %458 = math.exp %457 : vector<16x128xf32>
    %cst_117 = arith.constant 1.000000e+00 : f32
    %459 = vector.broadcast %cst_117 : f32 to vector<16x128xf32>
    %460 = arith.addf %459, %458 : vector<16x128xf32>
    %461 = arith.divf %459, %460 : vector<16x128xf32>
    %462 = vector.extract_strided_slice %449 {offsets = [0, 256], sizes = [16, 128], strides = [1, 1]} : vector<16x512xf32> to vector<16x128xf32>
    %463 = math.tanh %462 : vector<16x128xf32>
    %464 = vector.extract_strided_slice %449 {offsets = [0, 384], sizes = [16, 128], strides = [1, 1]} : vector<16x512xf32> to vector<16x128xf32>
    %465 = arith.negf %464 : vector<16x128xf32>
    %466 = math.exp %465 : vector<16x128xf32>
    %cst_118 = arith.constant 1.000000e+00 : f32
    %467 = vector.broadcast %cst_118 : f32 to vector<16x128xf32>
    %468 = arith.addf %467, %466 : vector<16x128xf32>
    %469 = arith.divf %467, %468 : vector<16x128xf32>
    %470 = arith.mulf %461, %440 : vector<16x128xf32>
    %471 = arith.mulf %455, %463 : vector<16x128xf32>
    %472 = arith.addf %470, %471 : vector<16x128xf32>
    %473 = math.tanh %472 : vector<16x128xf32>
    %474 = arith.mulf %469, %473 : vector<16x128xf32>
    %c5_i32_119 = arith.constant 5 : i32
    %475 = arith.index_cast %c5_i32_119 : i32 to index
    %c0_120 = arith.constant 0 : index
    %c0_121 = arith.constant 0 : index
    %476 = vector.load %arg9[%475, %c0_120, %c0_121] : memref<8x16x512xbf16, #tpu.memory_space<vmem>>, vector<1x16x512xbf16>
    %477 = vector.shape_cast %476 : vector<1x16x512xbf16> to vector<16x512xbf16>
    %478 = arith.truncf %474 : vector<16x128xf32> to vector<16x128xbf16>
    %cst_122 = arith.constant dense<0.000000e+00> : vector<16x512xf32>
    %479 = tpu.matmul %478, %313, %cst_122 {dimension_numbers = #tpu.dot_dimension_numbers<[1], [0], [0], [1], [0, 0, 1, 1], [], []>} : vector<16x128xbf16>, vector<128x512xbf16>, vector<16x512xf32> -> vector<16x512xf32>
    %480 = arith.extf %477 : vector<16x512xbf16> to vector<16x512xf32>
    %481 = arith.addf %480, %479 : vector<16x512xf32>
    %482 = vector.extract_strided_slice %481 {offsets = [0, 0], sizes = [16, 128], strides = [1, 1]} : vector<16x512xf32> to vector<16x128xf32>
    %483 = arith.negf %482 : vector<16x128xf32>
    %484 = math.exp %483 : vector<16x128xf32>
    %cst_123 = arith.constant 1.000000e+00 : f32
    %485 = vector.broadcast %cst_123 : f32 to vector<16x128xf32>
    %486 = arith.addf %485, %484 : vector<16x128xf32>
    %487 = arith.divf %485, %486 : vector<16x128xf32>
    %488 = vector.extract_strided_slice %481 {offsets = [0, 128], sizes = [16, 128], strides = [1, 1]} : vector<16x512xf32> to vector<16x128xf32>
    %489 = arith.negf %488 : vector<16x128xf32>
    %490 = math.exp %489 : vector<16x128xf32>
    %cst_124 = arith.constant 1.000000e+00 : f32
    %491 = vector.broadcast %cst_124 : f32 to vector<16x128xf32>
    %492 = arith.addf %491, %490 : vector<16x128xf32>
    %493 = arith.divf %491, %492 : vector<16x128xf32>
    %494 = vector.extract_strided_slice %481 {offsets = [0, 256], sizes = [16, 128], strides = [1, 1]} : vector<16x512xf32> to vector<16x128xf32>
    %495 = math.tanh %494 : vector<16x128xf32>
    %496 = vector.extract_strided_slice %481 {offsets = [0, 384], sizes = [16, 128], strides = [1, 1]} : vector<16x512xf32> to vector<16x128xf32>
    %497 = arith.negf %496 : vector<16x128xf32>
    %498 = math.exp %497 : vector<16x128xf32>
    %cst_125 = arith.constant 1.000000e+00 : f32
    %499 = vector.broadcast %cst_125 : f32 to vector<16x128xf32>
    %500 = arith.addf %499, %498 : vector<16x128xf32>
    %501 = arith.divf %499, %500 : vector<16x128xf32>
    %502 = arith.mulf %493, %472 : vector<16x128xf32>
    %503 = arith.mulf %487, %495 : vector<16x128xf32>
    %504 = arith.addf %502, %503 : vector<16x128xf32>
    %505 = math.tanh %504 : vector<16x128xf32>
    %506 = arith.mulf %501, %505 : vector<16x128xf32>
    %c6_i32_126 = arith.constant 6 : i32
    %507 = arith.index_cast %c6_i32_126 : i32 to index
    %c0_127 = arith.constant 0 : index
    %c0_128 = arith.constant 0 : index
    %508 = vector.load %arg9[%507, %c0_127, %c0_128] : memref<8x16x512xbf16, #tpu.memory_space<vmem>>, vector<1x16x512xbf16>
    %509 = vector.shape_cast %508 : vector<1x16x512xbf16> to vector<16x512xbf16>
    %510 = arith.truncf %506 : vector<16x128xf32> to vector<16x128xbf16>
    %cst_129 = arith.constant dense<0.000000e+00> : vector<16x512xf32>
    %511 = tpu.matmul %510, %313, %cst_129 {dimension_numbers = #tpu.dot_dimension_numbers<[1], [0], [0], [1], [0, 0, 1, 1], [], []>} : vector<16x128xbf16>, vector<128x512xbf16>, vector<16x512xf32> -> vector<16x512xf32>
    %512 = arith.extf %509 : vector<16x512xbf16> to vector<16x512xf32>
    %513 = arith.addf %512, %511 : vector<16x512xf32>
    %514 = vector.extract_strided_slice %513 {offsets = [0, 0], sizes = [16, 128], strides = [1, 1]} : vector<16x512xf32> to vector<16x128xf32>
    %515 = arith.negf %514 : vector<16x128xf32>
    %516 = math.exp %515 : vector<16x128xf32>
    %cst_130 = arith.constant 1.000000e+00 : f32
    %517 = vector.broadcast %cst_130 : f32 to vector<16x128xf32>
    %518 = arith.addf %517, %516 : vector<16x128xf32>
    %519 = arith.divf %517, %518 : vector<16x128xf32>
    %520 = vector.extract_strided_slice %513 {offsets = [0, 128], sizes = [16, 128], strides = [1, 1]} : vector<16x512xf32> to vector<16x128xf32>
    %521 = arith.negf %520 : vector<16x128xf32>
    %522 = math.exp %521 : vector<16x128xf32>
    %cst_131 = arith.constant 1.000000e+00 : f32
    %523 = vector.broadcast %cst_131 : f32 to vector<16x128xf32>
    %524 = arith.addf %523, %522 : vector<16x128xf32>
    %525 = arith.divf %523, %524 : vector<16x128xf32>
    %526 = vector.extract_strided_slice %513 {offsets = [0, 256], sizes = [16, 128], strides = [1, 1]} : vector<16x512xf32> to vector<16x128xf32>
    %527 = math.tanh %526 : vector<16x128xf32>
    %528 = vector.extract_strided_slice %513 {offsets = [0, 384], sizes = [16, 128], strides = [1, 1]} : vector<16x512xf32> to vector<16x128xf32>
    %529 = arith.negf %528 : vector<16x128xf32>
    %530 = math.exp %529 : vector<16x128xf32>
    %cst_132 = arith.constant 1.000000e+00 : f32
    %531 = vector.broadcast %cst_132 : f32 to vector<16x128xf32>
    %532 = arith.addf %531, %530 : vector<16x128xf32>
    %533 = arith.divf %531, %532 : vector<16x128xf32>
    %534 = arith.mulf %525, %504 : vector<16x128xf32>
    %535 = arith.mulf %519, %527 : vector<16x128xf32>
    %536 = arith.addf %534, %535 : vector<16x128xf32>
    %537 = math.tanh %536 : vector<16x128xf32>
    %538 = arith.mulf %533, %537 : vector<16x128xf32>
    %c7_i32_133 = arith.constant 7 : i32
    %539 = arith.index_cast %c7_i32_133 : i32 to index
    %c0_134 = arith.constant 0 : index
    %c0_135 = arith.constant 0 : index
    %540 = vector.load %arg9[%539, %c0_134, %c0_135] : memref<8x16x512xbf16, #tpu.memory_space<vmem>>, vector<1x16x512xbf16>
    %541 = vector.shape_cast %540 : vector<1x16x512xbf16> to vector<16x512xbf16>
    %542 = arith.truncf %538 : vector<16x128xf32> to vector<16x128xbf16>
    %cst_136 = arith.constant dense<0.000000e+00> : vector<16x512xf32>
    %543 = tpu.matmul %542, %313, %cst_136 {dimension_numbers = #tpu.dot_dimension_numbers<[1], [0], [0], [1], [0, 0, 1, 1], [], []>} : vector<16x128xbf16>, vector<128x512xbf16>, vector<16x512xf32> -> vector<16x512xf32>
    %544 = arith.extf %541 : vector<16x512xbf16> to vector<16x512xf32>
    %545 = arith.addf %544, %543 : vector<16x512xf32>
    %546 = vector.extract_strided_slice %545 {offsets = [0, 0], sizes = [16, 128], strides = [1, 1]} : vector<16x512xf32> to vector<16x128xf32>
    %547 = arith.negf %546 : vector<16x128xf32>
    %548 = math.exp %547 : vector<16x128xf32>
    %cst_137 = arith.constant 1.000000e+00 : f32
    %549 = vector.broadcast %cst_137 : f32 to vector<16x128xf32>
    %550 = arith.addf %549, %548 : vector<16x128xf32>
    %551 = arith.divf %549, %550 : vector<16x128xf32>
    %552 = vector.extract_strided_slice %545 {offsets = [0, 128], sizes = [16, 128], strides = [1, 1]} : vector<16x512xf32> to vector<16x128xf32>
    %553 = arith.negf %552 : vector<16x128xf32>
    %554 = math.exp %553 : vector<16x128xf32>
    %cst_138 = arith.constant 1.000000e+00 : f32
    %555 = vector.broadcast %cst_138 : f32 to vector<16x128xf32>
    %556 = arith.addf %555, %554 : vector<16x128xf32>
    %557 = arith.divf %555, %556 : vector<16x128xf32>
    %558 = vector.extract_strided_slice %545 {offsets = [0, 256], sizes = [16, 128], strides = [1, 1]} : vector<16x512xf32> to vector<16x128xf32>
    %559 = math.tanh %558 : vector<16x128xf32>
    %560 = vector.extract_strided_slice %545 {offsets = [0, 384], sizes = [16, 128], strides = [1, 1]} : vector<16x512xf32> to vector<16x128xf32>
    %561 = arith.negf %560 : vector<16x128xf32>
    %562 = math.exp %561 : vector<16x128xf32>
    %cst_139 = arith.constant 1.000000e+00 : f32
    %563 = vector.broadcast %cst_139 : f32 to vector<16x128xf32>
    %564 = arith.addf %563, %562 : vector<16x128xf32>
    %565 = arith.divf %563, %564 : vector<16x128xf32>
    %566 = arith.mulf %557, %536 : vector<16x128xf32>
    %567 = arith.mulf %551, %559 : vector<16x128xf32>
    %568 = arith.addf %566, %567 : vector<16x128xf32>
    %569 = math.tanh %568 : vector<16x128xf32>
    %570 = arith.mulf %565, %569 : vector<16x128xf32>
    %c8_i32_140 = arith.constant 8 : i32
    %c0_141 = arith.constant 0 : index
    %c256 = arith.constant 256 : index
    %571 = vector.load %arg10[%c0_141, %c256] : memref<16x512xf32, #tpu.memory_space<vmem>>, vector<16x128xf32>
    tpu.vector_store %arg10[%c0_141, %c256], %570 {strides = array<i32>} : memref<16x512xf32, #tpu.memory_space<vmem>>, vector<16x128xf32>,
    %c0_142 = arith.constant 0 : index
    %c384 = arith.constant 384 : index
    %572 = vector.load %arg10[%c0_142, %c384] : memref<16x512xf32, #tpu.memory_space<vmem>>, vector<16x128xf32>
    tpu.vector_store %arg10[%c0_142, %c384], %568 {strides = array<i32>} : memref<16x512xf32, #tpu.memory_space<vmem>>, vector<16x128xf32>,
    %c0_143 = arith.constant 0 : index
    %c0_144 = arith.constant 0 : index
    %573 = vector.load %arg10[%c0_143, %c0_144] : memref<16x512xf32, #tpu.memory_space<vmem>>, vector<16x512xf32>
    %574 = math.tanh %573 : vector<16x512xf32>
    %575 = arith.truncf %574 : vector<16x512xf32> to vector<16x512xbf16>
    %c0_145 = arith.constant 0 : index
    %c0_146 = arith.constant 0 : index
    %576 = vector.load %arg5[%c0_145, %c0_146] : memref<512x128xbf16, #tpu.memory_space<vmem>>, vector<512x128xbf16>
    %cst_147 = arith.constant dense<0.000000e+00> : vector<16x128xf32>
    %577 = tpu.matmul %575, %576, %cst_147 {dimension_numbers = #tpu.dot_dimension_numbers<[1], [0], [0], [1], [0, 0, 1, 1], [], []>} : vector<16x512xbf16>, vector<512x128xbf16>, vector<16x128xf32> -> vector<16x128xf32>
    %c0_148 = arith.constant 0 : index
    %c0_149 = arith.constant 0 : index
    %578 = vector.load %arg6[%c0_148, %c0_149] : memref<1x128xf32, #tpu.memory_space<vmem>>, vector<1x128xf32>
    %579 = vector.broadcast %578 : vector<1x128xf32> to vector<16x128xf32>
    %580 = arith.addf %577, %579 : vector<16x128xf32>
    %c0_150 = arith.constant 0 : index
    %c0_151 = arith.constant 0 : index
    %581 = vector.load %arg7[%c0_150, %c0_151] : memref<16x128xf32, #tpu.memory_space<vmem>>, vector<16x128xf32>
    tpu.vector_store %arg7[%c0_150, %c0_151], %580 {strides = array<i32>} : memref<16x128xf32, #tpu.memory_space<vmem>>, vector<16x128xf32>,
    return
  }
  func.func @transform_0(%arg0: i32) -> (i32, i32, i32) {
    %c0_i32 = arith.constant 0 : i32
    %c0_i32_0 = arith.constant 0 : i32
    %c0_i32_1 = arith.constant 0 : i32
    return %c0_i32, %arg0, %c0_i32_0 : i32, i32, i32
  }
  func.func @transform_1(%arg0: i32) -> (i32, i32, i32) {
    %c0_i32 = arith.constant 0 : i32
    %c0_i32_0 = arith.constant 0 : i32
    %c0_i32_1 = arith.constant 0 : i32
    %c0_i32_2 = arith.constant 0 : i32
    return %c0_i32, %c0_i32_0, %c0_i32_1 : i32, i32, i32
  }
  func.func @transform_2(%arg0: i32) -> (i32, i32, i32) {
    %c0_i32 = arith.constant 0 : i32
    %c0_i32_0 = arith.constant 0 : i32
    %c0_i32_1 = arith.constant 0 : i32
    %c0_i32_2 = arith.constant 0 : i32
    return %c0_i32, %c0_i32_0, %c0_i32_1 : i32, i32, i32
  }
  func.func @transform_3(%arg0: i32) -> (i32, i32) {
    %c0_i32 = arith.constant 0 : i32
    %c0_i32_0 = arith.constant 0 : i32
    %c0_i32_1 = arith.constant 0 : i32
    return %c0_i32, %c0_i32_0 : i32, i32
  }
  func.func @transform_4(%arg0: i32) -> (i32, i32) {
    %c0_i32 = arith.constant 0 : i32
    %c0_i32_0 = arith.constant 0 : i32
    %c0_i32_1 = arith.constant 0 : i32
    return %c0_i32, %c0_i32_0 : i32, i32
  }
  func.func @transform_5(%arg0: i32) -> (i32, i32) {
    %c0_i32 = arith.constant 0 : i32
    %c0_i32_0 = arith.constant 0 : i32
    %c0_i32_1 = arith.constant 0 : i32
    return %c0_i32, %c0_i32_0 : i32, i32
  }
  func.func @transform_6(%arg0: i32) -> (i32, i32) {
    %c0_i32 = arith.constant 0 : i32
    %c0_i32_0 = arith.constant 0 : i32
    return %arg0, %c0_i32 : i32, i32
  }
}

</mosaic_0001>

<llo_original>
// kernel: qst_encoder_forward.2
$region0: #{qst_encoder_forward.2}
  #allocation0 [shape = 'u32[]', space=smem, size = 0x4, offset = 0x4, fixed_abs, tag = 'smem constant byte address 0x4 - core index']
  #allocation1 [shape = 'u32[144,128]{1,0:T(1,128)}', space=vmem, size = 0x12000, scoped, tag = 'internal scratch']
  %s0 = inlined_call_operand.vmem [shape: f32[128,128], index: 0, kind: input, shape index: {}]
  %s1 = inlined_call_operand.vmem [shape: bf16[128,512], index: 1, kind: input, shape index: {}]
  %s2 = inlined_call_operand.vmem [shape: f32[1,512], index: 2, kind: input, shape index: {}]
  %s3 = inlined_call_operand.vmem [shape: bf16[128,512], index: 3, kind: output, shape index: {}]
  %s4 = sld [smem:[#allocation0]]
  $region22: #{qst_encoder_forward.2} parent=0
    _
  %s6 = ssub.s32 1, %s4
  %s7 = scalar_select 0, %s6, %s4
  // Predicated region
  $region2: #{qst_encoder_forward.2} parent=0 // pred_check
    _
  $region3: #{qst_encoder_forward.2} parent=0 // pred_check_branch
    %9 = sbr.rel (0) target = $region5
  $region4: #{qst_encoder_forward.2} parent=0 // pred_region
    _
  $region5: #{qst_encoder_forward.2} parent=0 // pred_fallthru
    _
  // Predicated region
  $region6: #{qst_encoder_forward.2} parent=0 // pred_check
    _
  $region7: #{qst_encoder_forward.2} parent=0 // pred_check_branch
    %11 = sbr.rel (0) target = $region9
  $region8: #{qst_encoder_forward.2} parent=0 // pred_region
    _
  $region9: #{qst_encoder_forward.2} parent=0 // pred_fallthru
    _
  // Predicated region
  $region10: #{qst_encoder_forward.2} parent=0 // pred_check
    _
  $region11: #{qst_encoder_forward.2} parent=0 // pred_check_branch
    %13 = sbr.rel (0) target = $region13
  $region12: #{qst_encoder_forward.2} parent=0 // pred_region
    _
  $region13: #{qst_encoder_forward.2} parent=0 // pred_fallthru
    _
  %v15 = vld [vmem:[%s0] sm:$0xff]
  %v16 = vld [vmem:[%s0 + $0x8] sm:$0xff]
  %v17 = vld [vmem:[%s0 + $0x10] sm:$0xff]
  %v18 = vld [vmem:[%s0 + $0x18] sm:$0xff]
  %v19 = vld [vmem:[%s0 + $0x20] sm:$0xff]
  %v20 = vld [vmem:[%s0 + $0x28] sm:$0xff]
  %v21 = vld [vmem:[%s0 + $0x30] sm:$0xff]
  %v22 = vld [vmem:[%s0 + $0x38] sm:$0xff]
  %v23 = vld [vmem:[%s0 + $0x40] sm:$0xff]
  %v24 = vld [vmem:[%s0 + $0x48] sm:$0xff]
  %v25 = vld [vmem:[%s0 + $0x50] sm:$0xff]
  %v26 = vld [vmem:[%s0 + $0x58] sm:$0xff]
  %v27 = vld [vmem:[%s0 + $0x60] sm:$0xff]
  %v28 = vld [vmem:[%s0 + $0x68] sm:$0xff]
  %v29 = vld [vmem:[%s0 + $0x70] sm:$0xff]
  %v30 = vld [vmem:[%s0 + $0x78] sm:$0xff]
  %v31 = vtanh.pop %v15
  %v32 = vtanh.pop %v16
  %v33 = vtanh.pop %v17
  %v34 = vtanh.pop %v18
  %v35 = vtanh.pop %v19
  %v36 = vtanh.pop %v20
  %v37 = vtanh.pop %v21
  %v38 = vtanh.pop %v22
  %v39 = vtanh.pop %v23
  %v40 = vtanh.pop %v24
  %v41 = vtanh.pop %v25
  %v42 = vtanh.pop %v26
  %v43 = vtanh.pop %v27
  %v44 = vtanh.pop %v28
  %v45 = vtanh.pop %v29
  %v46 = vtanh.pop %v30
  %v47 = vpack.c.bf16 %v32, %v31
  %v48 = vpack.c.bf16 %v34, %v33
  %v49 = vpack.c.bf16 %v36, %v35
  %v50 = vpack.c.bf16 %v38, %v37
  %v51 = vpack.c.bf16 %v40, %v39
  %v52 = vpack.c.bf16 %v42, %v41
  %v53 = vpack.c.bf16 %v44, %v43
  %v54 = vpack.c.bf16 %v46, %v45
  %v55 = vld [vmem:[%s1] sm:$0xff]
  %v56 = vld [vmem:[%s1 + $0x8] sm:$0xff]
  %v57 = vld [vmem:[%s1 + $0x10] sm:$0xff]
  %v58 = vld [vmem:[%s1 + $0x18] sm:$0xff]
  %v59 = vld [vmem:[%s1 + $0x20] sm:$0xff]
  %v60 = vld [vmem:[%s1 + $0x28] sm:$0xff]
  %v61 = vld [vmem:[%s1 + $0x30] sm:$0xff]
  %v62 = vld [vmem:[%s1 + $0x38] sm:$0xff]
  %v63 = vld [vmem:[%s1 + $0x40] sm:$0xff]
  %v64 = vld [vmem:[%s1 + $0x48] sm:$0xff]
  %v65 = vld [vmem:[%s1 + $0x50] sm:$0xff]
  %v66 = vld [vmem:[%s1 + $0x58] sm:$0xff]
  %v67 = vld [vmem:[%s1 + $0x60] sm:$0xff]
  %v68 = vld [vmem:[%s1 + $0x68] sm:$0xff]
  %v69 = vld [vmem:[%s1 + $0x70] sm:$0xff]
  %v70 = vld [vmem:[%s1 + $0x78] sm:$0xff]
  %v71 = vld [vmem:[%s1 + $0x80] sm:$0xff]
  %v72 = vld [vmem:[%s1 + $0x88] sm:$0xff]
  %v73 = vld [vmem:[%s1 + $0x90] sm:$0xff]
  %v74 = vld [vmem:[%s1 + $0x98] sm:$0xff]
  %v75 = vld [vmem:[%s1 + $0xa0] sm:$0xff]
  %v76 = vld [vmem:[%s1 + $0xa8] sm:$0xff]
  %v77 = vld [vmem:[%s1 + $0xb0] sm:$0xff]
  %v78 = vld [vmem:[%s1 + $0xb8] sm:$0xff]
  %v79 = vld [vmem:[%s1 + $0xc0] sm:$0xff]
  %v80 = vld [vmem:[%s1 + $0xc8] sm:$0xff]
  %v81 = vld [vmem:[%s1 + $0xd0] sm:$0xff]
  %v82 = vld [vmem:[%s1 + $0xd8] sm:$0xff]
  %v83 = vld [vmem:[%s1 + $0xe0] sm:$0xff]
  %v84 = vld [vmem:[%s1 + $0xe8] sm:$0xff]
  %v85 = vld [vmem:[%s1 + $0xf0] sm:$0xff]
  %v86 = vld [vmem:[%s1 + $0xf8] sm:$0xff]
  %v87 = vld [vmem:[%s2] sm:$0xf]
  %v89 = vlaneseq
  %v90 = vshrl.u32 %v89, 7
  %v91 = vsub.s32 0, %v90
  %v92 = vrot.slane %v87, %v91
  %v93 = vlaneseq
  %v94 = vshrl.u32 %v93, 7
  %v95 = vsub.s32 1, %v94
  %v96 = vrot.slane %v87, %v95
  %v97 = vlaneseq
  %v98 = vshrl.u32 %v97, 7
  %v99 = vsub.s32 2, %v98
  %v100 = vrot.slane %v87, %v99
  %v101 = vlaneseq
  %v102 = vshrl.u32 %v101, 7
  %v103 = vsub.s32 3, %v102
  %v104 = vrot.slane %v87, %v103
  %v141 = vunpack.c.l.b16 %v55
  %v142 = vunpack.c.h.b16 %v55
  %v143 = vunpack.c.l.b16 %v56
  %v144 = vunpack.c.h.b16 %v56
  %v145 = vunpack.c.l.b16 %v57
  %v146 = vunpack.c.h.b16 %v57
  %v147 = vunpack.c.l.b16 %v58
  %v148 = vunpack.c.h.b16 %v58
  %v149 = vunpack.c.l.b16 %v59
  %v150 = vunpack.c.h.b16 %v59
  %v151 = vunpack.c.l.b16 %v60
  %v152 = vunpack.c.h.b16 %v60
  %v153 = vunpack.c.l.b16 %v61
  %v154 = vunpack.c.h.b16 %v61
  %v155 = vunpack.c.l.b16 %v62
  %v156 = vunpack.c.h.b16 %v62
  %v157 = vunpack.c.l.b16 %v63
  %v158 = vunpack.c.h.b16 %v63
  %v159 = vunpack.c.l.b16 %v64
  %v160 = vunpack.c.h.b16 %v64
  %v161 = vunpack.c.l.b16 %v65
  %v162 = vunpack.c.h.b16 %v65
  %v163 = vunpack.c.l.b16 %v66
  %v164 = vunpack.c.h.b16 %v66
  %v165 = vunpack.c.l.b16 %v67
  %v166 = vunpack.c.h.b16 %v67
  %v167 = vunpack.c.l.b16 %v68
  %v168 = vunpack.c.h.b16 %v68
  %v169 = vunpack.c.l.b16 %v69
  %v170 = vunpack.c.h.b16 %v69
  %v171 = vunpack.c.l.b16 %v70
  %v172 = vunpack.c.h.b16 %v70
  %v173 = vunpack.c.l.b16 %v71
  %v174 = vunpack.c.h.b16 %v71
  %v175 = vunpack.c.l.b16 %v72
  %v176 = vunpack.c.h.b16 %v72
  %v177 = vunpack.c.l.b16 %v73
  %v178 = vunpack.c.h.b16 %v73
  %v179 = vunpack.c.l.b16 %v74
  %v180 = vunpack.c.h.b16 %v74
  %v181 = vunpack.c.l.b16 %v75
  %v182 = vunpack.c.h.b16 %v75
  %v183 = vunpack.c.l.b16 %v76
  %v184 = vunpack.c.h.b16 %v76
  %v185 = vunpack.c.l.b16 %v77
  %v186 = vunpack.c.h.b16 %v77
  %v187 = vunpack.c.l.b16 %v78
  %v188 = vunpack.c.h.b16 %v78
  %v189 = vunpack.c.l.b16 %v79
  %v190 = vunpack.c.h.b16 %v79
  %v191 = vunpack.c.l.b16 %v80
  %v192 = vunpack.c.h.b16 %v80
  %v193 = vunpack.c.l.b16 %v81
  %v194 = vunpack.c.h.b16 %v81
  %v195 = vunpack.c.l.b16 %v82
  %v196 = vunpack.c.h.b16 %v82
  %v197 = vunpack.c.l.b16 %v83
  %v198 = vunpack.c.h.b16 %v83
  %v199 = vunpack.c.l.b16 %v84
  %v200 = vunpack.c.h.b16 %v84
  %v201 = vunpack.c.l.b16 %v85
  %v202 = vunpack.c.h.b16 %v85
  %v203 = vunpack.c.l.b16 %v86
  %v204 = vunpack.c.h.b16 %v86
  %v205 = vpack.c.b16 %v145, %v141
  %v206 = vpack.c.b16 %v146, %v142
  %v207 = vpack.c.b16 %v147, %v143
  %v208 = vpack.c.b16 %v148, %v144
  %v209 = vpack.c.b16 %v153, %v149
  %v210 = vpack.c.b16 %v154, %v150
  %v211 = vpack.c.b16 %v155, %v151
  %v212 = vpack.c.b16 %v156, %v152
  %v213 = vpack.c.b16 %v161, %v157
  %v214 = vpack.c.b16 %v162, %v158
  %v215 = vpack.c.b16 %v163, %v159
  %v216 = vpack.c.b16 %v164, %v160
  %v217 = vpack.c.b16 %v169, %v165
  %v218 = vpack.c.b16 %v170, %v166
  %v219 = vpack.c.b16 %v171, %v167
  %v220 = vpack.c.b16 %v172, %v168
  %v221 = vpack.c.b16 %v177, %v173
  %v222 = vpack.c.b16 %v178, %v174
  %v223 = vpack.c.b16 %v179, %v175
  %v224 = vpack.c.b16 %v180, %v176
  %v225 = vpack.c.b16 %v185, %v181
  %v226 = vpack.c.b16 %v186, %v182
  %v227 = vpack.c.b16 %v187, %v183
  %v228 = vpack.c.b16 %v188, %v184
  %v229 = vpack.c.b16 %v193, %v189
  %v230 = vpack.c.b16 %v194, %v190
  %v231 = vpack.c.b16 %v195, %v191
  %v232 = vpack.c.b16 %v196, %v192
  %v233 = vpack.c.b16 %v201, %v197
  %v234 = vpack.c.b16 %v202, %v198
  %v235 = vpack.c.b16 %v203, %v199
  %v236 = vpack.c.b16 %v204, %v200
  %269 = vmatprep.subr.bf16.mxu0 %v206
  %270 = vmatpush1.bf16.msra.mxu0 %v205
  %271 = vmatprep.subr.bf16.mxu0 %v210
  %272 = vmatpush1.bf16.msra.mxu0 %v209
  %273 = vmatprep.subr.bf16.mxu0 %v214
  %274 = vmatpush1.bf16.msra.mxu0 %v213
  %275 = vmatprep.subr.bf16.mxu0 %v218
  %276 = vmatpush1.bf16.msra.mxu0 %v217
  %277 = vmatprep.subr.bf16.mxu0 %v222
  %278 = vmatpush1.bf16.msra.mxu0 %v221
  %279 = vmatprep.subr.bf16.mxu0 %v226
  %280 = vmatpush1.bf16.msra.mxu0 %v225
  %281 = vmatprep.subr.bf16.mxu0 %v230
  %282 = vmatpush1.bf16.msra.mxu0 %v229
  %283 = vmatprep.subr.bf16.mxu0 %v234
  %284 = vmatpush1.bf16.msra.mxu0 %v233
  %285 = vmatprep.subr.bf16.mxu0 0
  %286 = vmatpush1.bf16.msra.mxu0 0
  %287 = vmatprep.subr.bf16.mxu0 0
  %288 = vmatpush1.bf16.msra.mxu0 0
  %289 = vmatprep.subr.bf16.mxu0 0
  %290 = vmatpush1.bf16.msra.mxu0 0
  %291 = vmatprep.subr.bf16.mxu0 0
  %292 = vmatpush1.bf16.msra.mxu0 0
  %293 = vmatprep.subr.bf16.mxu0 0
  %294 = vmatpush1.bf16.msra.mxu0 0
  %295 = vmatprep.subr.bf16.mxu0 0
  %296 = vmatpush1.bf16.msra.mxu0 0
  %297 = vmatprep.subr.bf16.mxu0 0
  %298 = vmatpush1.bf16.msra.mxu0 0
  %299 = vmatprep.subr.bf16.mxu0 0
  %300 = vmatpush1.bf16.msra.mxu0 0
  %301 = vmatprep.mubr.bf16.mxu0 0
  %302 = vmatmul.mubr.bf16.gmra.mrb[0].mxu0 %v47
  %v303 = vpop.f32.mrb[0].mxu0
  %v304 = vadd.f32 %v92, %v303
  %v305 = vpop.f32.mrb[0].mxu0
  %v306 = vadd.f32 %v96, %v305
  %v307 = vpop.f32.mrb[0].mxu0
  %v308 = vadd.f32 %v92, %v307
  %v309 = vpop.f32.mrb[0].mxu0
  %v310 = vadd.f32 %v96, %v309
  %311 = vmatprep.mubr.bf16.mxu0 0
  %312 = vmatmul.mubr.bf16.gmra.mrb[0].mxu0 %v48
  %v313 = vpop.f32.mrb[0].mxu0
  %v314 = vadd.f32 %v92, %v313
  %v315 = vpop.f32.mrb[0].mxu0
  %v316 = vadd.f32 %v96, %v315
  %v317 = vpop.f32.mrb[0].mxu0
  %v318 = vadd.f32 %v92, %v317
  %v319 = vpop.f32.mrb[0].mxu0
  %v320 = vadd.f32 %v96, %v319
  %321 = vmatprep.mubr.bf16.mxu0 0
  %322 = vmatmul.mubr.bf16.gmra.mrb[0].mxu0 %v49
  %v323 = vpop.f32.mrb[0].mxu0
  %v324 = vadd.f32 %v92, %v323
  %v325 = vpop.f32.mrb[0].mxu0
  %v326 = vadd.f32 %v96, %v325
  %v327 = vpop.f32.mrb[0].mxu0
  %v328 = vadd.f32 %v92, %v327
  %v329 = vpop.f32.mrb[0].mxu0
  %v330 = vadd.f32 %v96, %v329
  %331 = vmatprep.mubr.bf16.mxu0 0
  %332 = vmatmul.mubr.bf16.gmra.mrb[0].mxu0 %v50
  %v333 = vpop.f32.mrb[0].mxu0
  %v334 = vadd.f32 %v92, %v333
  %v335 = vpop.f32.mrb[0].mxu0
  %v336 = vadd.f32 %v96, %v335
  %v337 = vpop.f32.mrb[0].mxu0
  %v338 = vadd.f32 %v92, %v337
  %v339 = vpop.f32.mrb[0].mxu0
  %v340 = vadd.f32 %v96, %v339
  %341 = vmatprep.mubr.bf16.mxu0 0
  %342 = vmatmul.mubr.bf16.gmra.mrb[0].mxu0 %v51
  %v343 = vpop.f32.mrb[0].mxu0
  %v344 = vadd.f32 %v92, %v343
  %v345 = vpop.f32.mrb[0].mxu0
  %v346 = vadd.f32 %v96, %v345
  %v347 = vpop.f32.mrb[0].mxu0
  %v348 = vadd.f32 %v92, %v347
  %v349 = vpop.f32.mrb[0].mxu0
  %v350 = vadd.f32 %v96, %v349
  %351 = vmatprep.mubr.bf16.mxu0 0
  %352 = vmatmul.mubr.bf16.gmra.mrb[0].mxu0 %v52
  %v353 = vpop.f32.mrb[0].mxu0
  %v354 = vadd.f32 %v92, %v353
  %v355 = vpop.f32.mrb[0].mxu0
  %v356 = vadd.f32 %v96, %v355
  %v357 = vpop.f32.mrb[0].mxu0
  %v358 = vadd.f32 %v92, %v357
  %v359 = vpop.f32.mrb[0].mxu0
  %v360 = vadd.f32 %v96, %v359
  %361 = vmatprep.mubr.bf16.mxu0 0
  %362 = vmatmul.mubr.bf16.gmra.mrb[0].mxu0 %v53
  %v363 = vpop.f32.mrb[0].mxu0
  %v364 = vadd.f32 %v92, %v363
  %v365 = vpop.f32.mrb[0].mxu0
  %v366 = vadd.f32 %v96, %v365
  %v367 = vpop.f32.mrb[0].mxu0
  %v368 = vadd.f32 %v92, %v367
  %v369 = vpop.f32.mrb[0].mxu0
  %v370 = vadd.f32 %v96, %v369
  %371 = vmatprep.mubr.bf16.mxu0 0
  %372 = vmatmul.mubr.bf16.gmra.mrb[0].mxu0 %v54
  %v373 = vpop.f32.mrb[0].mxu0
  %v374 = vadd.f32 %v92, %v373
  %v375 = vpop.f32.mrb[0].mxu0
  %v376 = vadd.f32 %v96, %v375
  %v377 = vpop.f32.mrb[0].mxu0
  %v378 = vadd.f32 %v92, %v377
  %v379 = vpop.f32.mrb[0].mxu0
  %v380 = vadd.f32 %v96, %v379
  %381 = vdwg.mxu0
  %382 = vmatprep.subr.bf16.mxu0 %v208
  %383 = vmatpush1.bf16.msra.mxu0 %v207
  %384 = vmatprep.subr.bf16.mxu0 %v212
  %385 = vmatpush1.bf16.msra.mxu0 %v211
  %386 = vmatprep.subr.bf16.mxu0 %v216
  %387 = vmatpush1.bf16.msra.mxu0 %v215
  %388 = vmatprep.subr.bf16.mxu0 %v220
  %389 = vmatpush1.bf16.msra.mxu0 %v219
  %390 = vmatprep.subr.bf16.mxu0 %v224
  %391 = vmatpush1.bf16.msra.mxu0 %v223
  %392 = vmatprep.subr.bf16.mxu0 %v228
  %393 = vmatpush1.bf16.msra.mxu0 %v227
  %394 = vmatprep.subr.bf16.mxu0 %v232
  %395 = vmatpush1.bf16.msra.mxu0 %v231
  %396 = vmatprep.subr.bf16.mxu0 %v236
  %397 = vmatpush1.bf16.msra.mxu0 %v235
  %398 = vmatprep.subr.bf16.mxu0 0
  %399 = vmatpush1.bf16.msra.mxu0 0
  %400 = vmatprep.subr.bf16.mxu0 0
  %401 = vmatpush1.bf16.msra.mxu0 0
  %402 = vmatprep.subr.bf16.mxu0 0
  %403 = vmatpush1.bf16.msra.mxu0 0
  %404 = vmatprep.subr.bf16.mxu0 0
  %405 = vmatpush1.bf16.msra.mxu0 0
  %406 = vmatprep.subr.bf16.mxu0 0
  %407 = vmatpush1.bf16.msra.mxu0 0
  %408 = vmatprep.subr.bf16.mxu0 0
  %409 = vmatpush1.bf16.msra.mxu0 0
  %410 = vmatprep.subr.bf16.mxu0 0
  %411 = vmatpush1.bf16.msra.mxu0 0
  %412 = vmatprep.subr.bf16.mxu0 0
  %413 = vmatpush1.bf16.msra.mxu0 0
  %414 = vmatprep.mubr.bf16.mxu0 0
  %415 = vmatmul.mubr.bf16.gmra.mrb[0].mxu0 %v47
  %v416 = vpop.f32.mrb[0].mxu0
  %v417 = vadd.f32 %v100, %v416
  %v418 = vpop.f32.mrb[0].mxu0
  %v419 = vadd.f32 %v104, %v418
  %v420 = vpop.f32.mrb[0].mxu0
  %v421 = vadd.f32 %v100, %v420
  %v422 = vpop.f32.mrb[0].mxu0
  %v423 = vadd.f32 %v104, %v422
  %424 = vmatprep.mubr.bf16.mxu0 0
  %425 = vmatmul.mubr.bf16.gmra.mrb[0].mxu0 %v48
  %v426 = vpop.f32.mrb[0].mxu0
  %v427 = vadd.f32 %v100, %v426
  %v428 = vpop.f32.mrb[0].mxu0
  %v429 = vadd.f32 %v104, %v428
  %v430 = vpop.f32.mrb[0].mxu0
  %v431 = vadd.f32 %v100, %v430
  %v432 = vpop.f32.mrb[0].mxu0
  %v433 = vadd.f32 %v104, %v432
  %434 = vmatprep.mubr.bf16.mxu0 0
  %435 = vmatmul.mubr.bf16.gmra.mrb[0].mxu0 %v49
  %v436 = vpop.f32.mrb[0].mxu0
  %v437 = vadd.f32 %v100, %v436
  %v438 = vpop.f32.mrb[0].mxu0
  %v439 = vadd.f32 %v104, %v438
  %v440 = vpop.f32.mrb[0].mxu0
  %v441 = vadd.f32 %v100, %v440
  %v442 = vpop.f32.mrb[0].mxu0
  %v443 = vadd.f32 %v104, %v442
  %444 = vmatprep.mubr.bf16.mxu0 0
  %445 = vmatmul.mubr.bf16.gmra.mrb[0].mxu0 %v50
  %v446 = vpop.f32.mrb[0].mxu0
  %v447 = vadd.f32 %v100, %v446
  %v448 = vpop.f32.mrb[0].mxu0
  %v449 = vadd.f32 %v104, %v448
  %v450 = vpop.f32.mrb[0].mxu0
  %v451 = vadd.f32 %v100, %v450
  %v452 = vpop.f32.mrb[0].mxu0
  %v453 = vadd.f32 %v104, %v452
  %454 = vmatprep.mubr.bf16.mxu0 0
  %455 = vmatmul.mubr.bf16.gmra.mrb[0].mxu0 %v51
  %v456 = vpop.f32.mrb[0].mxu0
  %v457 = vadd.f32 %v100, %v456
  %v458 = vpop.f32.mrb[0].mxu0
  %v459 = vadd.f32 %v104, %v458
  %v460 = vpop.f32.mrb[0].mxu0
  %v461 = vadd.f32 %v100, %v460
  %v462 = vpop.f32.mrb[0].mxu0
  %v463 = vadd.f32 %v104, %v462
  %464 = vmatprep.mubr.bf16.mxu0 0
  %465 = vmatmul.mubr.bf16.gmra.mrb[0].mxu0 %v52
  %v466 = vpop.f32.mrb[0].mxu0
  %v467 = vadd.f32 %v100, %v466
  %v468 = vpop.f32.mrb[0].mxu0
  %v469 = vadd.f32 %v104, %v468
  %v470 = vpop.f32.mrb[0].mxu0
  %v471 = vadd.f32 %v100, %v470
  %v472 = vpop.f32.mrb[0].mxu0
  %v473 = vadd.f32 %v104, %v472
  %474 = vmatprep.mubr.bf16.mxu0 0
  %475 = vmatmul.mubr.bf16.gmra.mrb[0].mxu0 %v53
  %v476 = vpop.f32.mrb[0].mxu0
  %v477 = vadd.f32 %v100, %v476
  %v478 = vpop.f32.mrb[0].mxu0
  %v479 = vadd.f32 %v104, %v478
  %v480 = vpop.f32.mrb[0].mxu0
  %v481 = vadd.f32 %v100, %v480
  %v482 = vpop.f32.mrb[0].mxu0
  %v483 = vadd.f32 %v104, %v482
  %484 = vmatprep.mubr.bf16.mxu0 0
  %485 = vmatmul.mubr.bf16.gmra.mrb[0].mxu0 %v54
  %v486 = vpop.f32.mrb[0].mxu0
  %v487 = vadd.f32 %v100, %v486
  %v488 = vpop.f32.mrb[0].mxu0
  %v489 = vadd.f32 %v104, %v488
  %v490 = vpop.f32.mrb[0].mxu0
  %v491 = vadd.f32 %v100, %v490
  %v492 = vpop.f32.mrb[0].mxu0
  %v493 = vadd.f32 %v104, %v492
  %494 = vdwg.mxu0
  %v495 = vpack.c.bf16 %v308, %v304
  %v496 = vpack.c.bf16 %v310, %v306
  %v497 = vpack.c.bf16 %v421, %v417
  %v498 = vpack.c.bf16 %v423, %v419
  %v499 = vpack.c.bf16 %v318, %v314
  %v500 = vpack.c.bf16 %v320, %v316
  %v501 = vpack.c.bf16 %v431, %v427
  %v502 = vpack.c.bf16 %v433, %v429
  %v503 = vpack.c.bf16 %v328, %v324
  %v504 = vpack.c.bf16 %v330, %v326
  %v505 = vpack.c.bf16 %v441, %v437
  %v506 = vpack.c.bf16 %v443, %v439
  %v507 = vpack.c.bf16 %v338, %v334
  %v508 = vpack.c.bf16 %v340, %v336
  %v509 = vpack.c.bf16 %v451, %v447
  %v510 = vpack.c.bf16 %v453, %v449
  %v511 = vpack.c.bf16 %v348, %v344
  %v512 = vpack.c.bf16 %v350, %v346
  %v513 = vpack.c.bf16 %v461, %v457
  %v514 = vpack.c.bf16 %v463, %v459
  %v515 = vpack.c.bf16 %v358, %v354
  %v516 = vpack.c.bf16 %v360, %v356
  %v517 = vpack.c.bf16 %v471, %v467
  %v518 = vpack.c.bf16 %v473, %v469
  %v519 = vpack.c.bf16 %v368, %v364
  %v520 = vpack.c.bf16 %v370, %v366
  %v521 = vpack.c.bf16 %v481, %v477
  %v522 = vpack.c.bf16 %v483, %v479
  %v523 = vpack.c.bf16 %v378, %v374
  %v524 = vpack.c.bf16 %v380, %v376
  %v525 = vpack.c.bf16 %v491, %v487
  %v526 = vpack.c.bf16 %v493, %v489
  %v559 = vunpack.c.l.b16 %v495
  %v560 = vunpack.c.l.b16 %v496
  %v561 = vunpack.c.l.b16 %v497
  %v562 = vunpack.c.l.b16 %v498
  %v563 = vunpack.c.h.b16 %v495
  %v564 = vunpack.c.h.b16 %v496
  %v565 = vunpack.c.h.b16 %v497
  %v566 = vunpack.c.h.b16 %v498
  %v567 = vunpack.c.l.b16 %v499
  %v568 = vunpack.c.l.b16 %v500
  %v569 = vunpack.c.l.b16 %v501
  %v570 = vunpack.c.l.b16 %v502
  %v571 = vunpack.c.h.b16 %v499
  %v572 = vunpack.c.h.b16 %v500
  %v573 = vunpack.c.h.b16 %v501
  %v574 = vunpack.c.h.b16 %v502
  %v575 = vunpack.c.l.b16 %v503
  %v576 = vunpack.c.l.b16 %v504
  %v577 = vunpack.c.l.b16 %v505
  %v578 = vunpack.c.l.b16 %v506
  %v579 = vunpack.c.h.b16 %v503
  %v580 = vunpack.c.h.b16 %v504
  %v581 = vunpack.c.h.b16 %v505
  %v582 = vunpack.c.h.b16 %v506
  %v583 = vunpack.c.l.b16 %v507
  %v584 = vunpack.c.l.b16 %v508
  %v585 = vunpack.c.l.b16 %v509
  %v586 = vunpack.c.l.b16 %v510
  %v587 = vunpack.c.h.b16 %v507
  %v588 = vunpack.c.h.b16 %v508
  %v589 = vunpack.c.h.b16 %v509
  %v590 = vunpack.c.h.b16 %v510
  %v591 = vunpack.c.l.b16 %v511
  %v592 = vunpack.c.l.b16 %v512
  %v593 = vunpack.c.l.b16 %v513
  %v594 = vunpack.c.l.b16 %v514
  %v595 = vunpack.c.h.b16 %v511
  %v596 = vunpack.c.h.b16 %v512
  %v597 = vunpack.c.h.b16 %v513
  %v598 = vunpack.c.h.b16 %v514
  %v599 = vunpack.c.l.b16 %v515
  %v600 = vunpack.c.l.b16 %v516
  %v601 = vunpack.c.l.b16 %v517
  %v602 = vunpack.c.l.b16 %v518
  %v603 = vunpack.c.h.b16 %v515
  %v604 = vunpack.c.h.b16 %v516
  %v605 = vunpack.c.h.b16 %v517
  %v606 = vunpack.c.h.b16 %v518
  %v607 = vunpack.c.l.b16 %v519
  %v608 = vunpack.c.l.b16 %v520
  %v609 = vunpack.c.l.b16 %v521
  %v610 = vunpack.c.l.b16 %v522
  %v611 = vunpack.c.h.b16 %v519
  %v612 = vunpack.c.h.b16 %v520
  %v613 = vunpack.c.h.b16 %v521
  %v614 = vunpack.c.h.b16 %v522
  %v615 = vunpack.c.l.b16 %v523
  %v616 = vunpack.c.l.b16 %v524
  %v617 = vunpack.c.l.b16 %v525
  %v618 = vunpack.c.l.b16 %v526
  %v619 = vunpack.c.h.b16 %v523
  %v620 = vunpack.c.h.b16 %v524
  %v621 = vunpack.c.h.b16 %v525
  %v622 = vunpack.c.h.b16 %v526
  %v623 = vpack.c.b16 %v560, %v559
  %v624 = vpack.c.b16 %v562, %v561
  %v625 = vpack.c.b16 %v564, %v563
  %v626 = vpack.c.b16 %v566, %v565
  %v627 = vpack.c.b16 %v568, %v567
  %v628 = vpack.c.b16 %v570, %v569
  %v629 = vpack.c.b16 %v572, %v571
  %v630 = vpack.c.b16 %v574, %v573
  %v631 = vpack.c.b16 %v576, %v575
  %v632 = vpack.c.b16 %v578, %v577
  %v633 = vpack.c.b16 %v580, %v579
  %v634 = vpack.c.b16 %v582, %v581
  %v635 = vpack.c.b16 %v584, %v583
  %v636 = vpack.c.b16 %v586, %v585
  %v637 = vpack.c.b16 %v588, %v587
  %v638 = vpack.c.b16 %v590, %v589
  %v639 = vpack.c.b16 %v592, %v591
  %v640 = vpack.c.b16 %v594, %v593
  %v641 = vpack.c.b16 %v596, %v595
  %v642 = vpack.c.b16 %v598, %v597
  %v643 = vpack.c.b16 %v600, %v599
  %v644 = vpack.c.b16 %v602, %v601
  %v645 = vpack.c.b16 %v604, %v603
  %v646 = vpack.c.b16 %v606, %v605
  %v647 = vpack.c.b16 %v608, %v607
  %v648 = vpack.c.b16 %v610, %v609
  %v649 = vpack.c.b16 %v612, %v611
  %v650 = vpack.c.b16 %v614, %v613
  %v651 = vpack.c.b16 %v616, %v615
  %v652 = vpack.c.b16 %v618, %v617
  %v653 = vpack.c.b16 %v620, %v619
  %v654 = vpack.c.b16 %v622, %v621
  %687 = vst [vmem:[%s3] sm:$0xff] %v623
  %688 = vst [vmem:[%s3 + $0x8] sm:$0xff] %v624
  %689 = vst [vmem:[%s3 + $0x10] sm:$0xff] %v625
  %690 = vst [vmem:[%s3 + $0x18] sm:$0xff] %v626
  %691 = vst [vmem:[%s3 + $0x20] sm:$0xff] %v627
  %692 = vst [vmem:[%s3 + $0x28] sm:$0xff] %v628
  %693 = vst [vmem:[%s3 + $0x30] sm:$0xff] %v629
  %694 = vst [vmem:[%s3 + $0x38] sm:$0xff] %v630
  %695 = vst [vmem:[%s3 + $0x40] sm:$0xff] %v631
  %696 = vst [vmem:[%s3 + $0x48] sm:$0xff] %v632
  %697 = vst [vmem:[%s3 + $0x50] sm:$0xff] %v633
  %698 = vst [vmem:[%s3 + $0x58] sm:$0xff] %v634
  %699 = vst [vmem:[%s3 + $0x60] sm:$0xff] %v635
  %700 = vst [vmem:[%s3 + $0x68] sm:$0xff] %v636
  %701 = vst [vmem:[%s3 + $0x70] sm:$0xff] %v637
  %702 = vst [vmem:[%s3 + $0x78] sm:$0xff] %v638
  %703 = vst [vmem:[%s3 + $0x80] sm:$0xff] %v639
  %704 = vst [vmem:[%s3 + $0x88] sm:$0xff] %v640
  %705 = vst [vmem:[%s3 + $0x90] sm:$0xff] %v641
  %706 = vst [vmem:[%s3 + $0x98] sm:$0xff] %v642
  %707 = vst [vmem:[%s3 + $0xa0] sm:$0xff] %v643
  %708 = vst [vmem:[%s3 + $0xa8] sm:$0xff] %v644
  %709 = vst [vmem:[%s3 + $0xb0] sm:$0xff] %v645
  %710 = vst [vmem:[%s3 + $0xb8] sm:$0xff] %v646
  %711 = vst [vmem:[%s3 + $0xc0] sm:$0xff] %v647
  %712 = vst [vmem:[%s3 + $0xc8] sm:$0xff] %v648
  %713 = vst [vmem:[%s3 + $0xd0] sm:$0xff] %v649
  %714 = vst [vmem:[%s3 + $0xd8] sm:$0xff] %v650
  %715 = vst [vmem:[%s3 + $0xe0] sm:$0xff] %v651
  %716 = vst [vmem:[%s3 + $0xe8] sm:$0xff] %v652
  %717 = vst [vmem:[%s3 + $0xf0] sm:$0xff] %v653
  %718 = vst [vmem:[%s3 + $0xf8] sm:$0xff] %v654
  // Predicated region
  $region14: #{qst_encoder_forward.2} parent=0 // pred_check
    _
  $region15: #{qst_encoder_forward.2} parent=0 // pred_check_branch
    %720 = sbr.rel (0) target = $region17
  $region16: #{qst_encoder_forward.2} parent=0 // pred_region
    _
  $region17: #{qst_encoder_forward.2} parent=0 // pred_fallthru
    _
  // Predicated region
  $region18: #{qst_encoder_forward.2} parent=0 // pred_check
    _
  $region19: #{qst_encoder_forward.2} parent=0 // pred_check_branch
    %722 = sbr.rel (0) target = $region21
  $region20: #{qst_encoder_forward.2} parent=0 // pred_region
    _
  $region21: #{qst_encoder_forward.2} parent=0 // pred_fallthru
    _

// kernel: qst_encoder_forward.3
$region0: #{qst_encoder_forward.3}
  #allocation0 [shape = 'u32[]', space=smem, size = 0x4, offset = 0x4, fixed_abs, tag = 'smem constant byte address 0x4 - core index']
  #allocation1 [shape = 'u32[144,128]{1,0:T(1,128)}', space=vmem, size = 0x12000, scoped, tag = 'internal scratch']
  #allocation2 [shape = 'bf16[8,16,128]{2,1,0:T(16,128)(2,1)}', space=vmem, size = 0x8000, scoped, tag = 'scratch operand']
  #allocation3 [shape = 'bf16[8,16,512]{2,1,0:T(16,128)(2,1)}', space=vmem, size = 0x20000, scoped, tag = 'scratch operand']
  #allocation4 [shape = 'f32[16,512]{1,0:T(8,128)}', space=vmem, size = 0x8000, scoped, tag = 'scratch operand']
  %s0 = inlined_call_operand.vmem [shape: bf16[8,16,512], index: 0, kind: input, shape index: {}]
  %s1 = inlined_call_operand.vmem [shape: bf16[1,128,512], index: 1, kind: input, shape index: {}]
  %s2 = inlined_call_operand.vmem [shape: bf16[2,128,512], index: 2, kind: input, shape index: {}]
  %s3 = inlined_call_operand.vmem [shape: f32[1,512], index: 3, kind: input, shape index: {}]
  %s4 = inlined_call_operand.hbm [shape: bf16[512,128], index: 4, kind: input, shape index: {}]
  %s5 = inlined_call_operand.vmem [shape: f32[1,128], index: 5, kind: input, shape index: {}]
  %s6 = inlined_call_operand.vmem [shape: f32[16,128], index: 6, kind: output, shape index: {}]
  %s7 = sld [smem:[#allocation0]]
  $region38: #{qst_encoder_forward.3} parent=0
    _
  %s9 = ssub.s32 1, %s7
  %s10 = scalar_select 0, %s9, %s7
  $region1: #{qst_encoder_forward.3} parent=0
    #allocation5 [shape = 'u8[131072]{0}', space=vmem, size = 0x20000, scoped, tag = 'input window, operand 4, single buffered']
    #allocation6 [shape = 's32[1]{0}', space=sflag, size = 0x4, scoped, tag = 'scoped memory for qst_encoder_forward.3']
    %11 = vsyncpa [#allocation6], 0
    // Predicated region
    $region2: #{qst_encoder_forward.3} parent=1 // pred_check
      _
    $region3: #{qst_encoder_forward.3} parent=1 // pred_check_branch
      %13 = sbr.rel (0) target = $region5
    $region4: #{qst_encoder_forward.3} parent=1 // pred_region
      _
    $region5: #{qst_encoder_forward.3} parent=1 // pred_fallthru
      _
    // Predicated region
    $region6: #{qst_encoder_forward.3} parent=1 // pred_check
      _
    $region7: #{qst_encoder_forward.3} parent=1 // pred_check_branch
      %15 = sbr.rel (0) target = $region9
    $region8: #{qst_encoder_forward.3} parent=1 // pred_region
      _
    $region9: #{qst_encoder_forward.3} parent=1 // pred_fallthru
      _
    // Predicated region
    $region10: #{qst_encoder_forward.3} parent=1 // pred_check
      _
    $region11: #{qst_encoder_forward.3} parent=1 // pred_check_branch
      %17 = sbr.rel (0) target = $region13
    $region12: #{qst_encoder_forward.3} parent=1 // pred_region
      _
    $region13: #{qst_encoder_forward.3} parent=1 // pred_fallthru
      _
    // Predicated region
    $region14: #{qst_encoder_forward.3} parent=1 // pred_check
      _
    $region15: #{qst_encoder_forward.3} parent=1 // pred_check_branch
      %19 = sbr.rel (0) target = $region17
    $region16: #{qst_encoder_forward.3} parent=1 // pred_region
      _
    $region17: #{qst_encoder_forward.3} parent=1 // pred_fallthru
      _
    // Predicated region
    $region18: #{qst_encoder_forward.3} parent=1 // pred_check
      _
    $region19: #{qst_encoder_forward.3} parent=1 // pred_check_branch
      %21 = sbr.rel (0) target = $region21
    $region20: #{qst_encoder_forward.3} parent=1 // pred_region
      %s23 = ssub.s32 4096, 4096
      %24 = vsyncadd [#allocation6], %s23
      %s25 = sshll.u32 [#allocation5], 4
      %s26 = int_to_ptr.vmem [resolvable:$true] %s25
      %31 = dma.hbm_to_vmem [thread:$0]  %s4, 4096, %s26, [#allocation6], 64, 64, 4
    $region21: #{qst_encoder_forward.3} parent=1 // pred_fallthru
      _
    // Predicated region
    $region22: #{qst_encoder_forward.3} parent=1 // pred_check
      _
    $region23: #{qst_encoder_forward.3} parent=1 // pred_check_branch
      %33 = sbr.rel (0) target = $region25
    $region24: #{qst_encoder_forward.3} parent=1 // pred_region
      _
    $region25: #{qst_encoder_forward.3} parent=1 // pred_fallthru
      _
    // Predicated region
    $region26: #{qst_encoder_forward.3} parent=1 // pred_check
      _
    $region27: #{qst_encoder_forward.3} parent=1 // pred_check_branch
      %35 = sbr.rel (0) target = $region29
    $region28: #{qst_encoder_forward.3} parent=1 // pred_region
      %36 = dma.done [#allocation6], 4096
    $region29: #{qst_encoder_forward.3} parent=1 // pred_fallthru
      _
    %v38 = vld [vmem:[%s2] sm:$0xff]
    %v39 = vld [vmem:[%s2 + $0x8] sm:$0xff]
    %v40 = vld [vmem:[%s2 + $0x10] sm:$0xff]
    %v41 = vld [vmem:[%s2 + $0x18] sm:$0xff]
    %v42 = vld [vmem:[%s2 + $0x20] sm:$0xff]
    %v43 = vld [vmem:[%s2 + $0x28] sm:$0xff]
    %v44 = vld [vmem:[%s2 + $0x30] sm:$0xff]
    %v45 = vld [vmem:[%s2 + $0x38] sm:$0xff]
    %v46 = vld [vmem:[%s2 + $0x40] sm:$0xff]
    %v47 = vld [vmem:[%s2 + $0x48] sm:$0xff]
    %v48 = vld [vmem:[%s2 + $0x50] sm:$0xff]
    %v49 = vld [vmem:[%s2 + $0x58] sm:$0xff]
    %v50 = vld [vmem:[%s2 + $0x60] sm:$0xff]
    %v51 = vld [vmem:[%s2 + $0x68] sm:$0xff]
    %v52 = vld [vmem:[%s2 + $0x70] sm:$0xff]
    %v53 = vld [vmem:[%s2 + $0x78] sm:$0xff]
    %v54 = vld [vmem:[%s2 + $0x80] sm:$0xff]
    %v55 = vld [vmem:[%s2 + $0x88] sm:$0xff]
    %v56 = vld [vmem:[%s2 + $0x90] sm:$0xff]
    %v57 = vld [vmem:[%s2 + $0x98] sm:$0xff]
    %v58 = vld [vmem:[%s2 + $0xa0] sm:$0xff]
    %v59 = vld [vmem:[%s2 + $0xa8] sm:$0xff]
    %v60 = vld [vmem:[%s2 + $0xb0] sm:$0xff]
    %v61 = vld [vmem:[%s2 + $0xb8] sm:$0xff]
    %v62 = vld [vmem:[%s2 + $0xc0] sm:$0xff]
    %v63 = vld [vmem:[%s2 + $0xc8] sm:$0xff]
    %v64 = vld [vmem:[%s2 + $0xd0] sm:$0xff]
    %v65 = vld [vmem:[%s2 + $0xd8] sm:$0xff]
    %v66 = vld [vmem:[%s2 + $0xe0] sm:$0xff]
    %v67 = vld [vmem:[%s2 + $0xe8] sm:$0xff]
    %v68 = vld [vmem:[%s2 + $0xf0] sm:$0xff]
    %v69 = vld [vmem:[%s2 + $0xf8] sm:$0xff]
    %v70 = vld [vmem:[%s0] sm:$0xff]
    %v71 = vld [vmem:[%s0 + $0x8] sm:$0xff]
    %v72 = vld [vmem:[%s0 + $0x10] sm:$0xff]
    %v73 = vld [vmem:[%s0 + $0x18] sm:$0xff]
    %v106 = vunpack.c.l.b16 %v38
    %v107 = vunpack.c.h.b16 %v38
    %v108 = vunpack.c.l.b16 %v39
    %v109 = vunpack.c.h.b16 %v39
    %v110 = vunpack.c.l.b16 %v40
    %v111 = vunpack.c.h.b16 %v40
    %v112 = vunpack.c.l.b16 %v41
    %v113 = vunpack.c.h.b16 %v41
    %v114 = vunpack.c.l.b16 %v42
    %v115 = vunpack.c.h.b16 %v42
    %v116 = vunpack.c.l.b16 %v43
    %v117 = vunpack.c.h.b16 %v43
    %v118 = vunpack.c.l.b16 %v44
    %v119 = vunpack.c.h.b16 %v44
    %v120 = vunpack.c.l.b16 %v45
    %v121 = vunpack.c.h.b16 %v45
    %v122 = vunpack.c.l.b16 %v46
    %v123 = vunpack.c.h.b16 %v46
    %v124 = vunpack.c.l.b16 %v47
    %v125 = vunpack.c.h.b16 %v47
    %v126 = vunpack.c.l.b16 %v48
    %v127 = vunpack.c.h.b16 %v48
    %v128 = vunpack.c.l.b16 %v49
    %v129 = vunpack.c.h.b16 %v49
    %v130 = vunpack.c.l.b16 %v50
    %v131 = vunpack.c.h.b16 %v50
    %v132 = vunpack.c.l.b16 %v51
    %v133 = vunpack.c.h.b16 %v51
    %v134 = vunpack.c.l.b16 %v52
    %v135 = vunpack.c.h.b16 %v52
    %v136 = vunpack.c.l.b16 %v53
    %v137 = vunpack.c.h.b16 %v53
    %v138 = vunpack.c.l.b16 %v54
    %v139 = vunpack.c.h.b16 %v54
    %v140 = vunpack.c.l.b16 %v55
    %v141 = vunpack.c.h.b16 %v55
    %v142 = vunpack.c.l.b16 %v56
    %v143 = vunpack.c.h.b16 %v56
    %v144 = vunpack.c.l.b16 %v57
    %v145 = vunpack.c.h.b16 %v57
    %v146 = vunpack.c.l.b16 %v58
    %v147 = vunpack.c.h.b16 %v58
    %v148 = vunpack.c.l.b16 %v59
    %v149 = vunpack.c.h.b16 %v59
    %v150 = vunpack.c.l.b16 %v60
    %v151 = vunpack.c.h.b16 %v60
    %v152 = vunpack.c.l.b16 %v61
    %v153 = vunpack.c.h.b16 %v61
    %v154 = vunpack.c.l.b16 %v62
    %v155 = vunpack.c.h.b16 %v62
    %v156 = vunpack.c.l.b16 %v63
    %v157 = vunpack.c.h.b16 %v63
    %v158 = vunpack.c.l.b16 %v64
    %v159 = vunpack.c.h.b16 %v64
    %v160 = vunpack.c.l.b16 %v65
    %v161 = vunpack.c.h.b16 %v65
    %v162 = vunpack.c.l.b16 %v66
    %v163 = vunpack.c.h.b16 %v66
    %v164 = vunpack.c.l.b16 %v67
    %v165 = vunpack.c.h.b16 %v67
    %v166 = vunpack.c.l.b16 %v68
    %v167 = vunpack.c.h.b16 %v68
    %v168 = vunpack.c.l.b16 %v69
    %v169 = vunpack.c.h.b16 %v69
    %v170 = vpack.c.b16 %v110, %v106
    %v171 = vpack.c.b16 %v111, %v107
    %v172 = vpack.c.b16 %v112, %v108
    %v173 = vpack.c.b16 %v113, %v109
    %v174 = vpack.c.b16 %v118, %v114
    %v175 = vpack.c.b16 %v119, %v115
    %v176 = vpack.c.b16 %v120, %v116
    %v177 = vpack.c.b16 %v121, %v117
    %v178 = vpack.c.b16 %v126, %v122
    %v179 = vpack.c.b16 %v127, %v123
    %v180 = vpack.c.b16 %v128, %v124
    %v181 = vpack.c.b16 %v129, %v125
    %v182 = vpack.c.b16 %v134, %v130
    %v183 = vpack.c.b16 %v135, %v131
    %v184 = vpack.c.b16 %v136, %v132
    %v185 = vpack.c.b16 %v137, %v133
    %v186 = vpack.c.b16 %v142, %v138
    %v187 = vpack.c.b16 %v143, %v139
    %v188 = vpack.c.b16 %v144, %v140
    %v189 = vpack.c.b16 %v145, %v141
    %v190 = vpack.c.b16 %v150, %v146
    %v191 = vpack.c.b16 %v151, %v147
    %v192 = vpack.c.b16 %v152, %v148
    %v193 = vpack.c.b16 %v153, %v149
    %v194 = vpack.c.b16 %v158, %v154
    %v195 = vpack.c.b16 %v159, %v155
    %v196 = vpack.c.b16 %v160, %v156
    %v197 = vpack.c.b16 %v161, %v157
    %v198 = vpack.c.b16 %v166, %v162
    %v199 = vpack.c.b16 %v167, %v163
    %v200 = vpack.c.b16 %v168, %v164
    %v201 = vpack.c.b16 %v169, %v165
    %234 = vmatprep.subr.bf16.mxu0 %v171
    %235 = vmatpush1.bf16.msra.mxu0 %v170
    %236 = vmatprep.subr.bf16.mxu0 %v175
    %237 = vmatpush1.bf16.msra.mxu0 %v174
    %238 = vmatprep.subr.bf16.mxu0 %v179
    %239 = vmatpush1.bf16.msra.mxu0 %v178
    %240 = vmatprep.subr.bf16.mxu0 %v183
    %241 = vmatpush1.bf16.msra.mxu0 %v182
    %242 = vmatprep.subr.bf16.mxu0 %v187
    %243 = vmatpush1.bf16.msra.mxu0 %v186
    %244 = vmatprep.subr.bf16.mxu0 %v191
    %245 = vmatpush1.bf16.msra.mxu0 %v190
    %246 = vmatprep.subr.bf16.mxu0 %v195
    %247 = vmatpush1.bf16.msra.mxu0 %v194
    %248 = vmatprep.subr.bf16.mxu0 %v199
    %249 = vmatpush1.bf16.msra.mxu0 %v198
    %250 = vmatprep.subr.bf16.mxu0 0
    %251 = vmatpush1.bf16.msra.mxu0 0
    %252 = vmatprep.subr.bf16.mxu0 0
    %253 = vmatpush1.bf16.msra.mxu0 0
    %254 = vmatprep.subr.bf16.mxu0 0
    %255 = vmatpush1.bf16.msra.mxu0 0
    %256 = vmatprep.subr.bf16.mxu0 0
    %257 = vmatpush1.bf16.msra.mxu0 0
    %258 = vmatprep.subr.bf16.mxu0 0
    %259 = vmatpush1.bf16.msra.mxu0 0
    %260 = vmatprep.subr.bf16.mxu0 0
    %261 = vmatpush1.bf16.msra.mxu0 0
    %262 = vmatprep.subr.bf16.mxu0 0
    %263 = vmatpush1.bf16.msra.mxu0 0
    %264 = vmatprep.subr.bf16.mxu0 0
    %265 = vmatpush1.bf16.msra.mxu0 0
    %266 = vmatprep.mubr.bf16.mxu0 0
    %267 = vmatmul.mubr.bf16.gmra.mrb[0].mxu0 0
    %v268 = vpop.f32.mrb[0].mxu0
    %v269 = vadd.f32 0.0, %v268
    %v270 = vpop.f32.mrb[0].mxu0
    %v271 = vadd.f32 0.0, %v270
    %v272 = vpop.f32.mrb[0].mxu0
    %v273 = vadd.f32 0.0, %v272
    %v274 = vpop.f32.mrb[0].mxu0
    %v275 = vadd.f32 0.0, %v274
    %276 = vdwg.mxu0
    %277 = vmatprep.subr.bf16.mxu0 %v173
    %278 = vmatpush1.bf16.msra.mxu0 %v172
    %279 = vmatprep.subr.bf16.mxu0 %v177
    %280 = vmatpush1.bf16.msra.mxu0 %v176
    %281 = vmatprep.subr.bf16.mxu0 %v181
    %282 = vmatpush1.bf16.msra.mxu0 %v180
    %283 = vmatprep.subr.bf16.mxu0 %v185
    %284 = vmatpush1.bf16.msra.mxu0 %v184
    %285 = vmatprep.subr.bf16.mxu0 %v189
    %286 = vmatpush1.bf16.msra.mxu0 %v188
    %287 = vmatprep.subr.bf16.mxu0 %v193
    %288 = vmatpush1.bf16.msra.mxu0 %v192
    %289 = vmatprep.subr.bf16.mxu0 %v197
    %290 = vmatpush1.bf16.msra.mxu0 %v196
    %291 = vmatprep.subr.bf16.mxu0 %v201
    %292 = vmatpush1.bf16.msra.mxu0 %v200
    %293 = vmatprep.subr.bf16.mxu0 0
    %294 = vmatpush1.bf16.msra.mxu0 0
    %295 = vmatprep.subr.bf16.mxu0 0
    %296 = vmatpush1.bf16.msra.mxu0 0
    %297 = vmatprep.subr.bf16.mxu0 0
    %298 = vmatpush1.bf16.msra.mxu0 0
    %299 = vmatprep.subr.bf16.mxu0 0
    %300 = vmatpush1.bf16.msra.mxu0 0
    %301 = vmatprep.subr.bf16.mxu0 0
    %302 = vmatpush1.bf16.msra.mxu0 0
    %303 = vmatprep.subr.bf16.mxu0 0
    %304 = vmatpush1.bf16.msra.mxu0 0
    %305 = vmatprep.subr.bf16.mxu0 0
    %306 = vmatpush1.bf16.msra.mxu0 0
    %307 = vmatprep.subr.bf16.mxu0 0
    %308 = vmatpush1.bf16.msra.mxu0 0
    %309 = vmatprep.mubr.bf16.mxu0 0
    %310 = vmatmul.mubr.bf16.gmra.mrb[0].mxu0 0
    %v311 = vpop.f32.mrb[0].mxu0
    %v312 = vadd.f32 0.0, %v311
    %v313 = vpop.f32.mrb[0].mxu0
    %v314 = vadd.f32 0.0, %v313
    %v315 = vpop.f32.mrb[0].mxu0
    %v316 = vadd.f32 0.0, %v315
    %v317 = vpop.f32.mrb[0].mxu0
    %v318 = vadd.f32 0.0, %v317
    %319 = vdwg.mxu0
    %v320 = vunpack.c.l.bf16 %v70
    %v321 = vunpack.c.h.bf16 %v70
    %v322 = vunpack.c.l.bf16 %v71
    %v323 = vunpack.c.h.bf16 %v71
    %v324 = vunpack.c.l.bf16 %v72
    %v325 = vunpack.c.h.bf16 %v72
    %v326 = vunpack.c.l.bf16 %v73
    %v327 = vunpack.c.h.bf16 %v73
    %v328 = vadd.f32 %v320, %v269
    %v329 = vadd.f32 %v321, %v271
    %v330 = vadd.f32 %v322, %v312
    %v331 = vadd.f32 %v323, %v314
    %v332 = vadd.f32 %v324, %v273
    %v333 = vadd.f32 %v325, %v275
    %v334 = vadd.f32 %v326, %v316
    %v335 = vadd.f32 %v327, %v318
    %v336 = vxor.u32 %v328, 2147483648
    %v337 = vxor.u32 %v332, 2147483648
    %v338 = vmul.f32 %v336, 1.442695
    %v339 = vpow.pop %v338
    %v340 = vmul.f32 %v337, 1.442695
    %v341 = vpow.pop %v340
    %v342 = vadd.f32 %v339, 1.0
    %v343 = vadd.f32 %v341, 1.0
    %v344 = vrcp.pop %v342
    %v345 = vmul.f32 1.0, %v344
    %v346 = vrcp.pop %v343
    %v347 = vmul.f32 1.0, %v346
    %v348 = vxor.u32 %v329, 2147483648
    %v349 = vxor.u32 %v333, 2147483648
    %v350 = vmul.f32 %v348, 1.442695
    %v351 = vpow.pop %v350
    %v352 = vmul.f32 %v349, 1.442695
    %v353 = vpow.pop %v352
    %v354 = vadd.f32 %v351, 1.0
    %v355 = vadd.f32 %v353, 1.0
    %v356 = vrcp.pop %v354
    %v357 = vmul.f32 1.0, %v356
    %v358 = vrcp.pop %v355
    %v359 = vmul.f32 1.0, %v358
    %v360 = vtanh.pop %v330
    %v361 = vtanh.pop %v334
    %v362 = vxor.u32 %v331, 2147483648
    %v363 = vxor.u32 %v335, 2147483648
    %v364 = vmul.f32 %v362, 1.442695
    %v365 = vpow.pop %v364
    %v366 = vmul.f32 %v363, 1.442695
    %v367 = vpow.pop %v366
    %v368 = vadd.f32 %v365, 1.0
    %v369 = vadd.f32 %v367, 1.0
    %v370 = vrcp.pop %v368
    %v371 = vmul.f32 1.0, %v370
    %v372 = vrcp.pop %v369
    %v373 = vmul.f32 1.0, %v372
    %v374 = vmul.f32 %v357, 0.0
    %v375 = vmul.f32 %v359, 0.0
    %v376 = vmul.f32 %v345, %v360
    %v377 = vmul.f32 %v347, %v361
    %v378 = vadd.f32 %v374, %v376
    %v379 = vadd.f32 %v375, %v377
    %v380 = vtanh.pop %v378
    %v381 = vtanh.pop %v379
    %v382 = vmul.f32 %v371, %v380
    %v383 = vmul.f32 %v373, %v381
    %v384 = vpack.c.bf16 %v383, %v382
    %385 = vst [vmem:[#allocation2] sm:$0xff] %v384
    %s386 = scalar_lea.vmem %s0, 32
    %v387 = vld [vmem:[%s386] sm:$0xff]
    %v388 = vld [vmem:[%s386 + $0x8] sm:$0xff]
    %v389 = vld [vmem:[%s386 + $0x10] sm:$0xff]
    %v390 = vld [vmem:[%s386 + $0x18] sm:$0xff]
    %391 = vmatprep.subr.bf16.mxu0 %v171
    %392 = vmatpush1.bf16.msra.mxu0 %v170
    %393 = vmatprep.subr.bf16.mxu0 %v175
    %394 = vmatpush1.bf16.msra.mxu0 %v174
    %395 = vmatprep.subr.bf16.mxu0 %v179
    %396 = vmatpush1.bf16.msra.mxu0 %v178
    %397 = vmatprep.subr.bf16.mxu0 %v183
    %398 = vmatpush1.bf16.msra.mxu0 %v182
    %399 = vmatprep.subr.bf16.mxu0 %v187
    %400 = vmatpush1.bf16.msra.mxu0 %v186
    %401 = vmatprep.subr.bf16.mxu0 %v191
    %402 = vmatpush1.bf16.msra.mxu0 %v190
    %403 = vmatprep.subr.bf16.mxu0 %v195
    %404 = vmatpush1.bf16.msra.mxu0 %v194
    %405 = vmatprep.subr.bf16.mxu0 %v199
    %406 = vmatpush1.bf16.msra.mxu0 %v198
    %407 = vmatprep.subr.bf16.mxu0 0
    %408 = vmatpush1.bf16.msra.mxu0 0
    %409 = vmatprep.subr.bf16.mxu0 0
    %410 = vmatpush1.bf16.msra.mxu0 0
    %411 = vmatprep.subr.bf16.mxu0 0
    %412 = vmatpush1.bf16.msra.mxu0 0
    %413 = vmatprep.subr.bf16.mxu0 0
    %414 = vmatpush1.bf16.msra.mxu0 0
    %415 = vmatprep.subr.bf16.mxu0 0
    %416 = vmatpush1.bf16.msra.mxu0 0
    %417 = vmatprep.subr.bf16.mxu0 0
    %418 = vmatpush1.bf16.msra.mxu0 0
    %419 = vmatprep.subr.bf16.mxu0 0
    %420 = vmatpush1.bf16.msra.mxu0 0
    %421 = vmatprep.subr.bf16.mxu0 0
    %422 = vmatpush1.bf16.msra.mxu0 0
    %423 = vmatprep.mubr.bf16.mxu0 0
    %424 = vmatmul.mubr.bf16.gmra.mrb[0].mxu0 %v384
    %v425 = vpop.f32.mrb[0].mxu0
    %v426 = vadd.f32 0.0, %v425
    %v427 = vpop.f32.mrb[0].mxu0
    %v428 = vadd.f32 0.0, %v427
    %v429 = vpop.f32.mrb[0].mxu0
    %v430 = vadd.f32 0.0, %v429
    %v431 = vpop.f32.mrb[0].mxu0
    %v432 = vadd.f32 0.0, %v431
    %433 = vdwg.mxu0
    %434 = vmatprep.subr.bf16.mxu0 %v173
    %435 = vmatpush1.bf16.msra.mxu0 %v172
    %436 = vmatprep.subr.bf16.mxu0 %v177
    %437 = vmatpush1.bf16.msra.mxu0 %v176
    %438 = vmatprep.subr.bf16.mxu0 %v181
    %439 = vmatpush1.bf16.msra.mxu0 %v180
    %440 = vmatprep.subr.bf16.mxu0 %v185
    %441 = vmatpush1.bf16.msra.mxu0 %v184
    %442 = vmatprep.subr.bf16.mxu0 %v189
    %443 = vmatpush1.bf16.msra.mxu0 %v188
    %444 = vmatprep.subr.bf16.mxu0 %v193
    %445 = vmatpush1.bf16.msra.mxu0 %v192
    %446 = vmatprep.subr.bf16.mxu0 %v197
    %447 = vmatpush1.bf16.msra.mxu0 %v196
    %448 = vmatprep.subr.bf16.mxu0 %v201
    %449 = vmatpush1.bf16.msra.mxu0 %v200
    %450 = vmatprep.subr.bf16.mxu0 0
    %451 = vmatpush1.bf16.msra.mxu0 0
    %452 = vmatprep.subr.bf16.mxu0 0
    %453 = vmatpush1.bf16.msra.mxu0 0
    %454 = vmatprep.subr.bf16.mxu0 0
    %455 = vmatpush1.bf16.msra.mxu0 0
    %456 = vmatprep.subr.bf16.mxu0 0
    %457 = vmatpush1.bf16.msra.mxu0 0
    %458 = vmatprep.subr.bf16.mxu0 0
    %459 = vmatpush1.bf16.msra.mxu0 0
    %460 = vmatprep.subr.bf16.mxu0 0
    %461 = vmatpush1.bf16.msra.mxu0 0
    %462 = vmatprep.subr.bf16.mxu0 0
    %463 = vmatpush1.bf16.msra.mxu0 0
    %464 = vmatprep.subr.bf16.mxu0 0
    %465 = vmatpush1.bf16.msra.mxu0 0
    %466 = vmatprep.mubr.bf16.mxu0 0
    %467 = vmatmul.mubr.bf16.gmra.mrb[0].mxu0 %v384
    %v468 = vpop.f32.mrb[0].mxu0
    %v469 = vadd.f32 0.0, %v468
    %v470 = vpop.f32.mrb[0].mxu0
    %v471 = vadd.f32 0.0, %v470
    %v472 = vpop.f32.mrb[0].mxu0
    %v473 = vadd.f32 0.0, %v472
    %v474 = vpop.f32.mrb[0].mxu0
    %v475 = vadd.f32 0.0, %v474
    %476 = vdwg.mxu0
    %v477 = vunpack.c.l.bf16 %v387
    %v478 = vunpack.c.h.bf16 %v387
    %v479 = vunpack.c.l.bf16 %v388
    %v480 = vunpack.c.h.bf16 %v388
    %v481 = vunpack.c.l.bf16 %v389
    %v482 = vunpack.c.h.bf16 %v389
    %v483 = vunpack.c.l.bf16 %v390
    %v484 = vunpack.c.h.bf16 %v390
    %v485 = vadd.f32 %v477, %v426
    %v486 = vadd.f32 %v478, %v428
    %v487 = vadd.f32 %v479, %v469
    %v488 = vadd.f32 %v480, %v471
    %v489 = vadd.f32 %v481, %v430
    %v490 = vadd.f32 %v482, %v432
    %v491 = vadd.f32 %v483, %v473
    %v492 = vadd.f32 %v484, %v475
    %v493 = vxor.u32 %v485, 2147483648
    %v494 = vxor.u32 %v489, 2147483648
    %v495 = vmul.f32 %v493, 1.442695
    %v496 = vpow.pop %v495
    %v497 = vmul.f32 %v494, 1.442695
    %v498 = vpow.pop %v497
    %v499 = vadd.f32 %v496, 1.0
    %v500 = vadd.f32 %v498, 1.0
    %v501 = vrcp.pop %v499
    %v502 = vmul.f32 1.0, %v501
    %v503 = vrcp.pop %v500
    %v504 = vmul.f32 1.0, %v503
    %v505 = vxor.u32 %v486, 2147483648
    %v506 = vxor.u32 %v490, 2147483648
    %v507 = vmul.f32 %v505, 1.442695
    %v508 = vpow.pop %v507
    %v509 = vmul.f32 %v506, 1.442695
    %v510 = vpow.pop %v509
    %v511 = vadd.f32 %v508, 1.0
    %v512 = vadd.f32 %v510, 1.0
    %v513 = vrcp.pop %v511
    %v514 = vmul.f32 1.0, %v513
    %v515 = vrcp.pop %v512
    %v516 = vmul.f32 1.0, %v515
    %v517 = vtanh.pop %v487
    %v518 = vtanh.pop %v491
    %v519 = vxor.u32 %v488, 2147483648
    %v520 = vxor.u32 %v492, 2147483648
    %v521 = vmul.f32 %v519, 1.442695
    %v522 = vpow.pop %v521
    %v523 = vmul.f32 %v520, 1.442695
    %v524 = vpow.pop %v523
    %v525 = vadd.f32 %v522, 1.0
    %v526 = vadd.f32 %v524, 1.0
    %v527 = vrcp.pop %v525
    %v528 = vmul.f32 1.0, %v527
    %v529 = vrcp.pop %v526
    %v530 = vmul.f32 1.0, %v529
    %v531 = vmul.f32 %v514, %v378
    %v532 = vmul.f32 %v516, %v379
    %v533 = vmul.f32 %v502, %v517
    %v534 = vmul.f32 %v504, %v518
    %v535 = vadd.f32 %v531, %v533
    %v536 = vadd.f32 %v532, %v534
    %v537 = vtanh.pop %v535
    %v538 = vtanh.pop %v536
    %v539 = vmul.f32 %v528, %v537
    %v540 = vmul.f32 %v530, %v538
    %v541 = vpack.c.bf16 %v540, %v539
    %s542 = scalar_lea.vmem [#allocation2], 8
    %543 = vst [vmem:[%s542] sm:$0xff] %v541
    %s544 = scalar_lea.vmem %s0, 64
    %v545 = vld [vmem:[%s544] sm:$0xff]
    %v546 = vld [vmem:[%s544 + $0x8] sm:$0xff]
    %v547 = vld [vmem:[%s544 + $0x10] sm:$0xff]
    %v548 = vld [vmem:[%s544 + $0x18] sm:$0xff]
    %549 = vmatprep.subr.bf16.mxu0 %v171
    %550 = vmatpush1.bf16.msra.mxu0 %v170
    %551 = vmatprep.subr.bf16.mxu0 %v175
    %552 = vmatpush1.bf16.msra.mxu0 %v174
    %553 = vmatprep.subr.bf16.mxu0 %v179
    %554 = vmatpush1.bf16.msra.mxu0 %v178
    %555 = vmatprep.subr.bf16.mxu0 %v183
    %556 = vmatpush1.bf16.msra.mxu0 %v182
    %557 = vmatprep.subr.bf16.mxu0 %v187
    %558 = vmatpush1.bf16.msra.mxu0 %v186
    %559 = vmatprep.subr.bf16.mxu0 %v191
    %560 = vmatpush1.bf16.msra.mxu0 %v190
    %561 = vmatprep.subr.bf16.mxu0 %v195
    %562 = vmatpush1.bf16.msra.mxu0 %v194
    %563 = vmatprep.subr.bf16.mxu0 %v199
    %564 = vmatpush1.bf16.msra.mxu0 %v198
    %565 = vmatprep.subr.bf16.mxu0 0
    %566 = vmatpush1.bf16.msra.mxu0 0
    %567 = vmatprep.subr.bf16.mxu0 0
    %568 = vmatpush1.bf16.msra.mxu0 0
    %569 = vmatprep.subr.bf16.mxu0 0
    %570 = vmatpush1.bf16.msra.mxu0 0
    %571 = vmatprep.subr.bf16.mxu0 0
    %572 = vmatpush1.bf16.msra.mxu0 0
    %573 = vmatprep.subr.bf16.mxu0 0
    %574 = vmatpush1.bf16.msra.mxu0 0
    %575 = vmatprep.subr.bf16.mxu0 0
    %576 = vmatpush1.bf16.msra.mxu0 0
    %577 = vmatprep.subr.bf16.mxu0 0
    %578 = vmatpush1.bf16.msra.mxu0 0
    %579 = vmatprep.subr.bf16.mxu0 0
    %580 = vmatpush1.bf16.msra.mxu0 0
    %581 = vmatprep.mubr.bf16.mxu0 0
    %582 = vmatmul.mubr.bf16.gmra.mrb[0].mxu0 %v541
    %v583 = vpop.f32.mrb[0].mxu0
    %v584 = vadd.f32 0.0, %v583
    %v585 = vpop.f32.mrb[0].mxu0
    %v586 = vadd.f32 0.0, %v585
    %v587 = vpop.f32.mrb[0].mxu0
    %v588 = vadd.f32 0.0, %v587
    %v589 = vpop.f32.mrb[0].mxu0
    %v590 = vadd.f32 0.0, %v589
    %591 = vdwg.mxu0
    %592 = vmatprep.subr.bf16.mxu0 %v173
    %593 = vmatpush1.bf16.msra.mxu0 %v172
    %594 = vmatprep.subr.bf16.mxu0 %v177
    %595 = vmatpush1.bf16.msra.mxu0 %v176
    %596 = vmatprep.subr.bf16.mxu0 %v181
    %597 = vmatpush1.bf16.msra.mxu0 %v180
    %598 = vmatprep.subr.bf16.mxu0 %v185
    %599 = vmatpush1.bf16.msra.mxu0 %v184
    %600 = vmatprep.subr.bf16.mxu0 %v189
    %601 = vmatpush1.bf16.msra.mxu0 %v188
    %602 = vmatprep.subr.bf16.mxu0 %v193
    %603 = vmatpush1.bf16.msra.mxu0 %v192
    %604 = vmatprep.subr.bf16.mxu0 %v197
    %605 = vmatpush1.bf16.msra.mxu0 %v196
    %606 = vmatprep.subr.bf16.mxu0 %v201
    %607 = vmatpush1.bf16.msra.mxu0 %v200
    %608 = vmatprep.subr.bf16.mxu0 0
    %609 = vmatpush1.bf16.msra.mxu0 0
    %610 = vmatprep.subr.bf16.mxu0 0
    %611 = vmatpush1.bf16.msra.mxu0 0
    %612 = vmatprep.subr.bf16.mxu0 0
    %613 = vmatpush1.bf16.msra.mxu0 0
    %614 = vmatprep.subr.bf16.mxu0 0
    %615 = vmatpush1.bf16.msra.mxu0 0
    %616 = vmatprep.subr.bf16.mxu0 0
    %617 = vmatpush1.bf16.msra.mxu0 0
    %618 = vmatprep.subr.bf16.mxu0 0
    %619 = vmatpush1.bf16.msra.mxu0 0
    %620 = vmatprep.subr.bf16.mxu0 0
    %621 = vmatpush1.bf16.msra.mxu0 0
    %622 = vmatprep.subr.bf16.mxu0 0
    %623 = vmatpush1.bf16.msra.mxu0 0
    %624 = vmatprep.mubr.bf16.mxu0 0
    %625 = vmatmul.mubr.bf16.gmra.mrb[0].mxu0 %v541
    %v626 = vpop.f32.mrb[0].mxu0
    %v627 = vadd.f32 0.0, %v626
    %v628 = vpop.f32.mrb[0].mxu0
    %v629 = vadd.f32 0.0, %v628
    %v630 = vpop.f32.mrb[0].mxu0
    %v631 = vadd.f32 0.0, %v630
    %v632 = vpop.f32.mrb[0].mxu0
    %v633 = vadd.f32 0.0, %v632
    %634 = vdwg.mxu0
    %v635 = vunpack.c.l.bf16 %v545
    %v636 = vunpack.c.h.bf16 %v545
    %v637 = vunpack.c.l.bf16 %v546
    %v638 = vunpack.c.h.bf16 %v546
    %v639 = vunpack.c.l.bf16 %v547
    %v640 = vunpack.c.h.bf16 %v547
    %v641 = vunpack.c.l.bf16 %v548
    %v642 = vunpack.c.h.bf16 %v548
    %v643 = vadd.f32 %v635, %v584
    %v644 = vadd.f32 %v636, %v586
    %v645 = vadd.f32 %v637, %v627
    %v646 = vadd.f32 %v638, %v629
    %v647 = vadd.f32 %v639, %v588
    %v648 = vadd.f32 %v640, %v590
    %v649 = vadd.f32 %v641, %v631
    %v650 = vadd.f32 %v642, %v633
    %v651 = vxor.u32 %v643, 2147483648
    %v652 = vxor.u32 %v647, 2147483648
    %v653 = vmul.f32 %v651, 1.442695
    %v654 = vpow.pop %v653
    %v655 = vmul.f32 %v652, 1.442695
    %v656 = vpow.pop %v655
    %v657 = vadd.f32 %v654, 1.0
    %v658 = vadd.f32 %v656, 1.0
    %v659 = vrcp.pop %v657
    %v660 = vmul.f32 1.0, %v659
    %v661 = vrcp.pop %v658
    %v662 = vmul.f32 1.0, %v661
    %v663 = vxor.u32 %v644, 2147483648
    %v664 = vxor.u32 %v648, 2147483648
    %v665 = vmul.f32 %v663, 1.442695
    %v666 = vpow.pop %v665
    %v667 = vmul.f32 %v664, 1.442695
    %v668 = vpow.pop %v667
    %v669 = vadd.f32 %v666, 1.0
    %v670 = vadd.f32 %v668, 1.0
    %v671 = vrcp.pop %v669
    %v672 = vmul.f32 1.0, %v671
    %v673 = vrcp.pop %v670
    %v674 = vmul.f32 1.0, %v673
    %v675 = vtanh.pop %v645
    %v676 = vtanh.pop %v649
    %v677 = vxor.u32 %v646, 2147483648
    %v678 = vxor.u32 %v650, 2147483648
    %v679 = vmul.f32 %v677, 1.442695
    %v680 = vpow.pop %v679
    %v681 = vmul.f32 %v678, 1.442695
    %v682 = vpow.pop %v681
    %v683 = vadd.f32 %v680, 1.0
    %v684 = vadd.f32 %v682, 1.0
    %v685 = vrcp.pop %v683
    %v686 = vmul.f32 1.0, %v685
    %v687 = vrcp.pop %v684
    %v688 = vmul.f32 1.0, %v687
    %v689 = vmul.f32 %v672, %v535
    %v690 = vmul.f32 %v674, %v536
    %v691 = vmul.f32 %v660, %v675
    %v692 = vmul.f32 %v662, %v676
    %v693 = vadd.f32 %v689, %v691
    %v694 = vadd.f32 %v690, %v692
    %v695 = vtanh.pop %v693
    %v696 = vtanh.pop %v694
    %v697 = vmul.f32 %v686, %v695
    %v698 = vmul.f32 %v688, %v696
    %v699 = vpack.c.bf16 %v698, %v697
    %s700 = scalar_lea.vmem [#allocation2], 16
    %701 = vst [vmem:[%s700] sm:$0xff] %v699
    %s702 = scalar_lea.vmem %s0, 96
    %v703 = vld [vmem:[%s702] sm:$0xff]
    %v704 = vld [vmem:[%s702 + $0x8] sm:$0xff]
    %v705 = vld [vmem:[%s702 + $0x10] sm:$0xff]
    %v706 = vld [vmem:[%s702 + $0x18] sm:$0xff]
    %707 = vmatprep.subr.bf16.mxu0 %v171
    %708 = vmatpush1.bf16.msra.mxu0 %v170
    %709 = vmatprep.subr.bf16.mxu0 %v175
    %710 = vmatpush1.bf16.msra.mxu0 %v174
    %711 = vmatprep.subr.bf16.mxu0 %v179
    %712 = vmatpush1.bf16.msra.mxu0 %v178
    %713 = vmatprep.subr.bf16.mxu0 %v183
    %714 = vmatpush1.bf16.msra.mxu0 %v182
    %715 = vmatprep.subr.bf16.mxu0 %v187
    %716 = vmatpush1.bf16.msra.mxu0 %v186
    %717 = vmatprep.subr.bf16.mxu0 %v191
    %718 = vmatpush1.bf16.msra.mxu0 %v190
    %719 = vmatprep.subr.bf16.mxu0 %v195
    %720 = vmatpush1.bf16.msra.mxu0 %v194
    %721 = vmatprep.subr.bf16.mxu0 %v199
    %722 = vmatpush1.bf16.msra.mxu0 %v198
    %723 = vmatprep.subr.bf16.mxu0 0
    %724 = vmatpush1.bf16.msra.mxu0 0
    %725 = vmatprep.subr.bf16.mxu0 0
    %726 = vmatpush1.bf16.msra.mxu0 0
    %727 = vmatprep.subr.bf16.mxu0 0
    %728 = vmatpush1.bf16.msra.mxu0 0
    %729 = vmatprep.subr.bf16.mxu0 0
    %730 = vmatpush1.bf16.msra.mxu0 0
    %731 = vmatprep.subr.bf16.mxu0 0
    %732 = vmatpush1.bf16.msra.mxu0 0
    %733 = vmatprep.subr.bf16.mxu0 0
    %734 = vmatpush1.bf16.msra.mxu0 0
    %735 = vmatprep.subr.bf16.mxu0 0
    %736 = vmatpush1.bf16.msra.mxu0 0
    %737 = vmatprep.subr.bf16.mxu0 0
    %738 = vmatpush1.bf16.msra.mxu0 0
    %739 = vmatprep.mubr.bf16.mxu0 0
    %740 = vmatmul.mubr.bf16.gmra.mrb[0].mxu0 %v699
    %v741 = vpop.f32.mrb[0].mxu0
    %v742 = vadd.f32 0.0, %v741
    %v743 = vpop.f32.mrb[0].mxu0
    %v744 = vadd.f32 0.0, %v743
    %v745 = vpop.f32.mrb[0].mxu0
    %v746 = vadd.f32 0.0, %v745
    %v747 = vpop.f32.mrb[0].mxu0
    %v748 = vadd.f32 0.0, %v747
    %749 = vdwg.mxu0
    %750 = vmatprep.subr.bf16.mxu0 %v173
    %751 = vmatpush1.bf16.msra.mxu0 %v172
    %752 = vmatprep.subr.bf16.mxu0 %v177
    %753 = vmatpush1.bf16.msra.mxu0 %v176
    %754 = vmatprep.subr.bf16.mxu0 %v181
    %755 = vmatpush1.bf16.msra.mxu0 %v180
    %756 = vmatprep.subr.bf16.mxu0 %v185
    %757 = vmatpush1.bf16.msra.mxu0 %v184
    %758 = vmatprep.subr.bf16.mxu0 %v189
    %759 = vmatpush1.bf16.msra.mxu0 %v188
    %760 = vmatprep.subr.bf16.mxu0 %v193
    %761 = vmatpush1.bf16.msra.mxu0 %v192
    %762 = vmatprep.subr.bf16.mxu0 %v197
    %763 = vmatpush1.bf16.msra.mxu0 %v196
    %764 = vmatprep.subr.bf16.mxu0 %v201
    %765 = vmatpush1.bf16.msra.mxu0 %v200
    %766 = vmatprep.subr.bf16.mxu0 0
    %767 = vmatpush1.bf16.msra.mxu0 0
    %768 = vmatprep.subr.bf16.mxu0 0
    %769 = vmatpush1.bf16.msra.mxu0 0
    %770 = vmatprep.subr.bf16.mxu0 0
    %771 = vmatpush1.bf16.msra.mxu0 0
    %772 = vmatprep.subr.bf16.mxu0 0
    %773 = vmatpush1.bf16.msra.mxu0 0
    %774 = vmatprep.subr.bf16.mxu0 0
    %775 = vmatpush1.bf16.msra.mxu0 0
    %776 = vmatprep.subr.bf16.mxu0 0
    %777 = vmatpush1.bf16.msra.mxu0 0
    %778 = vmatprep.subr.bf16.mxu0 0
    %779 = vmatpush1.bf16.msra.mxu0 0
    %780 = vmatprep.subr.bf16.mxu0 0
    %781 = vmatpush1.bf16.msra.mxu0 0
    %782 = vmatprep.mubr.bf16.mxu0 0
    %783 = vmatmul.mubr.bf16.gmra.mrb[0].mxu0 %v699
    %v784 = vpop.f32.mrb[0].mxu0
    %v785 = vadd.f32 0.0, %v784
    %v786 = vpop.f32.mrb[0].mxu0
    %v787 = vadd.f32 0.0, %v786
    %v788 = vpop.f32.mrb[0].mxu0
    %v789 = vadd.f32 0.0, %v788
    %v790 = vpop.f32.mrb[0].mxu0
    %v791 = vadd.f32 0.0, %v790
    %792 = vdwg.mxu0
    %v793 = vunpack.c.l.bf16 %v703
    %v794 = vunpack.c.h.bf16 %v703
    %v795 = vunpack.c.l.bf16 %v704
    %v796 = vunpack.c.h.bf16 %v704
    %v797 = vunpack.c.l.bf16 %v705
    %v798 = vunpack.c.h.bf16 %v705
    %v799 = vunpack.c.l.bf16 %v706
    %v800 = vunpack.c.h.bf16 %v706
    %v801 = vadd.f32 %v793, %v742
    %v802 = vadd.f32 %v794, %v744
    %v803 = vadd.f32 %v795, %v785
    %v804 = vadd.f32 %v796, %v787
    %v805 = vadd.f32 %v797, %v746
    %v806 = vadd.f32 %v798, %v748
    %v807 = vadd.f32 %v799, %v789
    %v808 = vadd.f32 %v800, %v791
    %v809 = vxor.u32 %v801, 2147483648
    %v810 = vxor.u32 %v805, 2147483648
    %v811 = vmul.f32 %v809, 1.442695
    %v812 = vpow.pop %v811
    %v813 = vmul.f32 %v810, 1.442695
    %v814 = vpow.pop %v813
    %v815 = vadd.f32 %v812, 1.0
    %v816 = vadd.f32 %v814, 1.0
    %v817 = vrcp.pop %v815
    %v818 = vmul.f32 1.0, %v817
    %v819 = vrcp.pop %v816
    %v820 = vmul.f32 1.0, %v819
    %v821 = vxor.u32 %v802, 2147483648
    %v822 = vxor.u32 %v806, 2147483648
    %v823 = vmul.f32 %v821, 1.442695
    %v824 = vpow.pop %v823
    %v825 = vmul.f32 %v822, 1.442695
    %v826 = vpow.pop %v825
    %v827 = vadd.f32 %v824, 1.0
    %v828 = vadd.f32 %v826, 1.0
    %v829 = vrcp.pop %v827
    %v830 = vmul.f32 1.0, %v829
    %v831 = vrcp.pop %v828
    %v832 = vmul.f32 1.0, %v831
    %v833 = vtanh.pop %v803
    %v834 = vtanh.pop %v807
    %v835 = vxor.u32 %v804, 2147483648
    %v836 = vxor.u32 %v808, 2147483648
    %v837 = vmul.f32 %v835, 1.442695
    %v838 = vpow.pop %v837
    %v839 = vmul.f32 %v836, 1.442695
    %v840 = vpow.pop %v839
    %v841 = vadd.f32 %v838, 1.0
    %v842 = vadd.f32 %v840, 1.0
    %v843 = vrcp.pop %v841
    %v844 = vmul.f32 1.0, %v843
    %v845 = vrcp.pop %v842
    %v846 = vmul.f32 1.0, %v845
    %v847 = vmul.f32 %v830, %v693
    %v848 = vmul.f32 %v832, %v694
    %v849 = vmul.f32 %v818, %v833
    %v850 = vmul.f32 %v820, %v834
    %v851 = vadd.f32 %v847, %v849
    %v852 = vadd.f32 %v848, %v850
    %v853 = vtanh.pop %v851
    %v854 = vtanh.pop %v852
    %v855 = vmul.f32 %v844, %v853
    %v856 = vmul.f32 %v846, %v854
    %v857 = vpack.c.bf16 %v856, %v855
    %s858 = scalar_lea.vmem [#allocation2], 24
    %859 = vst [vmem:[%s858] sm:$0xff] %v857
    %s860 = scalar_lea.vmem %s0, 128
    %v861 = vld [vmem:[%s860] sm:$0xff]
    %v862 = vld [vmem:[%s860 + $0x8] sm:$0xff]
    %v863 = vld [vmem:[%s860 + $0x10] sm:$0xff]
    %v864 = vld [vmem:[%s860 + $0x18] sm:$0xff]
    %865 = vmatprep.subr.bf16.mxu0 %v171
    %866 = vmatpush1.bf16.msra.mxu0 %v170
    %867 = vmatprep.subr.bf16.mxu0 %v175
    %868 = vmatpush1.bf16.msra.mxu0 %v174
    %869 = vmatprep.subr.bf16.mxu0 %v179
    %870 = vmatpush1.bf16.msra.mxu0 %v178
    %871 = vmatprep.subr.bf16.mxu0 %v183
    %872 = vmatpush1.bf16.msra.mxu0 %v182
    %873 = vmatprep.subr.bf16.mxu0 %v187
    %874 = vmatpush1.bf16.msra.mxu0 %v186
    %875 = vmatprep.subr.bf16.mxu0 %v191
    %876 = vmatpush1.bf16.msra.mxu0 %v190
    %877 = vmatprep.subr.bf16.mxu0 %v195
    %878 = vmatpush1.bf16.msra.mxu0 %v194
    %879 = vmatprep.subr.bf16.mxu0 %v199
    %880 = vmatpush1.bf16.msra.mxu0 %v198
    %881 = vmatprep.subr.bf16.mxu0 0
    %882 = vmatpush1.bf16.msra.mxu0 0
    %883 = vmatprep.subr.bf16.mxu0 0
    %884 = vmatpush1.bf16.msra.mxu0 0
    %885 = vmatprep.subr.bf16.mxu0 0
    %886 = vmatpush1.bf16.msra.mxu0 0
    %887 = vmatprep.subr.bf16.mxu0 0
    %888 = vmatpush1.bf16.msra.mxu0 0
    %889 = vmatprep.subr.bf16.mxu0 0
    %890 = vmatpush1.bf16.msra.mxu0 0
    %891 = vmatprep.subr.bf16.mxu0 0
    %892 = vmatpush1.bf16.msra.mxu0 0
    %893 = vmatprep.subr.bf16.mxu0 0
    %894 = vmatpush1.bf16.msra.mxu0 0
    %895 = vmatprep.subr.bf16.mxu0 0
    %896 = vmatpush1.bf16.msra.mxu0 0
    %897 = vmatprep.mubr.bf16.mxu0 0
    %898 = vmatmul.mubr.bf16.gmra.mrb[0].mxu0 %v857
    %v899 = vpop.f32.mrb[0].mxu0
    %v900 = vadd.f32 0.0, %v899
    %v901 = vpop.f32.mrb[0].mxu0
    %v902 = vadd.f32 0.0, %v901
    %v903 = vpop.f32.mrb[0].mxu0
    %v904 = vadd.f32 0.0, %v903
    %v905 = vpop.f32.mrb[0].mxu0
    %v906 = vadd.f32 0.0, %v905
    %907 = vdwg.mxu0
    %908 = vmatprep.subr.bf16.mxu0 %v173
    %909 = vmatpush1.bf16.msra.mxu0 %v172
    %910 = vmatprep.subr.bf16.mxu0 %v177
    %911 = vmatpush1.bf16.msra.mxu0 %v176
    %912 = vmatprep.subr.bf16.mxu0 %v181
    %913 = vmatpush1.bf16.msra.mxu0 %v180
    %914 = vmatprep.subr.bf16.mxu0 %v185
    %915 = vmatpush1.bf16.msra.mxu0 %v184
    %916 = vmatprep.subr.bf16.mxu0 %v189
    %917 = vmatpush1.bf16.msra.mxu0 %v188
    %918 = vmatprep.subr.bf16.mxu0 %v193
    %919 = vmatpush1.bf16.msra.mxu0 %v192
    %920 = vmatprep.subr.bf16.mxu0 %v197
    %921 = vmatpush1.bf16.msra.mxu0 %v196
    %922 = vmatprep.subr.bf16.mxu0 %v201
    %923 = vmatpush1.bf16.msra.mxu0 %v200
    %924 = vmatprep.subr.bf16.mxu0 0
    %925 = vmatpush1.bf16.msra.mxu0 0
    %926 = vmatprep.subr.bf16.mxu0 0
    %927 = vmatpush1.bf16.msra.mxu0 0
    %928 = vmatprep.subr.bf16.mxu0 0
    %929 = vmatpush1.bf16.msra.mxu0 0
    %930 = vmatprep.subr.bf16.mxu0 0
    %931 = vmatpush1.bf16.msra.mxu0 0
    %932 = vmatprep.subr.bf16.mxu0 0
    %933 = vmatpush1.bf16.msra.mxu0 0
    %934 = vmatprep.subr.bf16.mxu0 0
    %935 = vmatpush1.bf16.msra.mxu0 0
    %936 = vmatprep.subr.bf16.mxu0 0
    %937 = vmatpush1.bf16.msra.mxu0 0
    %938 = vmatprep.subr.bf16.mxu0 0
    %939 = vmatpush1.bf16.msra.mxu0 0
    %940 = vmatprep.mubr.bf16.mxu0 0
    %941 = vmatmul.mubr.bf16.gmra.mrb[0].mxu0 %v857
    %v942 = vpop.f32.mrb[0].mxu0
    %v943 = vadd.f32 0.0, %v942
    %v944 = vpop.f32.mrb[0].mxu0
    %v945 = vadd.f32 0.0, %v944
    %v946 = vpop.f32.mrb[0].mxu0
    %v947 = vadd.f32 0.0, %v946
    %v948 = vpop.f32.mrb[0].mxu0
    %v949 = vadd.f32 0.0, %v948
    %950 = vdwg.mxu0
    %v951 = vunpack.c.l.bf16 %v861
    %v952 = vunpack.c.h.bf16 %v861
    %v953 = vunpack.c.l.bf16 %v862
    %v954 = vunpack.c.h.bf16 %v862
    %v955 = vunpack.c.l.bf16 %v863
    %v956 = vunpack.c.h.bf16 %v863
    %v957 = vunpack.c.l.bf16 %v864
    %v958 = vunpack.c.h.bf16 %v864
    %v959 = vadd.f32 %v951, %v900
    %v960 = vadd.f32 %v952, %v902
    %v961 = vadd.f32 %v953, %v943
    %v962 = vadd.f32 %v954, %v945
    %v963 = vadd.f32 %v955, %v904
    %v964 = vadd.f32 %v956, %v906
    %v965 = vadd.f32 %v957, %v947
    %v966 = vadd.f32 %v958, %v949
    %v967 = vxor.u32 %v959, 2147483648
    %v968 = vxor.u32 %v963, 2147483648
    %v969 = vmul.f32 %v967, 1.442695
    %v970 = vpow.pop %v969
    %v971 = vmul.f32 %v968, 1.442695
    %v972 = vpow.pop %v971
    %v973 = vadd.f32 %v970, 1.0
    %v974 = vadd.f32 %v972, 1.0
    %v975 = vrcp.pop %v973
    %v976 = vmul.f32 1.0, %v975
    %v977 = vrcp.pop %v974
    %v978 = vmul.f32 1.0, %v977
    %v979 = vxor.u32 %v960, 2147483648
    %v980 = vxor.u32 %v964, 2147483648
    %v981 = vmul.f32 %v979, 1.442695
    %v982 = vpow.pop %v981
    %v983 = vmul.f32 %v980, 1.442695
    %v984 = vpow.pop %v983
    %v985 = vadd.f32 %v982, 1.0
    %v986 = vadd.f32 %v984, 1.0
    %v987 = vrcp.pop %v985
    %v988 = vmul.f32 1.0, %v987
    %v989 = vrcp.pop %v986
    %v990 = vmul.f32 1.0, %v989
    %v991 = vtanh.pop %v961
    %v992 = vtanh.pop %v965
    %v993 = vxor.u32 %v962, 2147483648
    %v994 = vxor.u32 %v966, 2147483648
    %v995 = vmul.f32 %v993, 1.442695
    %v996 = vpow.pop %v995
    %v997 = vmul.f32 %v994, 1.442695
    %v998 = vpow.pop %v997
    %v999 = vadd.f32 %v996, 1.0
    %v1000 = vadd.f32 %v998, 1.0
    %v1001 = vrcp.pop %v999
    %v1002 = vmul.f32 1.0, %v1001
    %v1003 = vrcp.pop %v1000
    %v1004 = vmul.f32 1.0, %v1003
    %v1005 = vmul.f32 %v988, %v851
    %v1006 = vmul.f32 %v990, %v852
    %v1007 = vmul.f32 %v976, %v991
    %v1008 = vmul.f32 %v978, %v992
    %v1009 = vadd.f32 %v1005, %v1007
    %v1010 = vadd.f32 %v1006, %v1008
    %v1011 = vtanh.pop %v1009
    %v1012 = vtanh.pop %v1010
    %v1013 = vmul.f32 %v1002, %v1011
    %v1014 = vmul.f32 %v1004, %v1012
    %v1015 = vpack.c.bf16 %v1014, %v1013
    %s1016 = scalar_lea.vmem [#allocation2], 32
    %1017 = vst [vmem:[%s1016] sm:$0xff] %v1015
    %s1018 = scalar_lea.vmem %s0, 160
    %v1019 = vld [vmem:[%s1018] sm:$0xff]
    %v1020 = vld [vmem:[%s1018 + $0x8] sm:$0xff]
    %v1021 = vld [vmem:[%s1018 + $0x10] sm:$0xff]
    %v1022 = vld [vmem:[%s1018 + $0x18] sm:$0xff]
    %1023 = vmatprep.subr.bf16.mxu0 %v171
    %1024 = vmatpush1.bf16.msra.mxu0 %v170
    %1025 = vmatprep.subr.bf16.mxu0 %v175
    %1026 = vmatpush1.bf16.msra.mxu0 %v174
    %1027 = vmatprep.subr.bf16.mxu0 %v179
    %1028 = vmatpush1.bf16.msra.mxu0 %v178
    %1029 = vmatprep.subr.bf16.mxu0 %v183
    %1030 = vmatpush1.bf16.msra.mxu0 %v182
    %1031 = vmatprep.subr.bf16.mxu0 %v187
    %1032 = vmatpush1.bf16.msra.mxu0 %v186
    %1033 = vmatprep.subr.bf16.mxu0 %v191
    %1034 = vmatpush1.bf16.msra.mxu0 %v190
    %1035 = vmatprep.subr.bf16.mxu0 %v195
    %1036 = vmatpush1.bf16.msra.mxu0 %v194
    %1037 = vmatprep.subr.bf16.mxu0 %v199
    %1038 = vmatpush1.bf16.msra.mxu0 %v198
    %1039 = vmatprep.subr.bf16.mxu0 0
    %1040 = vmatpush1.bf16.msra.mxu0 0
    %1041 = vmatprep.subr.bf16.mxu0 0
    %1042 = vmatpush1.bf16.msra.mxu0 0
    %1043 = vmatprep.subr.bf16.mxu0 0
    %1044 = vmatpush1.bf16.msra.mxu0 0
    %1045 = vmatprep.subr.bf16.mxu0 0
    %1046 = vmatpush1.bf16.msra.mxu0 0
    %1047 = vmatprep.subr.bf16.mxu0 0
    %1048 = vmatpush1.bf16.msra.mxu0 0
    %1049 = vmatprep.subr.bf16.mxu0 0
    %1050 = vmatpush1.bf16.msra.mxu0 0
    %1051 = vmatprep.subr.bf16.mxu0 0
    %1052 = vmatpush1.bf16.msra.mxu0 0
    %1053 = vmatprep.subr.bf16.mxu0 0
    %1054 = vmatpush1.bf16.msra.mxu0 0
    %1055 = vmatprep.mubr.bf16.mxu0 0
    %1056 = vmatmul.mubr.bf16.gmra.mrb[0].mxu0 %v1015
    %v1057 = vpop.f32.mrb[0].mxu0
    %v1058 = vadd.f32 0.0, %v1057
    %v1059 = vpop.f32.mrb[0].mxu0
    %v1060 = vadd.f32 0.0, %v1059
    %v1061 = vpop.f32.mrb[0].mxu0
    %v1062 = vadd.f32 0.0, %v1061
    %v1063 = vpop.f32.mrb[0].mxu0
    %v1064 = vadd.f32 0.0, %v1063
    %1065 = vdwg.mxu0
    %1066 = vmatprep.subr.bf16.mxu0 %v173
    %1067 = vmatpush1.bf16.msra.mxu0 %v172
    %1068 = vmatprep.subr.bf16.mxu0 %v177
    %1069 = vmatpush1.bf16.msra.mxu0 %v176
    %1070 = vmatprep.subr.bf16.mxu0 %v181
    %1071 = vmatpush1.bf16.msra.mxu0 %v180
    %1072 = vmatprep.subr.bf16.mxu0 %v185
    %1073 = vmatpush1.bf16.msra.mxu0 %v184
    %1074 = vmatprep.subr.bf16.mxu0 %v189
    %1075 = vmatpush1.bf16.msra.mxu0 %v188
    %1076 = vmatprep.subr.bf16.mxu0 %v193
    %1077 = vmatpush1.bf16.msra.mxu0 %v192
    %1078 = vmatprep.subr.bf16.mxu0 %v197
    %1079 = vmatpush1.bf16.msra.mxu0 %v196
    %1080 = vmatprep.subr.bf16.mxu0 %v201
    %1081 = vmatpush1.bf16.msra.mxu0 %v200
    %1082 = vmatprep.subr.bf16.mxu0 0
    %1083 = vmatpush1.bf16.msra.mxu0 0
    %1084 = vmatprep.subr.bf16.mxu0 0
    %1085 = vmatpush1.bf16.msra.mxu0 0
    %1086 = vmatprep.subr.bf16.mxu0 0
    %1087 = vmatpush1.bf16.msra.mxu0 0
    %1088 = vmatprep.subr.bf16.mxu0 0
    %1089 = vmatpush1.bf16.msra.mxu0 0
    %1090 = vmatprep.subr.bf16.mxu0 0
    %1091 = vmatpush1.bf16.msra.mxu0 0
    %1092 = vmatprep.subr.bf16.mxu0 0
    %1093 = vmatpush1.bf16.msra.mxu0 0
    %1094 = vmatprep.subr.bf16.mxu0 0
    %1095 = vmatpush1.bf16.msra.mxu0 0
    %1096 = vmatprep.subr.bf16.mxu0 0
    %1097 = vmatpush1.bf16.msra.mxu0 0
    %1098 = vmatprep.mubr.bf16.mxu0 0
    %1099 = vmatmul.mubr.bf16.gmra.mrb[0].mxu0 %v1015
    %v1100 = vpop.f32.mrb[0].mxu0
    %v1101 = vadd.f32 0.0, %v1100
    %v1102 = vpop.f32.mrb[0].mxu0
    %v1103 = vadd.f32 0.0, %v1102
    %v1104 = vpop.f32.mrb[0].mxu0
    %v1105 = vadd.f32 0.0, %v1104
    %v1106 = vpop.f32.mrb[0].mxu0
    %v1107 = vadd.f32 0.0, %v1106
    %1108 = vdwg.mxu0
    %v1109 = vunpack.c.l.bf16 %v1019
    %v1110 = vunpack.c.h.bf16 %v1019
    %v1111 = vunpack.c.l.bf16 %v1020
    %v1112 = vunpack.c.h.bf16 %v1020
    %v1113 = vunpack.c.l.bf16 %v1021
    %v1114 = vunpack.c.h.bf16 %v1021
    %v1115 = vunpack.c.l.bf16 %v1022
    %v1116 = vunpack.c.h.bf16 %v1022
    %v1117 = vadd.f32 %v1109, %v1058
    %v1118 = vadd.f32 %v1110, %v1060
    %v1119 = vadd.f32 %v1111, %v1101
    %v1120 = vadd.f32 %v1112, %v1103
    %v1121 = vadd.f32 %v1113, %v1062
    %v1122 = vadd.f32 %v1114, %v1064
    %v1123 = vadd.f32 %v1115, %v1105
    %v1124 = vadd.f32 %v1116, %v1107
    %v1125 = vxor.u32 %v1117, 2147483648
    %v1126 = vxor.u32 %v1121, 2147483648
    %v1127 = vmul.f32 %v1125, 1.442695
    %v1128 = vpow.pop %v1127
    %v1129 = vmul.f32 %v1126, 1.442695
    %v1130 = vpow.pop %v1129
    %v1131 = vadd.f32 %v1128, 1.0
    %v1132 = vadd.f32 %v1130, 1.0
    %v1133 = vrcp.pop %v1131
    %v1134 = vmul.f32 1.0, %v1133
    %v1135 = vrcp.pop %v1132
    %v1136 = vmul.f32 1.0, %v1135
    %v1137 = vxor.u32 %v1118, 2147483648
    %v1138 = vxor.u32 %v1122, 2147483648
    %v1139 = vmul.f32 %v1137, 1.442695
    %v1140 = vpow.pop %v1139
    %v1141 = vmul.f32 %v1138, 1.442695
    %v1142 = vpow.pop %v1141
    %v1143 = vadd.f32 %v1140, 1.0
    %v1144 = vadd.f32 %v1142, 1.0
    %v1145 = vrcp.pop %v1143
    %v1146 = vmul.f32 1.0, %v1145
    %v1147 = vrcp.pop %v1144
    %v1148 = vmul.f32 1.0, %v1147
    %v1149 = vtanh.pop %v1119
    %v1150 = vtanh.pop %v1123
    %v1151 = vxor.u32 %v1120, 2147483648
    %v1152 = vxor.u32 %v1124, 2147483648
    %v1153 = vmul.f32 %v1151, 1.442695
    %v1154 = vpow.pop %v1153
    %v1155 = vmul.f32 %v1152, 1.442695
    %v1156 = vpow.pop %v1155
    %v1157 = vadd.f32 %v1154, 1.0
    %v1158 = vadd.f32 %v1156, 1.0
    %v1159 = vrcp.pop %v1157
    %v1160 = vmul.f32 1.0, %v1159
    %v1161 = vrcp.pop %v1158
    %v1162 = vmul.f32 1.0, %v1161
    %v1163 = vmul.f32 %v1146, %v1009
    %v1164 = vmul.f32 %v1148, %v1010
    %v1165 = vmul.f32 %v1134, %v1149
    %v1166 = vmul.f32 %v1136, %v1150
    %v1167 = vadd.f32 %v1163, %v1165
    %v1168 = vadd.f32 %v1164, %v1166
    %v1169 = vtanh.pop %v1167
    %v1170 = vtanh.pop %v1168
    %v1171 = vmul.f32 %v1160, %v1169
    %v1172 = vmul.f32 %v1162, %v1170
    %v1173 = vpack.c.bf16 %v1172, %v1171
    %s1174 = scalar_lea.vmem [#allocation2], 40
    %1175 = vst [vmem:[%s1174] sm:$0xff] %v1173
    %s1176 = scalar_lea.vmem %s0, 192
    %v1177 = vld [vmem:[%s1176] sm:$0xff]
    %v1178 = vld [vmem:[%s1176 + $0x8] sm:$0xff]
    %v1179 = vld [vmem:[%s1176 + $0x10] sm:$0xff]
    %v1180 = vld [vmem:[%s1176 + $0x18] sm:$0xff]
    %1181 = vmatprep.subr.bf16.mxu0 %v171
    %1182 = vmatpush1.bf16.msra.mxu0 %v170
    %1183 = vmatprep.subr.bf16.mxu0 %v175
    %1184 = vmatpush1.bf16.msra.mxu0 %v174
    %1185 = vmatprep.subr.bf16.mxu0 %v179
    %1186 = vmatpush1.bf16.msra.mxu0 %v178
    %1187 = vmatprep.subr.bf16.mxu0 %v183
    %1188 = vmatpush1.bf16.msra.mxu0 %v182
    %1189 = vmatprep.subr.bf16.mxu0 %v187
    %1190 = vmatpush1.bf16.msra.mxu0 %v186
    %1191 = vmatprep.subr.bf16.mxu0 %v191
    %1192 = vmatpush1.bf16.msra.mxu0 %v190
    %1193 = vmatprep.subr.bf16.mxu0 %v195
    %1194 = vmatpush1.bf16.msra.mxu0 %v194
    %1195 = vmatprep.subr.bf16.mxu0 %v199
    %1196 = vmatpush1.bf16.msra.mxu0 %v198
    %1197 = vmatprep.subr.bf16.mxu0 0
    %1198 = vmatpush1.bf16.msra.mxu0 0
    %1199 = vmatprep.subr.bf16.mxu0 0
    %1200 = vmatpush1.bf16.msra.mxu0 0
    %1201 = vmatprep.subr.bf16.mxu0 0
    %1202 = vmatpush1.bf16.msra.mxu0 0
    %1203 = vmatprep.subr.bf16.mxu0 0
    %1204 = vmatpush1.bf16.msra.mxu0 0
    %1205 = vmatprep.subr.bf16.mxu0 0
    %1206 = vmatpush1.bf16.msra.mxu0 0
    %1207 = vmatprep.subr.bf16.mxu0 0
    %1208 = vmatpush1.bf16.msra.mxu0 0
    %1209 = vmatprep.subr.bf16.mxu0 0
    %1210 = vmatpush1.bf16.msra.mxu0 0
    %1211 = vmatprep.subr.bf16.mxu0 0
    %1212 = vmatpush1.bf16.msra.mxu0 0
    %1213 = vmatprep.mubr.bf16.mxu0 0
    %1214 = vmatmul.mubr.bf16.gmra.mrb[0].mxu0 %v1173
    %v1215 = vpop.f32.mrb[0].mxu0
    %v1216 = vadd.f32 0.0, %v1215
    %v1217 = vpop.f32.mrb[0].mxu0
    %v1218 = vadd.f32 0.0, %v1217
    %v1219 = vpop.f32.mrb[0].mxu0
    %v1220 = vadd.f32 0.0, %v1219
    %v1221 = vpop.f32.mrb[0].mxu0
    %v1222 = vadd.f32 0.0, %v1221
    %1223 = vdwg.mxu0
    %1224 = vmatprep.subr.bf16.mxu0 %v173
    %1225 = vmatpush1.bf16.msra.mxu0 %v172
    %1226 = vmatprep.subr.bf16.mxu0 %v177
    %1227 = vmatpush1.bf16.msra.mxu0 %v176
    %1228 = vmatprep.subr.bf16.mxu0 %v181
    %1229 = vmatpush1.bf16.msra.mxu0 %v180
    %1230 = vmatprep.subr.bf16.mxu0 %v185
    %1231 = vmatpush1.bf16.msra.mxu0 %v184
    %1232 = vmatprep.subr.bf16.mxu0 %v189
    %1233 = vmatpush1.bf16.msra.mxu0 %v188
    %1234 = vmatprep.subr.bf16.mxu0 %v193
    %1235 = vmatpush1.bf16.msra.mxu0 %v192
    %1236 = vmatprep.subr.bf16.mxu0 %v197
    %1237 = vmatpush1.bf16.msra.mxu0 %v196
    %1238 = vmatprep.subr.bf16.mxu0 %v201
    %1239 = vmatpush1.bf16.msra.mxu0 %v200
    %1240 = vmatprep.subr.bf16.mxu0 0
    %1241 = vmatpush1.bf16.msra.mxu0 0
    %1242 = vmatprep.subr.bf16.mxu0 0
    %1243 = vmatpush1.bf16.msra.mxu0 0
    %1244 = vmatprep.subr.bf16.mxu0 0
    %1245 = vmatpush1.bf16.msra.mxu0 0
    %1246 = vmatprep.subr.bf16.mxu0 0
    %1247 = vmatpush1.bf16.msra.mxu0 0
    %1248 = vmatprep.subr.bf16.mxu0 0
    %1249 = vmatpush1.bf16.msra.mxu0 0
    %1250 = vmatprep.subr.bf16.mxu0 0
    %1251 = vmatpush1.bf16.msra.mxu0 0
    %1252 = vmatprep.subr.bf16.mxu0 0
    %1253 = vmatpush1.bf16.msra.mxu0 0
    %1254 = vmatprep.subr.bf16.mxu0 0
    %1255 = vmatpush1.bf16.msra.mxu0 0
    %1256 = vmatprep.mubr.bf16.mxu0 0
    %1257 = vmatmul.mubr.bf16.gmra.mrb[0].mxu0 %v1173
    %v1258 = vpop.f32.mrb[0].mxu0
    %v1259 = vadd.f32 0.0, %v1258
    %v1260 = vpop.f32.mrb[0].mxu0
    %v1261 = vadd.f32 0.0, %v1260
    %v1262 = vpop.f32.mrb[0].mxu0
    %v1263 = vadd.f32 0.0, %v1262
    %v1264 = vpop.f32.mrb[0].mxu0
    %v1265 = vadd.f32 0.0, %v1264
    %1266 = vdwg.mxu0
    %v1267 = vunpack.c.l.bf16 %v1177
    %v1268 = vunpack.c.h.bf16 %v1177
    %v1269 = vunpack.c.l.bf16 %v1178
    %v1270 = vunpack.c.h.bf16 %v1178
    %v1271 = vunpack.c.l.bf16 %v1179
    %v1272 = vunpack.c.h.bf16 %v1179
    %v1273 = vunpack.c.l.bf16 %v1180
    %v1274 = vunpack.c.h.bf16 %v1180
    %v1275 = vadd.f32 %v1267, %v1216
    %v1276 = vadd.f32 %v1268, %v1218
    %v1277 = vadd.f32 %v1269, %v1259
    %v1278 = vadd.f32 %v1270, %v1261
    %v1279 = vadd.f32 %v1271, %v1220
    %v1280 = vadd.f32 %v1272, %v1222
    %v1281 = vadd.f32 %v1273, %v1263
    %v1282 = vadd.f32 %v1274, %v1265
    %v1283 = vxor.u32 %v1275, 2147483648
    %v1284 = vxor.u32 %v1279, 2147483648
    %v1285 = vmul.f32 %v1283, 1.442695
    %v1286 = vpow.pop %v1285
    %v1287 = vmul.f32 %v1284, 1.442695
    %v1288 = vpow.pop %v1287
    %v1289 = vadd.f32 %v1286, 1.0
    %v1290 = vadd.f32 %v1288, 1.0
    %v1291 = vrcp.pop %v1289
    %v1292 = vmul.f32 1.0, %v1291
    %v1293 = vrcp.pop %v1290
    %v1294 = vmul.f32 1.0, %v1293
    %v1295 = vxor.u32 %v1276, 2147483648
    %v1296 = vxor.u32 %v1280, 2147483648
    %v1297 = vmul.f32 %v1295, 1.442695
    %v1298 = vpow.pop %v1297
    %v1299 = vmul.f32 %v1296, 1.442695
    %v1300 = vpow.pop %v1299
    %v1301 = vadd.f32 %v1298, 1.0
    %v1302 = vadd.f32 %v1300, 1.0
    %v1303 = vrcp.pop %v1301
    %v1304 = vmul.f32 1.0, %v1303
    %v1305 = vrcp.pop %v1302
    %v1306 = vmul.f32 1.0, %v1305
    %v1307 = vtanh.pop %v1277
    %v1308 = vtanh.pop %v1281
    %v1309 = vxor.u32 %v1278, 2147483648
    %v1310 = vxor.u32 %v1282, 2147483648
    %v1311 = vmul.f32 %v1309, 1.442695
    %v1312 = vpow.pop %v1311
    %v1313 = vmul.f32 %v1310, 1.442695
    %v1314 = vpow.pop %v1313
    %v1315 = vadd.f32 %v1312, 1.0
    %v1316 = vadd.f32 %v1314, 1.0
    %v1317 = vrcp.pop %v1315
    %v1318 = vmul.f32 1.0, %v1317
    %v1319 = vrcp.pop %v1316
    %v1320 = vmul.f32 1.0, %v1319
    %v1321 = vmul.f32 %v1304, %v1167
    %v1322 = vmul.f32 %v1306, %v1168
    %v1323 = vmul.f32 %v1292, %v1307
    %v1324 = vmul.f32 %v1294, %v1308
    %v1325 = vadd.f32 %v1321, %v1323
    %v1326 = vadd.f32 %v1322, %v1324
    %v1327 = vtanh.pop %v1325
    %v1328 = vtanh.pop %v1326
    %v1329 = vmul.f32 %v1318, %v1327
    %v1330 = vmul.f32 %v1320, %v1328
    %v1331 = vpack.c.bf16 %v1330, %v1329
    %s1332 = scalar_lea.vmem [#allocation2], 48
    %1333 = vst [vmem:[%s1332] sm:$0xff] %v1331
    %s1334 = scalar_lea.vmem %s0, 224
    %v1335 = vld [vmem:[%s1334] sm:$0xff]
    %v1336 = vld [vmem:[%s1334 + $0x8] sm:$0xff]
    %v1337 = vld [vmem:[%s1334 + $0x10] sm:$0xff]
    %v1338 = vld [vmem:[%s1334 + $0x18] sm:$0xff]
    %1339 = vmatprep.subr.bf16.mxu0 %v171
    %1340 = vmatpush1.bf16.msra.mxu0 %v170
    %1341 = vmatprep.subr.bf16.mxu0 %v175
    %1342 = vmatpush1.bf16.msra.mxu0 %v174
    %1343 = vmatprep.subr.bf16.mxu0 %v179
    %1344 = vmatpush1.bf16.msra.mxu0 %v178
    %1345 = vmatprep.subr.bf16.mxu0 %v183
    %1346 = vmatpush1.bf16.msra.mxu0 %v182
    %1347 = vmatprep.subr.bf16.mxu0 %v187
    %1348 = vmatpush1.bf16.msra.mxu0 %v186
    %1349 = vmatprep.subr.bf16.mxu0 %v191
    %1350 = vmatpush1.bf16.msra.mxu0 %v190
    %1351 = vmatprep.subr.bf16.mxu0 %v195
    %1352 = vmatpush1.bf16.msra.mxu0 %v194
    %1353 = vmatprep.subr.bf16.mxu0 %v199
    %1354 = vmatpush1.bf16.msra.mxu0 %v198
    %1355 = vmatprep.subr.bf16.mxu0 0
    %1356 = vmatpush1.bf16.msra.mxu0 0
    %1357 = vmatprep.subr.bf16.mxu0 0
    %1358 = vmatpush1.bf16.msra.mxu0 0
    %1359 = vmatprep.subr.bf16.mxu0 0
    %1360 = vmatpush1.bf16.msra.mxu0 0
    %1361 = vmatprep.subr.bf16.mxu0 0
    %1362 = vmatpush1.bf16.msra.mxu0 0
    %1363 = vmatprep.subr.bf16.mxu0 0
    %1364 = vmatpush1.bf16.msra.mxu0 0
    %1365 = vmatprep.subr.bf16.mxu0 0
    %1366 = vmatpush1.bf16.msra.mxu0 0
    %1367 = vmatprep.subr.bf16.mxu0 0
    %1368 = vmatpush1.bf16.msra.mxu0 0
    %1369 = vmatprep.subr.bf16.mxu0 0
    %1370 = vmatpush1.bf16.msra.mxu0 0
    %1371 = vmatprep.mubr.bf16.mxu0 0
    %1372 = vmatmul.mubr.bf16.gmra.mrb[0].mxu0 %v1331
    %v1373 = vpop.f32.mrb[0].mxu0
    %v1374 = vadd.f32 0.0, %v1373
    %v1375 = vpop.f32.mrb[0].mxu0
    %v1376 = vadd.f32 0.0, %v1375
    %v1377 = vpop.f32.mrb[0].mxu0
    %v1378 = vadd.f32 0.0, %v1377
    %v1379 = vpop.f32.mrb[0].mxu0
    %v1380 = vadd.f32 0.0, %v1379
    %1381 = vdwg.mxu0
    %1382 = vmatprep.subr.bf16.mxu0 %v173
    %1383 = vmatpush1.bf16.msra.mxu0 %v172
    %1384 = vmatprep.subr.bf16.mxu0 %v177
    %1385 = vmatpush1.bf16.msra.mxu0 %v176
    %1386 = vmatprep.subr.bf16.mxu0 %v181
    %1387 = vmatpush1.bf16.msra.mxu0 %v180
    %1388 = vmatprep.subr.bf16.mxu0 %v185
    %1389 = vmatpush1.bf16.msra.mxu0 %v184
    %1390 = vmatprep.subr.bf16.mxu0 %v189
    %1391 = vmatpush1.bf16.msra.mxu0 %v188
    %1392 = vmatprep.subr.bf16.mxu0 %v193
    %1393 = vmatpush1.bf16.msra.mxu0 %v192
    %1394 = vmatprep.subr.bf16.mxu0 %v197
    %1395 = vmatpush1.bf16.msra.mxu0 %v196
    %1396 = vmatprep.subr.bf16.mxu0 %v201
    %1397 = vmatpush1.bf16.msra.mxu0 %v200
    %1398 = vmatprep.subr.bf16.mxu0 0
    %1399 = vmatpush1.bf16.msra.mxu0 0
    %1400 = vmatprep.subr.bf16.mxu0 0
    %1401 = vmatpush1.bf16.msra.mxu0 0
    %1402 = vmatprep.subr.bf16.mxu0 0
    %1403 = vmatpush1.bf16.msra.mxu0 0
    %1404 = vmatprep.subr.bf16.mxu0 0
    %1405 = vmatpush1.bf16.msra.mxu0 0
    %1406 = vmatprep.subr.bf16.mxu0 0
    %1407 = vmatpush1.bf16.msra.mxu0 0
    %1408 = vmatprep.subr.bf16.mxu0 0
    %1409 = vmatpush1.bf16.msra.mxu0 0
    %1410 = vmatprep.subr.bf16.mxu0 0
    %1411 = vmatpush1.bf16.msra.mxu0 0
    %1412 = vmatprep.subr.bf16.mxu0 0
    %1413 = vmatpush1.bf16.msra.mxu0 0
    %1414 = vmatprep.mubr.bf16.mxu0 0
    %1415 = vmatmul.mubr.bf16.gmra.mrb[0].mxu0 %v1331
    %v1416 = vpop.f32.mrb[0].mxu0
    %v1417 = vadd.f32 0.0, %v1416
    %v1418 = vpop.f32.mrb[0].mxu0
    %v1419 = vadd.f32 0.0, %v1418
    %v1420 = vpop.f32.mrb[0].mxu0
    %v1421 = vadd.f32 0.0, %v1420
    %v1422 = vpop.f32.mrb[0].mxu0
    %v1423 = vadd.f32 0.0, %v1422
    %1424 = vdwg.mxu0
    %v1425 = vunpack.c.l.bf16 %v1335
    %v1426 = vunpack.c.h.bf16 %v1335
    %v1427 = vunpack.c.l.bf16 %v1336
    %v1428 = vunpack.c.h.bf16 %v1336
    %v1429 = vunpack.c.l.bf16 %v1337
    %v1430 = vunpack.c.h.bf16 %v1337
    %v1431 = vunpack.c.l.bf16 %v1338
    %v1432 = vunpack.c.h.bf16 %v1338
    %v1433 = vadd.f32 %v1425, %v1374
    %v1434 = vadd.f32 %v1426, %v1376
    %v1435 = vadd.f32 %v1427, %v1417
    %v1436 = vadd.f32 %v1428, %v1419
    %v1437 = vadd.f32 %v1429, %v1378
    %v1438 = vadd.f32 %v1430, %v1380
    %v1439 = vadd.f32 %v1431, %v1421
    %v1440 = vadd.f32 %v1432, %v1423
    %v1441 = vxor.u32 %v1433, 2147483648
    %v1442 = vxor.u32 %v1437, 2147483648
    %v1443 = vmul.f32 %v1441, 1.442695
    %v1444 = vpow.pop %v1443
    %v1445 = vmul.f32 %v1442, 1.442695
    %v1446 = vpow.pop %v1445
    %v1447 = vadd.f32 %v1444, 1.0
    %v1448 = vadd.f32 %v1446, 1.0
    %v1449 = vrcp.pop %v1447
    %v1450 = vmul.f32 1.0, %v1449
    %v1451 = vrcp.pop %v1448
    %v1452 = vmul.f32 1.0, %v1451
    %v1453 = vxor.u32 %v1434, 2147483648
    %v1454 = vxor.u32 %v1438, 2147483648
    %v1455 = vmul.f32 %v1453, 1.442695
    %v1456 = vpow.pop %v1455
    %v1457 = vmul.f32 %v1454, 1.442695
    %v1458 = vpow.pop %v1457
    %v1459 = vadd.f32 %v1456, 1.0
    %v1460 = vadd.f32 %v1458, 1.0
    %v1461 = vrcp.pop %v1459
    %v1462 = vmul.f32 1.0, %v1461
    %v1463 = vrcp.pop %v1460
    %v1464 = vmul.f32 1.0, %v1463
    %v1465 = vtanh.pop %v1435
    %v1466 = vtanh.pop %v1439
    %v1467 = vxor.u32 %v1436, 2147483648
    %v1468 = vxor.u32 %v1440, 2147483648
    %v1469 = vmul.f32 %v1467, 1.442695
    %v1470 = vpow.pop %v1469
    %v1471 = vmul.f32 %v1468, 1.442695
    %v1472 = vpow.pop %v1471
    %v1473 = vadd.f32 %v1470, 1.0
    %v1474 = vadd.f32 %v1472, 1.0
    %v1475 = vrcp.pop %v1473
    %v1476 = vmul.f32 1.0, %v1475
    %v1477 = vrcp.pop %v1474
    %v1478 = vmul.f32 1.0, %v1477
    %v1479 = vmul.f32 %v1462, %v1325
    %v1480 = vmul.f32 %v1464, %v1326
    %v1481 = vmul.f32 %v1450, %v1465
    %v1482 = vmul.f32 %v1452, %v1466
    %v1483 = vadd.f32 %v1479, %v1481
    %v1484 = vadd.f32 %v1480, %v1482
    %v1485 = vtanh.pop %v1483
    %v1486 = vtanh.pop %v1484
    %v1487 = vmul.f32 %v1476, %v1485
    %v1488 = vmul.f32 %v1478, %v1486
    %v1489 = vpack.c.bf16 %v1488, %v1487
    %s1490 = scalar_lea.vmem [#allocation2], 56
    %1491 = vst [vmem:[%s1490] sm:$0xff] %v1489
    %1492 = vst [vmem:[#allocation4] sm:$0xff] %v1487
    %1493 = vst [vmem:[#allocation4 + $0x20] sm:$0xff] %v1488
    %1494 = vst [vmem:[#allocation4 + $0x8] sm:$0xff] %v1483
    %1495 = vst [vmem:[#allocation4 + $0x28] sm:$0xff] %v1484
    %v1496 = vld [vmem:[#allocation2] sm:$0xff]
    %v1497 = vld [vmem:[#allocation2 + $0x8] sm:$0xff]
    %v1498 = vld [vmem:[#allocation2 + $0x10] sm:$0xff]
    %v1499 = vld [vmem:[#allocation2 + $0x18] sm:$0xff]
    %v1500 = vld [vmem:[#allocation2 + $0x20] sm:$0xff]
    %v1501 = vld [vmem:[#allocation2 + $0x28] sm:$0xff]
    %v1502 = vld [vmem:[#allocation2 + $0x30] sm:$0xff]
    %v1503 = vld [vmem:[#allocation2 + $0x38] sm:$0xff]
    %v1504 = vld [vmem:[%s1] sm:$0xff]
    %v1505 = vld [vmem:[%s1 + $0x8] sm:$0xff]
    %v1506 = vld [vmem:[%s1 + $0x10] sm:$0xff]
    %v1507 = vld [vmem:[%s1 + $0x18] sm:$0xff]
    %v1508 = vld [vmem:[%s1 + $0x20] sm:$0xff]
    %v1509 = vld [vmem:[%s1 + $0x28] sm:$0xff]
    %v1510 = vld [vmem:[%s1 + $0x30] sm:$0xff]
    %v1511 = vld [vmem:[%s1 + $0x38] sm:$0xff]
    %v1512 = vld [vmem:[%s1 + $0x40] sm:$0xff]
    %v1513 = vld [vmem:[%s1 + $0x48] sm:$0xff]
    %v1514 = vld [vmem:[%s1 + $0x50] sm:$0xff]
    %v1515 = vld [vmem:[%s1 + $0x58] sm:$0xff]
    %v1516 = vld [vmem:[%s1 + $0x60] sm:$0xff]
    %v1517 = vld [vmem:[%s1 + $0x68] sm:$0xff]
    %v1518 = vld [vmem:[%s1 + $0x70] sm:$0xff]
    %v1519 = vld [vmem:[%s1 + $0x78] sm:$0xff]
    %v1520 = vld [vmem:[%s1 + $0x80] sm:$0xff]
    %v1521 = vld [vmem:[%s1 + $0x88] sm:$0xff]
    %v1522 = vld [vmem:[%s1 + $0x90] sm:$0xff]
    %v1523 = vld [vmem:[%s1 + $0x98] sm:$0xff]
    %v1524 = vld [vmem:[%s1 + $0xa0] sm:$0xff]
    %v1525 = vld [vmem:[%s1 + $0xa8] sm:$0xff]
    %v1526 = vld [vmem:[%s1 + $0xb0] sm:$0xff]
    %v1527 = vld [vmem:[%s1 + $0xb8] sm:$0xff]
    %v1528 = vld [vmem:[%s1 + $0xc0] sm:$0xff]
    %v1529 = vld [vmem:[%s1 + $0xc8] sm:$0xff]
    %v1530 = vld [vmem:[%s1 + $0xd0] sm:$0xff]
    %v1531 = vld [vmem:[%s1 + $0xd8] sm:$0xff]
    %v1532 = vld [vmem:[%s1 + $0xe0] sm:$0xff]
    %v1533 = vld [vmem:[%s1 + $0xe8] sm:$0xff]
    %v1534 = vld [vmem:[%s1 + $0xf0] sm:$0xff]
    %v1535 = vld [vmem:[%s1 + $0xf8] sm:$0xff]
    %v1536 = vld [vmem:[%s3] sm:$0xf]
    %v1538 = vlaneseq
    %v1539 = vshrl.u32 %v1538, 7
    %v1540 = vsub.s32 0, %v1539
    %v1541 = vrot.slane %v1536, %v1540
    %v1542 = vlaneseq
    %v1543 = vshrl.u32 %v1542, 7
    %v1544 = vsub.s32 1, %v1543
    %v1545 = vrot.slane %v1536, %v1544
    %v1546 = vlaneseq
    %v1547 = vshrl.u32 %v1546, 7
    %v1548 = vsub.s32 2, %v1547
    %v1549 = vrot.slane %v1536, %v1548
    %v1550 = vlaneseq
    %v1551 = vshrl.u32 %v1550, 7
    %v1552 = vsub.s32 3, %v1551
    %v1553 = vrot.slane %v1536, %v1552
    %v1590 = vunpack.c.l.b16 %v1504
    %v1591 = vunpack.c.h.b16 %v1504
    %v1592 = vunpack.c.l.b16 %v1505
    %v1593 = vunpack.c.h.b16 %v1505
    %v1594 = vunpack.c.l.b16 %v1506
    %v1595 = vunpack.c.h.b16 %v1506
    %v1596 = vunpack.c.l.b16 %v1507
    %v1597 = vunpack.c.h.b16 %v1507
    %v1598 = vunpack.c.l.b16 %v1508
    %v1599 = vunpack.c.h.b16 %v1508
    %v1600 = vunpack.c.l.b16 %v1509
    %v1601 = vunpack.c.h.b16 %v1509
    %v1602 = vunpack.c.l.b16 %v1510
    %v1603 = vunpack.c.h.b16 %v1510
    %v1604 = vunpack.c.l.b16 %v1511
    %v1605 = vunpack.c.h.b16 %v1511
    %v1606 = vunpack.c.l.b16 %v1512
    %v1607 = vunpack.c.h.b16 %v1512
    %v1608 = vunpack.c.l.b16 %v1513
    %v1609 = vunpack.c.h.b16 %v1513
    %v1610 = vunpack.c.l.b16 %v1514
    %v1611 = vunpack.c.h.b16 %v1514
    %v1612 = vunpack.c.l.b16 %v1515
    %v1613 = vunpack.c.h.b16 %v1515
    %v1614 = vunpack.c.l.b16 %v1516
    %v1615 = vunpack.c.h.b16 %v1516
    %v1616 = vunpack.c.l.b16 %v1517
    %v1617 = vunpack.c.h.b16 %v1517
    %v1618 = vunpack.c.l.b16 %v1518
    %v1619 = vunpack.c.h.b16 %v1518
    %v1620 = vunpack.c.l.b16 %v1519
    %v1621 = vunpack.c.h.b16 %v1519
    %v1622 = vunpack.c.l.b16 %v1520
    %v1623 = vunpack.c.h.b16 %v1520
    %v1624 = vunpack.c.l.b16 %v1521
    %v1625 = vunpack.c.h.b16 %v1521
    %v1626 = vunpack.c.l.b16 %v1522
    %v1627 = vunpack.c.h.b16 %v1522
    %v1628 = vunpack.c.l.b16 %v1523
    %v1629 = vunpack.c.h.b16 %v1523
    %v1630 = vunpack.c.l.b16 %v1524
    %v1631 = vunpack.c.h.b16 %v1524
    %v1632 = vunpack.c.l.b16 %v1525
    %v1633 = vunpack.c.h.b16 %v1525
    %v1634 = vunpack.c.l.b16 %v1526
    %v1635 = vunpack.c.h.b16 %v1526
    %v1636 = vunpack.c.l.b16 %v1527
    %v1637 = vunpack.c.h.b16 %v1527
    %v1638 = vunpack.c.l.b16 %v1528
    %v1639 = vunpack.c.h.b16 %v1528
    %v1640 = vunpack.c.l.b16 %v1529
    %v1641 = vunpack.c.h.b16 %v1529
    %v1642 = vunpack.c.l.b16 %v1530
    %v1643 = vunpack.c.h.b16 %v1530
    %v1644 = vunpack.c.l.b16 %v1531
    %v1645 = vunpack.c.h.b16 %v1531
    %v1646 = vunpack.c.l.b16 %v1532
    %v1647 = vunpack.c.h.b16 %v1532
    %v1648 = vunpack.c.l.b16 %v1533
    %v1649 = vunpack.c.h.b16 %v1533
    %v1650 = vunpack.c.l.b16 %v1534
    %v1651 = vunpack.c.h.b16 %v1534
    %v1652 = vunpack.c.l.b16 %v1535
    %v1653 = vunpack.c.h.b16 %v1535
    %v1654 = vpack.c.b16 %v1594, %v1590
    %v1655 = vpack.c.b16 %v1595, %v1591
    %v1656 = vpack.c.b16 %v1596, %v1592
    %v1657 = vpack.c.b16 %v1597, %v1593
    %v1658 = vpack.c.b16 %v1602, %v1598
    %v1659 = vpack.c.b16 %v1603, %v1599
    %v1660 = vpack.c.b16 %v1604, %v1600
    %v1661 = vpack.c.b16 %v1605, %v1601
    %v1662 = vpack.c.b16 %v1610, %v1606
    %v1663 = vpack.c.b16 %v1611, %v1607
    %v1664 = vpack.c.b16 %v1612, %v1608
    %v1665 = vpack.c.b16 %v1613, %v1609
    %v1666 = vpack.c.b16 %v1618, %v1614
    %v1667 = vpack.c.b16 %v1619, %v1615
    %v1668 = vpack.c.b16 %v1620, %v1616
    %v1669 = vpack.c.b16 %v1621, %v1617
    %v1670 = vpack.c.b16 %v1626, %v1622
    %v1671 = vpack.c.b16 %v1627, %v1623
    %v1672 = vpack.c.b16 %v1628, %v1624
    %v1673 = vpack.c.b16 %v1629, %v1625
    %v1674 = vpack.c.b16 %v1634, %v1630
    %v1675 = vpack.c.b16 %v1635, %v1631
    %v1676 = vpack.c.b16 %v1636, %v1632
    %v1677 = vpack.c.b16 %v1637, %v1633
    %v1678 = vpack.c.b16 %v1642, %v1638
    %v1679 = vpack.c.b16 %v1643, %v1639
    %v1680 = vpack.c.b16 %v1644, %v1640
    %v1681 = vpack.c.b16 %v1645, %v1641
    %v1682 = vpack.c.b16 %v1650, %v1646
    %v1683 = vpack.c.b16 %v1651, %v1647
    %v1684 = vpack.c.b16 %v1652, %v1648
    %v1685 = vpack.c.b16 %v1653, %v1649
    %1718 = vmatprep.subr.bf16.mxu0 %v1655
    %1719 = vmatpush1.bf16.msra.mxu0 %v1654
    %1720 = vmatprep.subr.bf16.mxu0 %v1659
    %1721 = vmatpush1.bf16.msra.mxu0 %v1658
    %1722 = vmatprep.subr.bf16.mxu0 %v1663
    %1723 = vmatpush1.bf16.msra.mxu0 %v1662
    %1724 = vmatprep.subr.bf16.mxu0 %v1667
    %1725 = vmatpush1.bf16.msra.mxu0 %v1666
    %1726 = vmatprep.subr.bf16.mxu0 %v1671
    %1727 = vmatpush1.bf16.msra.mxu0 %v1670
    %1728 = vmatprep.subr.bf16.mxu0 %v1675
    %1729 = vmatpush1.bf16.msra.mxu0 %v1674
    %1730 = vmatprep.subr.bf16.mxu0 %v1679
    %1731 = vmatpush1.bf16.msra.mxu0 %v1678
    %1732 = vmatprep.subr.bf16.mxu0 %v1683
    %1733 = vmatpush1.bf16.msra.mxu0 %v1682
    %1734 = vmatprep.subr.bf16.mxu0 0
    %1735 = vmatpush1.bf16.msra.mxu0 0
    %1736 = vmatprep.subr.bf16.mxu0 0
    %1737 = vmatpush1.bf16.msra.mxu0 0
    %1738 = vmatprep.subr.bf16.mxu0 0
    %1739 = vmatpush1.bf16.msra.mxu0 0
    %1740 = vmatprep.subr.bf16.mxu0 0
    %1741 = vmatpush1.bf16.msra.mxu0 0
    %1742 = vmatprep.subr.bf16.mxu0 0
    %1743 = vmatpush1.bf16.msra.mxu0 0
    %1744 = vmatprep.subr.bf16.mxu0 0
    %1745 = vmatpush1.bf16.msra.mxu0 0
    %1746 = vmatprep.subr.bf16.mxu0 0
    %1747 = vmatpush1.bf16.msra.mxu0 0
    %1748 = vmatprep.subr.bf16.mxu0 0
    %1749 = vmatpush1.bf16.msra.mxu0 0
    %1750 = vmatprep.mubr.bf16.mxu0 0
    %1751 = vmatmul.mubr.bf16.gmra.mrb[0].mxu0 %v1496
    %v1752 = vpop.f32.mrb[0].mxu0
    %v1753 = vadd.f32 %v1541, %v1752
    %v1754 = vpop.f32.mrb[0].mxu0
    %v1755 = vadd.f32 %v1545, %v1754
    %v1756 = vpop.f32.mrb[0].mxu0
    %v1757 = vadd.f32 %v1541, %v1756
    %v1758 = vpop.f32.mrb[0].mxu0
    %v1759 = vadd.f32 %v1545, %v1758
    %1760 = vmatprep.mubr.bf16.mxu0 0
    %1761 = vmatmul.mubr.bf16.gmra.mrb[0].mxu0 %v1497
    %v1762 = vpop.f32.mrb[0].mxu0
    %v1763 = vadd.f32 %v1541, %v1762
    %v1764 = vpop.f32.mrb[0].mxu0
    %v1765 = vadd.f32 %v1545, %v1764
    %v1766 = vpop.f32.mrb[0].mxu0
    %v1767 = vadd.f32 %v1541, %v1766
    %v1768 = vpop.f32.mrb[0].mxu0
    %v1769 = vadd.f32 %v1545, %v1768
    %1770 = vmatprep.mubr.bf16.mxu0 0
    %1771 = vmatmul.mubr.bf16.gmra.mrb[0].mxu0 %v1498
    %v1772 = vpop.f32.mrb[0].mxu0
    %v1773 = vadd.f32 %v1541, %v1772
    %v1774 = vpop.f32.mrb[0].mxu0
    %v1775 = vadd.f32 %v1545, %v1774
    %v1776 = vpop.f32.mrb[0].mxu0
    %v1777 = vadd.f32 %v1541, %v1776
    %v1778 = vpop.f32.mrb[0].mxu0
    %v1779 = vadd.f32 %v1545, %v1778
    %1780 = vmatprep.mubr.bf16.mxu0 0
    %1781 = vmatmul.mubr.bf16.gmra.mrb[0].mxu0 %v1499
    %v1782 = vpop.f32.mrb[0].mxu0
    %v1783 = vadd.f32 %v1541, %v1782
    %v1784 = vpop.f32.mrb[0].mxu0
    %v1785 = vadd.f32 %v1545, %v1784
    %v1786 = vpop.f32.mrb[0].mxu0
    %v1787 = vadd.f32 %v1541, %v1786
    %v1788 = vpop.f32.mrb[0].mxu0
    %v1789 = vadd.f32 %v1545, %v1788
    %1790 = vmatprep.mubr.bf16.mxu0 0
    %1791 = vmatmul.mubr.bf16.gmra.mrb[0].mxu0 %v1500
    %v1792 = vpop.f32.mrb[0].mxu0
    %v1793 = vadd.f32 %v1541, %v1792
    %v1794 = vpop.f32.mrb[0].mxu0
    %v1795 = vadd.f32 %v1545, %v1794
    %v1796 = vpop.f32.mrb[0].mxu0
    %v1797 = vadd.f32 %v1541, %v1796
    %v1798 = vpop.f32.mrb[0].mxu0
    %v1799 = vadd.f32 %v1545, %v1798
    %1800 = vmatprep.mubr.bf16.mxu0 0
    %1801 = vmatmul.mubr.bf16.gmra.mrb[0].mxu0 %v1501
    %v1802 = vpop.f32.mrb[0].mxu0
    %v1803 = vadd.f32 %v1541, %v1802
    %v1804 = vpop.f32.mrb[0].mxu0
    %v1805 = vadd.f32 %v1545, %v1804
    %v1806 = vpop.f32.mrb[0].mxu0
    %v1807 = vadd.f32 %v1541, %v1806
    %v1808 = vpop.f32.mrb[0].mxu0
    %v1809 = vadd.f32 %v1545, %v1808
    %1810 = vmatprep.mubr.bf16.mxu0 0
    %1811 = vmatmul.mubr.bf16.gmra.mrb[0].mxu0 %v1502
    %v1812 = vpop.f32.mrb[0].mxu0
    %v1813 = vadd.f32 %v1541, %v1812
    %v1814 = vpop.f32.mrb[0].mxu0
    %v1815 = vadd.f32 %v1545, %v1814
    %v1816 = vpop.f32.mrb[0].mxu0
    %v1817 = vadd.f32 %v1541, %v1816
    %v1818 = vpop.f32.mrb[0].mxu0
    %v1819 = vadd.f32 %v1545, %v1818
    %1820 = vmatprep.mubr.bf16.mxu0 0
    %1821 = vmatmul.mubr.bf16.gmra.mrb[0].mxu0 %v1503
    %v1822 = vpop.f32.mrb[0].mxu0
    %v1823 = vadd.f32 %v1541, %v1822
    %v1824 = vpop.f32.mrb[0].mxu0
    %v1825 = vadd.f32 %v1545, %v1824
    %v1826 = vpop.f32.mrb[0].mxu0
    %v1827 = vadd.f32 %v1541, %v1826
    %v1828 = vpop.f32.mrb[0].mxu0
    %v1829 = vadd.f32 %v1545, %v1828
    %1830 = vdwg.mxu0
    %1831 = vmatprep.subr.bf16.mxu0 %v1657
    %1832 = vmatpush1.bf16.msra.mxu0 %v1656
    %1833 = vmatprep.subr.bf16.mxu0 %v1661
    %1834 = vmatpush1.bf16.msra.mxu0 %v1660
    %1835 = vmatprep.subr.bf16.mxu0 %v1665
    %1836 = vmatpush1.bf16.msra.mxu0 %v1664
    %1837 = vmatprep.subr.bf16.mxu0 %v1669
    %1838 = vmatpush1.bf16.msra.mxu0 %v1668
    %1839 = vmatprep.subr.bf16.mxu0 %v1673
    %1840 = vmatpush1.bf16.msra.mxu0 %v1672
    %1841 = vmatprep.subr.bf16.mxu0 %v1677
    %1842 = vmatpush1.bf16.msra.mxu0 %v1676
    %1843 = vmatprep.subr.bf16.mxu0 %v1681
    %1844 = vmatpush1.bf16.msra.mxu0 %v1680
    %1845 = vmatprep.subr.bf16.mxu0 %v1685
    %1846 = vmatpush1.bf16.msra.mxu0 %v1684
    %1847 = vmatprep.subr.bf16.mxu0 0
    %1848 = vmatpush1.bf16.msra.mxu0 0
    %1849 = vmatprep.subr.bf16.mxu0 0
    %1850 = vmatpush1.bf16.msra.mxu0 0
    %1851 = vmatprep.subr.bf16.mxu0 0
    %1852 = vmatpush1.bf16.msra.mxu0 0
    %1853 = vmatprep.subr.bf16.mxu0 0
    %1854 = vmatpush1.bf16.msra.mxu0 0
    %1855 = vmatprep.subr.bf16.mxu0 0
    %1856 = vmatpush1.bf16.msra.mxu0 0
    %1857 = vmatprep.subr.bf16.mxu0 0
    %1858 = vmatpush1.bf16.msra.mxu0 0
    %1859 = vmatprep.subr.bf16.mxu0 0
    %1860 = vmatpush1.bf16.msra.mxu0 0
    %1861 = vmatprep.subr.bf16.mxu0 0
    %1862 = vmatpush1.bf16.msra.mxu0 0
    %1863 = vmatprep.mubr.bf16.mxu0 0
    %1864 = vmatmul.mubr.bf16.gmra.mrb[0].mxu0 %v1496
    %v1865 = vpop.f32.mrb[0].mxu0
    %v1866 = vadd.f32 %v1549, %v1865
    %v1867 = vpop.f32.mrb[0].mxu0
    %v1868 = vadd.f32 %v1553, %v1867
    %v1869 = vpop.f32.mrb[0].mxu0
    %v1870 = vadd.f32 %v1549, %v1869
    %v1871 = vpop.f32.mrb[0].mxu0
    %v1872 = vadd.f32 %v1553, %v1871
    %1873 = vmatprep.mubr.bf16.mxu0 0
    %1874 = vmatmul.mubr.bf16.gmra.mrb[0].mxu0 %v1497
    %v1875 = vpop.f32.mrb[0].mxu0
    %v1876 = vadd.f32 %v1549, %v1875
    %v1877 = vpop.f32.mrb[0].mxu0
    %v1878 = vadd.f32 %v1553, %v1877
    %v1879 = vpop.f32.mrb[0].mxu0
    %v1880 = vadd.f32 %v1549, %v1879
    %v1881 = vpop.f32.mrb[0].mxu0
    %v1882 = vadd.f32 %v1553, %v1881
    %1883 = vmatprep.mubr.bf16.mxu0 0
    %1884 = vmatmul.mubr.bf16.gmra.mrb[0].mxu0 %v1498
    %v1885 = vpop.f32.mrb[0].mxu0
    %v1886 = vadd.f32 %v1549, %v1885
    %v1887 = vpop.f32.mrb[0].mxu0
    %v1888 = vadd.f32 %v1553, %v1887
    %v1889 = vpop.f32.mrb[0].mxu0
    %v1890 = vadd.f32 %v1549, %v1889
    %v1891 = vpop.f32.mrb[0].mxu0
    %v1892 = vadd.f32 %v1553, %v1891
    %1893 = vmatprep.mubr.bf16.mxu0 0
    %1894 = vmatmul.mubr.bf16.gmra.mrb[0].mxu0 %v1499
    %v1895 = vpop.f32.mrb[0].mxu0
    %v1896 = vadd.f32 %v1549, %v1895
    %v1897 = vpop.f32.mrb[0].mxu0
    %v1898 = vadd.f32 %v1553, %v1897
    %v1899 = vpop.f32.mrb[0].mxu0
    %v1900 = vadd.f32 %v1549, %v1899
    %v1901 = vpop.f32.mrb[0].mxu0
    %v1902 = vadd.f32 %v1553, %v1901
    %1903 = vmatprep.mubr.bf16.mxu0 0
    %1904 = vmatmul.mubr.bf16.gmra.mrb[0].mxu0 %v1500
    %v1905 = vpop.f32.mrb[0].mxu0
    %v1906 = vadd.f32 %v1549, %v1905
    %v1907 = vpop.f32.mrb[0].mxu0
    %v1908 = vadd.f32 %v1553, %v1907
    %v1909 = vpop.f32.mrb[0].mxu0
    %v1910 = vadd.f32 %v1549, %v1909
    %v1911 = vpop.f32.mrb[0].mxu0
    %v1912 = vadd.f32 %v1553, %v1911
    %1913 = vmatprep.mubr.bf16.mxu0 0
    %1914 = vmatmul.mubr.bf16.gmra.mrb[0].mxu0 %v1501
    %v1915 = vpop.f32.mrb[0].mxu0
    %v1916 = vadd.f32 %v1549, %v1915
    %v1917 = vpop.f32.mrb[0].mxu0
    %v1918 = vadd.f32 %v1553, %v1917
    %v1919 = vpop.f32.mrb[0].mxu0
    %v1920 = vadd.f32 %v1549, %v1919
    %v1921 = vpop.f32.mrb[0].mxu0
    %v1922 = vadd.f32 %v1553, %v1921
    %1923 = vmatprep.mubr.bf16.mxu0 0
    %1924 = vmatmul.mubr.bf16.gmra.mrb[0].mxu0 %v1502
    %v1925 = vpop.f32.mrb[0].mxu0
    %v1926 = vadd.f32 %v1549, %v1925
    %v1927 = vpop.f32.mrb[0].mxu0
    %v1928 = vadd.f32 %v1553, %v1927
    %v1929 = vpop.f32.mrb[0].mxu0
    %v1930 = vadd.f32 %v1549, %v1929
    %v1931 = vpop.f32.mrb[0].mxu0
    %v1932 = vadd.f32 %v1553, %v1931
    %1933 = vmatprep.mubr.bf16.mxu0 0
    %1934 = vmatmul.mubr.bf16.gmra.mrb[0].mxu0 %v1503
    %v1935 = vpop.f32.mrb[0].mxu0
    %v1936 = vadd.f32 %v1549, %v1935
    %v1937 = vpop.f32.mrb[0].mxu0
    %v1938 = vadd.f32 %v1553, %v1937
    %v1939 = vpop.f32.mrb[0].mxu0
    %v1940 = vadd.f32 %v1549, %v1939
    %v1941 = vpop.f32.mrb[0].mxu0
    %v1942 = vadd.f32 %v1553, %v1941
    %1943 = vdwg.mxu0
    %v1944 = vpack.c.bf16 %v1757, %v1753
    %v1945 = vpack.c.bf16 %v1759, %v1755
    %v1946 = vpack.c.bf16 %v1870, %v1866
    %v1947 = vpack.c.bf16 %v1872, %v1868
    %v1948 = vpack.c.bf16 %v1767, %v1763
    %v1949 = vpack.c.bf16 %v1769, %v1765
    %v1950 = vpack.c.bf16 %v1880, %v1876
    %v1951 = vpack.c.bf16 %v1882, %v1878
    %v1952 = vpack.c.bf16 %v1777, %v1773
    %v1953 = vpack.c.bf16 %v1779, %v1775
    %v1954 = vpack.c.bf16 %v1890, %v1886
    %v1955 = vpack.c.bf16 %v1892, %v1888
    %v1956 = vpack.c.bf16 %v1787, %v1783
    %v1957 = vpack.c.bf16 %v1789, %v1785
    %v1958 = vpack.c.bf16 %v1900, %v1896
    %v1959 = vpack.c.bf16 %v1902, %v1898
    %v1960 = vpack.c.bf16 %v1797, %v1793
    %v1961 = vpack.c.bf16 %v1799, %v1795
    %v1962 = vpack.c.bf16 %v1910, %v1906
    %v1963 = vpack.c.bf16 %v1912, %v1908
    %v1964 = vpack.c.bf16 %v1807, %v1803
    %v1965 = vpack.c.bf16 %v1809, %v1805
    %v1966 = vpack.c.bf16 %v1920, %v1916
    %v1967 = vpack.c.bf16 %v1922, %v1918
    %v1968 = vpack.c.bf16 %v1817, %v1813
    %v1969 = vpack.c.bf16 %v1819, %v1815
    %v1970 = vpack.c.bf16 %v1930, %v1926
    %v1971 = vpack.c.bf16 %v1932, %v1928
    %v1972 = vpack.c.bf16 %v1827, %v1823
    %v1973 = vpack.c.bf16 %v1829, %v1825
    %v1974 = vpack.c.bf16 %v1940, %v1936
    %v1975 = vpack.c.bf16 %v1942, %v1938
    %1976 = vst [vmem:[#allocation3] sm:$0xff] %v1944
    %1977 = vst [vmem:[#allocation3 + $0x8] sm:$0xff] %v1945
    %1978 = vst [vmem:[#allocation3 + $0x10] sm:$0xff] %v1946
    %1979 = vst [vmem:[#allocation3 + $0x18] sm:$0xff] %v1947
    %1980 = vst [vmem:[#allocation3 + $0x20] sm:$0xff] %v1948
    %1981 = vst [vmem:[#allocation3 + $0x28] sm:$0xff] %v1949
    %1982 = vst [vmem:[#allocation3 + $0x30] sm:$0xff] %v1950
    %1983 = vst [vmem:[#allocation3 + $0x38] sm:$0xff] %v1951
    %1984 = vst [vmem:[#allocation3 + $0x40] sm:$0xff] %v1952
    %1985 = vst [vmem:[#allocation3 + $0x48] sm:$0xff] %v1953
    %1986 = vst [vmem:[#allocation3 + $0x50] sm:$0xff] %v1954
    %1987 = vst [vmem:[#allocation3 + $0x58] sm:$0xff] %v1955
    %1988 = vst [vmem:[#allocation3 + $0x60] sm:$0xff] %v1956
    %1989 = vst [vmem:[#allocation3 + $0x68] sm:$0xff] %v1957
    %1990 = vst [vmem:[#allocation3 + $0x70] sm:$0xff] %v1958
    %1991 = vst [vmem:[#allocation3 + $0x78] sm:$0xff] %v1959
    %1992 = vst [vmem:[#allocation3 + $0x80] sm:$0xff] %v1960
    %1993 = vst [vmem:[#allocation3 + $0x88] sm:$0xff] %v1961
    %1994 = vst [vmem:[#allocation3 + $0x90] sm:$0xff] %v1962
    %1995 = vst [vmem:[#allocation3 + $0x98] sm:$0xff] %v1963
    %1996 = vst [vmem:[#allocation3 + $0xa0] sm:$0xff] %v1964
    %1997 = vst [vmem:[#allocation3 + $0xa8] sm:$0xff] %v1965
    %1998 = vst [vmem:[#allocation3 + $0xb0] sm:$0xff] %v1966
    %1999 = vst [vmem:[#allocation3 + $0xb8] sm:$0xff] %v1967
    %2000 = vst [vmem:[#allocation3 + $0xc0] sm:$0xff] %v1968
    %2001 = vst [vmem:[#allocation3 + $0xc8] sm:$0xff] %v1969
    %2002 = vst [vmem:[#allocation3 + $0xd0] sm:$0xff] %v1970
    %2003 = vst [vmem:[#allocation3 + $0xd8] sm:$0xff] %v1971
    %2004 = vst [vmem:[#allocation3 + $0xe0] sm:$0xff] %v1972
    %2005 = vst [vmem:[#allocation3 + $0xe8] sm:$0xff] %v1973
    %2006 = vst [vmem:[#allocation3 + $0xf0] sm:$0xff] %v1974
    %2007 = vst [vmem:[#allocation3 + $0xf8] sm:$0xff] %v1975
    %s2008 = scalar_lea.vmem %s2, 256
    %v2009 = vld [vmem:[%s2008] sm:$0xff]
    %v2010 = vld [vmem:[%s2008 + $0x8] sm:$0xff]
    %v2011 = vld [vmem:[%s2008 + $0x10] sm:$0xff]
    %v2012 = vld [vmem:[%s2008 + $0x18] sm:$0xff]
    %v2013 = vld [vmem:[%s2008 + $0x20] sm:$0xff]
    %v2014 = vld [vmem:[%s2008 + $0x28] sm:$0xff]
    %v2015 = vld [vmem:[%s2008 + $0x30] sm:$0xff]
    %v2016 = vld [vmem:[%s2008 + $0x38] sm:$0xff]
    %v2017 = vld [vmem:[%s2008 + $0x40] sm:$0xff]
    %v2018 = vld [vmem:[%s2008 + $0x48] sm:$0xff]
    %v2019 = vld [vmem:[%s2008 + $0x50] sm:$0xff]
    %v2020 = vld [vmem:[%s2008 + $0x58] sm:$0xff]
    %v2021 = vld [vmem:[%s2008 + $0x60] sm:$0xff]
    %v2022 = vld [vmem:[%s2008 + $0x68] sm:$0xff]
    %v2023 = vld [vmem:[%s2008 + $0x70] sm:$0xff]
    %v2024 = vld [vmem:[%s2008 + $0x78] sm:$0xff]
    %v2025 = vld [vmem:[%s2008 + $0x80] sm:$0xff]
    %v2026 = vld [vmem:[%s2008 + $0x88] sm:$0xff]
    %v2027 = vld [vmem:[%s2008 + $0x90] sm:$0xff]
    %v2028 = vld [vmem:[%s2008 + $0x98] sm:$0xff]
    %v2029 = vld [vmem:[%s2008 + $0xa0] sm:$0xff]
    %v2030 = vld [vmem:[%s2008 + $0xa8] sm:$0xff]
    %v2031 = vld [vmem:[%s2008 + $0xb0] sm:$0xff]
    %v2032 = vld [vmem:[%s2008 + $0xb8] sm:$0xff]
    %v2033 = vld [vmem:[%s2008 + $0xc0] sm:$0xff]
    %v2034 = vld [vmem:[%s2008 + $0xc8] sm:$0xff]
    %v2035 = vld [vmem:[%s2008 + $0xd0] sm:$0xff]
    %v2036 = vld [vmem:[%s2008 + $0xd8] sm:$0xff]
    %v2037 = vld [vmem:[%s2008 + $0xe0] sm:$0xff]
    %v2038 = vld [vmem:[%s2008 + $0xe8] sm:$0xff]
    %v2039 = vld [vmem:[%s2008 + $0xf0] sm:$0xff]
    %v2040 = vld [vmem:[%s2008 + $0xf8] sm:$0xff]
    %v2041 = vld [vmem:[#allocation3] sm:$0xff]
    %v2042 = vld [vmem:[#allocation3 + $0x8] sm:$0xff]
    %v2043 = vld [vmem:[#allocation3 + $0x10] sm:$0xff]
    %v2044 = vld [vmem:[#allocation3 + $0x18] sm:$0xff]
    %v2077 = vunpack.c.l.b16 %v2009
    %v2078 = vunpack.c.h.b16 %v2009
    %v2079 = vunpack.c.l.b16 %v2010
    %v2080 = vunpack.c.h.b16 %v2010
    %v2081 = vunpack.c.l.b16 %v2011
    %v2082 = vunpack.c.h.b16 %v2011
    %v2083 = vunpack.c.l.b16 %v2012
    %v2084 = vunpack.c.h.b16 %v2012
    %v2085 = vunpack.c.l.b16 %v2013
    %v2086 = vunpack.c.h.b16 %v2013
    %v2087 = vunpack.c.l.b16 %v2014
    %v2088 = vunpack.c.h.b16 %v2014
    %v2089 = vunpack.c.l.b16 %v2015
    %v2090 = vunpack.c.h.b16 %v2015
    %v2091 = vunpack.c.l.b16 %v2016
    %v2092 = vunpack.c.h.b16 %v2016
    %v2093 = vunpack.c.l.b16 %v2017
    %v2094 = vunpack.c.h.b16 %v2017
    %v2095 = vunpack.c.l.b16 %v2018
    %v2096 = vunpack.c.h.b16 %v2018
    %v2097 = vunpack.c.l.b16 %v2019
    %v2098 = vunpack.c.h.b16 %v2019
    %v2099 = vunpack.c.l.b16 %v2020
    %v2100 = vunpack.c.h.b16 %v2020
    %v2101 = vunpack.c.l.b16 %v2021
    %v2102 = vunpack.c.h.b16 %v2021
    %v2103 = vunpack.c.l.b16 %v2022
    %v2104 = vunpack.c.h.b16 %v2022
    %v2105 = vunpack.c.l.b16 %v2023
    %v2106 = vunpack.c.h.b16 %v2023
    %v2107 = vunpack.c.l.b16 %v2024
    %v2108 = vunpack.c.h.b16 %v2024
    %v2109 = vunpack.c.l.b16 %v2025
    %v2110 = vunpack.c.h.b16 %v2025
    %v2111 = vunpack.c.l.b16 %v2026
    %v2112 = vunpack.c.h.b16 %v2026
    %v2113 = vunpack.c.l.b16 %v2027
    %v2114 = vunpack.c.h.b16 %v2027
    %v2115 = vunpack.c.l.b16 %v2028
    %v2116 = vunpack.c.h.b16 %v2028
    %v2117 = vunpack.c.l.b16 %v2029
    %v2118 = vunpack.c.h.b16 %v2029
    %v2119 = vunpack.c.l.b16 %v2030
    %v2120 = vunpack.c.h.b16 %v2030
    %v2121 = vunpack.c.l.b16 %v2031
    %v2122 = vunpack.c.h.b16 %v2031
    %v2123 = vunpack.c.l.b16 %v2032
    %v2124 = vunpack.c.h.b16 %v2032
    %v2125 = vunpack.c.l.b16 %v2033
    %v2126 = vunpack.c.h.b16 %v2033
    %v2127 = vunpack.c.l.b16 %v2034
    %v2128 = vunpack.c.h.b16 %v2034
    %v2129 = vunpack.c.l.b16 %v2035
    %v2130 = vunpack.c.h.b16 %v2035
    %v2131 = vunpack.c.l.b16 %v2036
    %v2132 = vunpack.c.h.b16 %v2036
    %v2133 = vunpack.c.l.b16 %v2037
    %v2134 = vunpack.c.h.b16 %v2037
    %v2135 = vunpack.c.l.b16 %v2038
    %v2136 = vunpack.c.h.b16 %v2038
    %v2137 = vunpack.c.l.b16 %v2039
    %v2138 = vunpack.c.h.b16 %v2039
    %v2139 = vunpack.c.l.b16 %v2040
    %v2140 = vunpack.c.h.b16 %v2040
    %v2141 = vpack.c.b16 %v2081, %v2077
    %v2142 = vpack.c.b16 %v2082, %v2078
    %v2143 = vpack.c.b16 %v2083, %v2079
    %v2144 = vpack.c.b16 %v2084, %v2080
    %v2145 = vpack.c.b16 %v2089, %v2085
    %v2146 = vpack.c.b16 %v2090, %v2086
    %v2147 = vpack.c.b16 %v2091, %v2087
    %v2148 = vpack.c.b16 %v2092, %v2088
    %v2149 = vpack.c.b16 %v2097, %v2093
    %v2150 = vpack.c.b16 %v2098, %v2094
    %v2151 = vpack.c.b16 %v2099, %v2095
    %v2152 = vpack.c.b16 %v2100, %v2096
    %v2153 = vpack.c.b16 %v2105, %v2101
    %v2154 = vpack.c.b16 %v2106, %v2102
    %v2155 = vpack.c.b16 %v2107, %v2103
    %v2156 = vpack.c.b16 %v2108, %v2104
    %v2157 = vpack.c.b16 %v2113, %v2109
    %v2158 = vpack.c.b16 %v2114, %v2110
    %v2159 = vpack.c.b16 %v2115, %v2111
    %v2160 = vpack.c.b16 %v2116, %v2112
    %v2161 = vpack.c.b16 %v2121, %v2117
    %v2162 = vpack.c.b16 %v2122, %v2118
    %v2163 = vpack.c.b16 %v2123, %v2119
    %v2164 = vpack.c.b16 %v2124, %v2120
    %v2165 = vpack.c.b16 %v2129, %v2125
    %v2166 = vpack.c.b16 %v2130, %v2126
    %v2167 = vpack.c.b16 %v2131, %v2127
    %v2168 = vpack.c.b16 %v2132, %v2128
    %v2169 = vpack.c.b16 %v2137, %v2133
    %v2170 = vpack.c.b16 %v2138, %v2134
    %v2171 = vpack.c.b16 %v2139, %v2135
    %v2172 = vpack.c.b16 %v2140, %v2136
    %2205 = vmatprep.subr.bf16.mxu0 %v2142
    %2206 = vmatpush1.bf16.msra.mxu0 %v2141
    %2207 = vmatprep.subr.bf16.mxu0 %v2146
    %2208 = vmatpush1.bf16.msra.mxu0 %v2145
    %2209 = vmatprep.subr.bf16.mxu0 %v2150
    %2210 = vmatpush1.bf16.msra.mxu0 %v2149
    %2211 = vmatprep.subr.bf16.mxu0 %v2154
    %2212 = vmatpush1.bf16.msra.mxu0 %v2153
    %2213 = vmatprep.subr.bf16.mxu0 %v2158
    %2214 = vmatpush1.bf16.msra.mxu0 %v2157
    %2215 = vmatprep.subr.bf16.mxu0 %v2162
    %2216 = vmatpush1.bf16.msra.mxu0 %v2161
    %2217 = vmatprep.subr.bf16.mxu0 %v2166
    %2218 = vmatpush1.bf16.msra.mxu0 %v2165
    %2219 = vmatprep.subr.bf16.mxu0 %v2170
    %2220 = vmatpush1.bf16.msra.mxu0 %v2169
    %2221 = vmatprep.subr.bf16.mxu0 0
    %2222 = vmatpush1.bf16.msra.mxu0 0
    %2223 = vmatprep.subr.bf16.mxu0 0
    %2224 = vmatpush1.bf16.msra.mxu0 0
    %2225 = vmatprep.subr.bf16.mxu0 0
    %2226 = vmatpush1.bf16.msra.mxu0 0
    %2227 = vmatprep.subr.bf16.mxu0 0
    %2228 = vmatpush1.bf16.msra.mxu0 0
    %2229 = vmatprep.subr.bf16.mxu0 0
    %2230 = vmatpush1.bf16.msra.mxu0 0
    %2231 = vmatprep.subr.bf16.mxu0 0
    %2232 = vmatpush1.bf16.msra.mxu0 0
    %2233 = vmatprep.subr.bf16.mxu0 0
    %2234 = vmatpush1.bf16.msra.mxu0 0
    %2235 = vmatprep.subr.bf16.mxu0 0
    %2236 = vmatpush1.bf16.msra.mxu0 0
    %2237 = vmatprep.mubr.bf16.mxu0 0
    %2238 = vmatmul.mubr.bf16.gmra.mrb[0].mxu0 0
    %v2239 = vpop.f32.mrb[0].mxu0
    %v2240 = vadd.f32 0.0, %v2239
    %v2241 = vpop.f32.mrb[0].mxu0
    %v2242 = vadd.f32 0.0, %v2241
    %v2243 = vpop.f32.mrb[0].mxu0
    %v2244 = vadd.f32 0.0, %v2243
    %v2245 = vpop.f32.mrb[0].mxu0
    %v2246 = vadd.f32 0.0, %v2245
    %2247 = vdwg.mxu0
    %2248 = vmatprep.subr.bf16.mxu0 %v2144
    %2249 = vmatpush1.bf16.msra.mxu0 %v2143
    %2250 = vmatprep.subr.bf16.mxu0 %v2148
    %2251 = vmatpush1.bf16.msra.mxu0 %v2147
    %2252 = vmatprep.subr.bf16.mxu0 %v2152
    %2253 = vmatpush1.bf16.msra.mxu0 %v2151
    %2254 = vmatprep.subr.bf16.mxu0 %v2156
    %2255 = vmatpush1.bf16.msra.mxu0 %v2155
    %2256 = vmatprep.subr.bf16.mxu0 %v2160
    %2257 = vmatpush1.bf16.msra.mxu0 %v2159
    %2258 = vmatprep.subr.bf16.mxu0 %v2164
    %2259 = vmatpush1.bf16.msra.mxu0 %v2163
    %2260 = vmatprep.subr.bf16.mxu0 %v2168
    %2261 = vmatpush1.bf16.msra.mxu0 %v2167
    %2262 = vmatprep.subr.bf16.mxu0 %v2172
    %2263 = vmatpush1.bf16.msra.mxu0 %v2171
    %2264 = vmatprep.subr.bf16.mxu0 0
    %2265 = vmatpush1.bf16.msra.mxu0 0
    %2266 = vmatprep.subr.bf16.mxu0 0
    %2267 = vmatpush1.bf16.msra.mxu0 0
    %2268 = vmatprep.subr.bf16.mxu0 0
    %2269 = vmatpush1.bf16.msra.mxu0 0
    %2270 = vmatprep.subr.bf16.mxu0 0
    %2271 = vmatpush1.bf16.msra.mxu0 0
    %2272 = vmatprep.subr.bf16.mxu0 0
    %2273 = vmatpush1.bf16.msra.mxu0 0
    %2274 = vmatprep.subr.bf16.mxu0 0
    %2275 = vmatpush1.bf16.msra.mxu0 0
    %2276 = vmatprep.subr.bf16.mxu0 0
    %2277 = vmatpush1.bf16.msra.mxu0 0
    %2278 = vmatprep.subr.bf16.mxu0 0
    %2279 = vmatpush1.bf16.msra.mxu0 0
    %2280 = vmatprep.mubr.bf16.mxu0 0
    %2281 = vmatmul.mubr.bf16.gmra.mrb[0].mxu0 0
    %v2282 = vpop.f32.mrb[0].mxu0
    %v2283 = vadd.f32 0.0, %v2282
    %v2284 = vpop.f32.mrb[0].mxu0
    %v2285 = vadd.f32 0.0, %v2284
    %v2286 = vpop.f32.mrb[0].mxu0
    %v2287 = vadd.f32 0.0, %v2286
    %v2288 = vpop.f32.mrb[0].mxu0
    %v2289 = vadd.f32 0.0, %v2288
    %2290 = vdwg.mxu0
    %v2291 = vunpack.c.l.bf16 %v2041
    %v2292 = vunpack.c.l.bf16 %v2042
    %v2293 = vunpack.c.l.bf16 %v2043
    %v2294 = vunpack.c.l.bf16 %v2044
    %v2295 = vunpack.c.h.bf16 %v2041
    %v2296 = vunpack.c.h.bf16 %v2042
    %v2297 = vunpack.c.h.bf16 %v2043
    %v2298 = vunpack.c.h.bf16 %v2044
    %v2299 = vadd.f32 %v2291, %v2240
    %v2300 = vadd.f32 %v2292, %v2242
    %v2301 = vadd.f32 %v2293, %v2283
    %v2302 = vadd.f32 %v2294, %v2285
    %v2303 = vadd.f32 %v2295, %v2244
    %v2304 = vadd.f32 %v2296, %v2246
    %v2305 = vadd.f32 %v2297, %v2287
    %v2306 = vadd.f32 %v2298, %v2289
    %v2307 = vxor.u32 %v2299, 2147483648
    %v2308 = vxor.u32 %v2303, 2147483648
    %v2309 = vmul.f32 %v2307, 1.442695
    %v2310 = vpow.pop %v2309
    %v2311 = vmul.f32 %v2308, 1.442695
    %v2312 = vpow.pop %v2311
    %v2313 = vadd.f32 %v2310, 1.0
    %v2314 = vadd.f32 %v2312, 1.0
    %v2315 = vrcp.pop %v2313
    %v2316 = vmul.f32 1.0, %v2315
    %v2317 = vrcp.pop %v2314
    %v2318 = vmul.f32 1.0, %v2317
    %v2319 = vxor.u32 %v2300, 2147483648
    %v2320 = vxor.u32 %v2304, 2147483648
    %v2321 = vmul.f32 %v2319, 1.442695
    %v2322 = vpow.pop %v2321
    %v2323 = vmul.f32 %v2320, 1.442695
    %v2324 = vpow.pop %v2323
    %v2325 = vadd.f32 %v2322, 1.0
    %v2326 = vadd.f32 %v2324, 1.0
    %v2327 = vrcp.pop %v2325
    %v2328 = vmul.f32 1.0, %v2327
    %v2329 = vrcp.pop %v2326
    %v2330 = vmul.f32 1.0, %v2329
    %v2331 = vtanh.pop %v2301
    %v2332 = vtanh.pop %v2305
    %v2333 = vxor.u32 %v2302, 2147483648
    %v2334 = vxor.u32 %v2306, 2147483648
    %v2335 = vmul.f32 %v2333, 1.442695
    %v2336 = vpow.pop %v2335
    %v2337 = vmul.f32 %v2334, 1.442695
    %v2338 = vpow.pop %v2337
    %v2339 = vadd.f32 %v2336, 1.0
    %v2340 = vadd.f32 %v2338, 1.0
    %v2341 = vrcp.pop %v2339
    %v2342 = vmul.f32 1.0, %v2341
    %v2343 = vrcp.pop %v2340
    %v2344 = vmul.f32 1.0, %v2343
    %v2345 = vmul.f32 %v2328, 0.0
    %v2346 = vmul.f32 %v2330, 0.0
    %v2347 = vmul.f32 %v2316, %v2331
    %v2348 = vmul.f32 %v2318, %v2332
    %v2349 = vadd.f32 %v2345, %v2347
    %v2350 = vadd.f32 %v2346, %v2348
    %v2351 = vtanh.pop %v2349
    %v2352 = vtanh.pop %v2350
    %v2353 = vmul.f32 %v2342, %v2351
    %v2354 = vmul.f32 %v2344, %v2352
    %s2355 = scalar_lea.vmem [#allocation3], 32
    %v2356 = vld [vmem:[%s2355] sm:$0xff]
    %v2357 = vld [vmem:[%s2355 + $0x8] sm:$0xff]
    %v2358 = vld [vmem:[%s2355 + $0x10] sm:$0xff]
    %v2359 = vld [vmem:[%s2355 + $0x18] sm:$0xff]
    %v2360 = vpack.c.bf16 %v2354, %v2353
    %2361 = vmatprep.subr.bf16.mxu0 %v2142
    %2362 = vmatpush1.bf16.msra.mxu0 %v2141
    %2363 = vmatprep.subr.bf16.mxu0 %v2146
    %2364 = vmatpush1.bf16.msra.mxu0 %v2145
    %2365 = vmatprep.subr.bf16.mxu0 %v2150
    %2366 = vmatpush1.bf16.msra.mxu0 %v2149
    %2367 = vmatprep.subr.bf16.mxu0 %v2154
    %2368 = vmatpush1.bf16.msra.mxu0 %v2153
    %2369 = vmatprep.subr.bf16.mxu0 %v2158
    %2370 = vmatpush1.bf16.msra.mxu0 %v2157
    %2371 = vmatprep.subr.bf16.mxu0 %v2162
    %2372 = vmatpush1.bf16.msra.mxu0 %v2161
    %2373 = vmatprep.subr.bf16.mxu0 %v2166
    %2374 = vmatpush1.bf16.msra.mxu0 %v2165
    %2375 = vmatprep.subr.bf16.mxu0 %v2170
    %2376 = vmatpush1.bf16.msra.mxu0 %v2169
    %2377 = vmatprep.subr.bf16.mxu0 0
    %2378 = vmatpush1.bf16.msra.mxu0 0
    %2379 = vmatprep.subr.bf16.mxu0 0
    %2380 = vmatpush1.bf16.msra.mxu0 0
    %2381 = vmatprep.subr.bf16.mxu0 0
    %2382 = vmatpush1.bf16.msra.mxu0 0
    %2383 = vmatprep.subr.bf16.mxu0 0
    %2384 = vmatpush1.bf16.msra.mxu0 0
    %2385 = vmatprep.subr.bf16.mxu0 0
    %2386 = vmatpush1.bf16.msra.mxu0 0
    %2387 = vmatprep.subr.bf16.mxu0 0
    %2388 = vmatpush1.bf16.msra.mxu0 0
    %2389 = vmatprep.subr.bf16.mxu0 0
    %2390 = vmatpush1.bf16.msra.mxu0 0
    %2391 = vmatprep.subr.bf16.mxu0 0
    %2392 = vmatpush1.bf16.msra.mxu0 0
    %2393 = vmatprep.mubr.bf16.mxu0 0
    %2394 = vmatmul.mubr.bf16.gmra.mrb[0].mxu0 %v2360
    %v2395 = vpop.f32.mrb[0].mxu0
    %v2396 = vadd.f32 0.0, %v2395
    %v2397 = vpop.f32.mrb[0].mxu0
    %v2398 = vadd.f32 0.0, %v2397
    %v2399 = vpop.f32.mrb[0].mxu0
    %v2400 = vadd.f32 0.0, %v2399
    %v2401 = vpop.f32.mrb[0].mxu0
    %v2402 = vadd.f32 0.0, %v2401
    %2403 = vdwg.mxu0
    %2404 = vmatprep.subr.bf16.mxu0 %v2144
    %2405 = vmatpush1.bf16.msra.mxu0 %v2143
    %2406 = vmatprep.subr.bf16.mxu0 %v2148
    %2407 = vmatpush1.bf16.msra.mxu0 %v2147
    %2408 = vmatprep.subr.bf16.mxu0 %v2152
    %2409 = vmatpush1.bf16.msra.mxu0 %v2151
    %2410 = vmatprep.subr.bf16.mxu0 %v2156
    %2411 = vmatpush1.bf16.msra.mxu0 %v2155
    %2412 = vmatprep.subr.bf16.mxu0 %v2160
    %2413 = vmatpush1.bf16.msra.mxu0 %v2159
    %2414 = vmatprep.subr.bf16.mxu0 %v2164
    %2415 = vmatpush1.bf16.msra.mxu0 %v2163
    %2416 = vmatprep.subr.bf16.mxu0 %v2168
    %2417 = vmatpush1.bf16.msra.mxu0 %v2167
    %2418 = vmatprep.subr.bf16.mxu0 %v2172
    %2419 = vmatpush1.bf16.msra.mxu0 %v2171
    %2420 = vmatprep.subr.bf16.mxu0 0
    %2421 = vmatpush1.bf16.msra.mxu0 0
    %2422 = vmatprep.subr.bf16.mxu0 0
    %2423 = vmatpush1.bf16.msra.mxu0 0
    %2424 = vmatprep.subr.bf16.mxu0 0
    %2425 = vmatpush1.bf16.msra.mxu0 0
    %2426 = vmatprep.subr.bf16.mxu0 0
    %2427 = vmatpush1.bf16.msra.mxu0 0
    %2428 = vmatprep.subr.bf16.mxu0 0
    %2429 = vmatpush1.bf16.msra.mxu0 0
    %2430 = vmatprep.subr.bf16.mxu0 0
    %2431 = vmatpush1.bf16.msra.mxu0 0
    %2432 = vmatprep.subr.bf16.mxu0 0
    %2433 = vmatpush1.bf16.msra.mxu0 0
    %2434 = vmatprep.subr.bf16.mxu0 0
    %2435 = vmatpush1.bf16.msra.mxu0 0
    %2436 = vmatprep.mubr.bf16.mxu0 0
    %2437 = vmatmul.mubr.bf16.gmra.mrb[0].mxu0 %v2360
    %v2438 = vpop.f32.mrb[0].mxu0
    %v2439 = vadd.f32 0.0, %v2438
    %v2440 = vpop.f32.mrb[0].mxu0
    %v2441 = vadd.f32 0.0, %v2440
    %v2442 = vpop.f32.mrb[0].mxu0
    %v2443 = vadd.f32 0.0, %v2442
    %v2444 = vpop.f32.mrb[0].mxu0
    %v2445 = vadd.f32 0.0, %v2444
    %2446 = vdwg.mxu0
    %v2447 = vunpack.c.l.bf16 %v2356
    %v2448 = vunpack.c.l.bf16 %v2357
    %v2449 = vunpack.c.l.bf16 %v2358
    %v2450 = vunpack.c.l.bf16 %v2359
    %v2451 = vunpack.c.h.bf16 %v2356
    %v2452 = vunpack.c.h.bf16 %v2357
    %v2453 = vunpack.c.h.bf16 %v2358
    %v2454 = vunpack.c.h.bf16 %v2359
    %v2455 = vadd.f32 %v2447, %v2396
    %v2456 = vadd.f32 %v2448, %v2398
    %v2457 = vadd.f32 %v2449, %v2439
    %v2458 = vadd.f32 %v2450, %v2441
    %v2459 = vadd.f32 %v2451, %v2400
    %v2460 = vadd.f32 %v2452, %v2402
    %v2461 = vadd.f32 %v2453, %v2443
    %v2462 = vadd.f32 %v2454, %v2445
    %v2463 = vxor.u32 %v2455, 2147483648
    %v2464 = vxor.u32 %v2459, 2147483648
    %v2465 = vmul.f32 %v2463, 1.442695
    %v2466 = vpow.pop %v2465
    %v2467 = vmul.f32 %v2464, 1.442695
    %v2468 = vpow.pop %v2467
    %v2469 = vadd.f32 %v2466, 1.0
    %v2470 = vadd.f32 %v2468, 1.0
    %v2471 = vrcp.pop %v2469
    %v2472 = vmul.f32 1.0, %v2471
    %v2473 = vrcp.pop %v2470
    %v2474 = vmul.f32 1.0, %v2473
    %v2475 = vxor.u32 %v2456, 2147483648
    %v2476 = vxor.u32 %v2460, 2147483648
    %v2477 = vmul.f32 %v2475, 1.442695
    %v2478 = vpow.pop %v2477
    %v2479 = vmul.f32 %v2476, 1.442695
    %v2480 = vpow.pop %v2479
    %v2481 = vadd.f32 %v2478, 1.0
    %v2482 = vadd.f32 %v2480, 1.0
    %v2483 = vrcp.pop %v2481
    %v2484 = vmul.f32 1.0, %v2483
    %v2485 = vrcp.pop %v2482
    %v2486 = vmul.f32 1.0, %v2485
    %v2487 = vtanh.pop %v2457
    %v2488 = vtanh.pop %v2461
    %v2489 = vxor.u32 %v2458, 2147483648
    %v2490 = vxor.u32 %v2462, 2147483648
    %v2491 = vmul.f32 %v2489, 1.442695
    %v2492 = vpow.pop %v2491
    %v2493 = vmul.f32 %v2490, 1.442695
    %v2494 = vpow.pop %v2493
    %v2495 = vadd.f32 %v2492, 1.0
    %v2496 = vadd.f32 %v2494, 1.0
    %v2497 = vrcp.pop %v2495
    %v2498 = vmul.f32 1.0, %v2497
    %v2499 = vrcp.pop %v2496
    %v2500 = vmul.f32 1.0, %v2499
    %v2501 = vmul.f32 %v2484, %v2349
    %v2502 = vmul.f32 %v2486, %v2350
    %v2503 = vmul.f32 %v2472, %v2487
    %v2504 = vmul.f32 %v2474, %v2488
    %v2505 = vadd.f32 %v2501, %v2503
    %v2506 = vadd.f32 %v2502, %v2504
    %v2507 = vtanh.pop %v2505
    %v2508 = vtanh.pop %v2506
    %v2509 = vmul.f32 %v2498, %v2507
    %v2510 = vmul.f32 %v2500, %v2508
    %s2511 = scalar_lea.vmem [#allocation3], 64
    %v2512 = vld [vmem:[%s2511] sm:$0xff]
    %v2513 = vld [vmem:[%s2511 + $0x8] sm:$0xff]
    %v2514 = vld [vmem:[%s2511 + $0x10] sm:$0xff]
    %v2515 = vld [vmem:[%s2511 + $0x18] sm:$0xff]
    %v2516 = vpack.c.bf16 %v2510, %v2509
    %2517 = vmatprep.subr.bf16.mxu0 %v2142
    %2518 = vmatpush1.bf16.msra.mxu0 %v2141
    %2519 = vmatprep.subr.bf16.mxu0 %v2146
    %2520 = vmatpush1.bf16.msra.mxu0 %v2145
    %2521 = vmatprep.subr.bf16.mxu0 %v2150
    %2522 = vmatpush1.bf16.msra.mxu0 %v2149
    %2523 = vmatprep.subr.bf16.mxu0 %v2154
    %2524 = vmatpush1.bf16.msra.mxu0 %v2153
    %2525 = vmatprep.subr.bf16.mxu0 %v2158
    %2526 = vmatpush1.bf16.msra.mxu0 %v2157
    %2527 = vmatprep.subr.bf16.mxu0 %v2162
    %2528 = vmatpush1.bf16.msra.mxu0 %v2161
    %2529 = vmatprep.subr.bf16.mxu0 %v2166
    %2530 = vmatpush1.bf16.msra.mxu0 %v2165
    %2531 = vmatprep.subr.bf16.mxu0 %v2170
    %2532 = vmatpush1.bf16.msra.mxu0 %v2169
    %2533 = vmatprep.subr.bf16.mxu0 0
    %2534 = vmatpush1.bf16.msra.mxu0 0
    %2535 = vmatprep.subr.bf16.mxu0 0
    %2536 = vmatpush1.bf16.msra.mxu0 0
    %2537 = vmatprep.subr.bf16.mxu0 0
    %2538 = vmatpush1.bf16.msra.mxu0 0
    %2539 = vmatprep.subr.bf16.mxu0 0
    %2540 = vmatpush1.bf16.msra.mxu0 0
    %2541 = vmatprep.subr.bf16.mxu0 0
    %2542 = vmatpush1.bf16.msra.mxu0 0
    %2543 = vmatprep.subr.bf16.mxu0 0
    %2544 = vmatpush1.bf16.msra.mxu0 0
    %2545 = vmatprep.subr.bf16.mxu0 0
    %2546 = vmatpush1.bf16.msra.mxu0 0
    %2547 = vmatprep.subr.bf16.mxu0 0
    %2548 = vmatpush1.bf16.msra.mxu0 0
    %2549 = vmatprep.mubr.bf16.mxu0 0
    %2550 = vmatmul.mubr.bf16.gmra.mrb[0].mxu0 %v2516
    %v2551 = vpop.f32.mrb[0].mxu0
    %v2552 = vadd.f32 0.0, %v2551
    %v2553 = vpop.f32.mrb[0].mxu0
    %v2554 = vadd.f32 0.0, %v2553
    %v2555 = vpop.f32.mrb[0].mxu0
    %v2556 = vadd.f32 0.0, %v2555
    %v2557 = vpop.f32.mrb[0].mxu0
    %v2558 = vadd.f32 0.0, %v2557
    %2559 = vdwg.mxu0
    %2560 = vmatprep.subr.bf16.mxu0 %v2144
    %2561 = vmatpush1.bf16.msra.mxu0 %v2143
    %2562 = vmatprep.subr.bf16.mxu0 %v2148
    %2563 = vmatpush1.bf16.msra.mxu0 %v2147
    %2564 = vmatprep.subr.bf16.mxu0 %v2152
    %2565 = vmatpush1.bf16.msra.mxu0 %v2151
    %2566 = vmatprep.subr.bf16.mxu0 %v2156
    %2567 = vmatpush1.bf16.msra.mxu0 %v2155
    %2568 = vmatprep.subr.bf16.mxu0 %v2160
    %2569 = vmatpush1.bf16.msra.mxu0 %v2159
    %2570 = vmatprep.subr.bf16.mxu0 %v2164
    %2571 = vmatpush1.bf16.msra.mxu0 %v2163
    %2572 = vmatprep.subr.bf16.mxu0 %v2168
    %2573 = vmatpush1.bf16.msra.mxu0 %v2167
    %2574 = vmatprep.subr.bf16.mxu0 %v2172
    %2575 = vmatpush1.bf16.msra.mxu0 %v2171
    %2576 = vmatprep.subr.bf16.mxu0 0
    %2577 = vmatpush1.bf16.msra.mxu0 0
    %2578 = vmatprep.subr.bf16.mxu0 0
    %2579 = vmatpush1.bf16.msra.mxu0 0
    %2580 = vmatprep.subr.bf16.mxu0 0
    %2581 = vmatpush1.bf16.msra.mxu0 0
    %2582 = vmatprep.subr.bf16.mxu0 0
    %2583 = vmatpush1.bf16.msra.mxu0 0
    %2584 = vmatprep.subr.bf16.mxu0 0
    %2585 = vmatpush1.bf16.msra.mxu0 0
    %2586 = vmatprep.subr.bf16.mxu0 0
    %2587 = vmatpush1.bf16.msra.mxu0 0
    %2588 = vmatprep.subr.bf16.mxu0 0
    %2589 = vmatpush1.bf16.msra.mxu0 0
    %2590 = vmatprep.subr.bf16.mxu0 0
    %2591 = vmatpush1.bf16.msra.mxu0 0
    %2592 = vmatprep.mubr.bf16.mxu0 0
    %2593 = vmatmul.mubr.bf16.gmra.mrb[0].mxu0 %v2516
    %v2594 = vpop.f32.mrb[0].mxu0
    %v2595 = vadd.f32 0.0, %v2594
    %v2596 = vpop.f32.mrb[0].mxu0
    %v2597 = vadd.f32 0.0, %v2596
    %v2598 = vpop.f32.mrb[0].mxu0
    %v2599 = vadd.f32 0.0, %v2598
    %v2600 = vpop.f32.mrb[0].mxu0
    %v2601 = vadd.f32 0.0, %v2600
    %2602 = vdwg.mxu0
    %v2603 = vunpack.c.l.bf16 %v2512
    %v2604 = vunpack.c.l.bf16 %v2513
    %v2605 = vunpack.c.l.bf16 %v2514
    %v2606 = vunpack.c.l.bf16 %v2515
    %v2607 = vunpack.c.h.bf16 %v2512
    %v2608 = vunpack.c.h.bf16 %v2513
    %v2609 = vunpack.c.h.bf16 %v2514
    %v2610 = vunpack.c.h.bf16 %v2515
    %v2611 = vadd.f32 %v2603, %v2552
    %v2612 = vadd.f32 %v2604, %v2554
    %v2613 = vadd.f32 %v2605, %v2595
    %v2614 = vadd.f32 %v2606, %v2597
    %v2615 = vadd.f32 %v2607, %v2556
    %v2616 = vadd.f32 %v2608, %v2558
    %v2617 = vadd.f32 %v2609, %v2599
    %v2618 = vadd.f32 %v2610, %v2601
    %v2619 = vxor.u32 %v2611, 2147483648
    %v2620 = vxor.u32 %v2615, 2147483648
    %v2621 = vmul.f32 %v2619, 1.442695
    %v2622 = vpow.pop %v2621
    %v2623 = vmul.f32 %v2620, 1.442695
    %v2624 = vpow.pop %v2623
    %v2625 = vadd.f32 %v2622, 1.0
    %v2626 = vadd.f32 %v2624, 1.0
    %v2627 = vrcp.pop %v2625
    %v2628 = vmul.f32 1.0, %v2627
    %v2629 = vrcp.pop %v2626
    %v2630 = vmul.f32 1.0, %v2629
    %v2631 = vxor.u32 %v2612, 2147483648
    %v2632 = vxor.u32 %v2616, 2147483648
    %v2633 = vmul.f32 %v2631, 1.442695
    %v2634 = vpow.pop %v2633
    %v2635 = vmul.f32 %v2632, 1.442695
    %v2636 = vpow.pop %v2635
    %v2637 = vadd.f32 %v2634, 1.0
    %v2638 = vadd.f32 %v2636, 1.0
    %v2639 = vrcp.pop %v2637
    %v2640 = vmul.f32 1.0, %v2639
    %v2641 = vrcp.pop %v2638
    %v2642 = vmul.f32 1.0, %v2641
    %v2643 = vtanh.pop %v2613
    %v2644 = vtanh.pop %v2617
    %v2645 = vxor.u32 %v2614, 2147483648
    %v2646 = vxor.u32 %v2618, 2147483648
    %v2647 = vmul.f32 %v2645, 1.442695
    %v2648 = vpow.pop %v2647
    %v2649 = vmul.f32 %v2646, 1.442695
    %v2650 = vpow.pop %v2649
    %v2651 = vadd.f32 %v2648, 1.0
    %v2652 = vadd.f32 %v2650, 1.0
    %v2653 = vrcp.pop %v2651
    %v2654 = vmul.f32 1.0, %v2653
    %v2655 = vrcp.pop %v2652
    %v2656 = vmul.f32 1.0, %v2655
    %v2657 = vmul.f32 %v2640, %v2505
    %v2658 = vmul.f32 %v2642, %v2506
    %v2659 = vmul.f32 %v2628, %v2643
    %v2660 = vmul.f32 %v2630, %v2644
    %v2661 = vadd.f32 %v2657, %v2659
    %v2662 = vadd.f32 %v2658, %v2660
    %v2663 = vtanh.pop %v2661
    %v2664 = vtanh.pop %v2662
    %v2665 = vmul.f32 %v2654, %v2663
    %v2666 = vmul.f32 %v2656, %v2664
    %s2667 = scalar_lea.vmem [#allocation3], 96
    %v2668 = vld [vmem:[%s2667] sm:$0xff]
    %v2669 = vld [vmem:[%s2667 + $0x8] sm:$0xff]
    %v2670 = vld [vmem:[%s2667 + $0x10] sm:$0xff]
    %v2671 = vld [vmem:[%s2667 + $0x18] sm:$0xff]
    %v2672 = vpack.c.bf16 %v2666, %v2665
    %2673 = vmatprep.subr.bf16.mxu0 %v2142
    %2674 = vmatpush1.bf16.msra.mxu0 %v2141
    %2675 = vmatprep.subr.bf16.mxu0 %v2146
    %2676 = vmatpush1.bf16.msra.mxu0 %v2145
    %2677 = vmatprep.subr.bf16.mxu0 %v2150
    %2678 = vmatpush1.bf16.msra.mxu0 %v2149
    %2679 = vmatprep.subr.bf16.mxu0 %v2154
    %2680 = vmatpush1.bf16.msra.mxu0 %v2153
    %2681 = vmatprep.subr.bf16.mxu0 %v2158
    %2682 = vmatpush1.bf16.msra.mxu0 %v2157
    %2683 = vmatprep.subr.bf16.mxu0 %v2162
    %2684 = vmatpush1.bf16.msra.mxu0 %v2161
    %2685 = vmatprep.subr.bf16.mxu0 %v2166
    %2686 = vmatpush1.bf16.msra.mxu0 %v2165
    %2687 = vmatprep.subr.bf16.mxu0 %v2170
    %2688 = vmatpush1.bf16.msra.mxu0 %v2169
    %2689 = vmatprep.subr.bf16.mxu0 0
    %2690 = vmatpush1.bf16.msra.mxu0 0
    %2691 = vmatprep.subr.bf16.mxu0 0
    %2692 = vmatpush1.bf16.msra.mxu0 0
    %2693 = vmatprep.subr.bf16.mxu0 0
    %2694 = vmatpush1.bf16.msra.mxu0 0
    %2695 = vmatprep.subr.bf16.mxu0 0
    %2696 = vmatpush1.bf16.msra.mxu0 0
    %2697 = vmatprep.subr.bf16.mxu0 0
    %2698 = vmatpush1.bf16.msra.mxu0 0
    %2699 = vmatprep.subr.bf16.mxu0 0
    %2700 = vmatpush1.bf16.msra.mxu0 0
    %2701 = vmatprep.subr.bf16.mxu0 0
    %2702 = vmatpush1.bf16.msra.mxu0 0
    %2703 = vmatprep.subr.bf16.mxu0 0
    %2704 = vmatpush1.bf16.msra.mxu0 0
    %2705 = vmatprep.mubr.bf16.mxu0 0
    %2706 = vmatmul.mubr.bf16.gmra.mrb[0].mxu0 %v2672
    %v2707 = vpop.f32.mrb[0].mxu0
    %v2708 = vadd.f32 0.0, %v2707
    %v2709 = vpop.f32.mrb[0].mxu0
    %v2710 = vadd.f32 0.0, %v2709
    %v2711 = vpop.f32.mrb[0].mxu0
    %v2712 = vadd.f32 0.0, %v2711
    %v2713 = vpop.f32.mrb[0].mxu0
    %v2714 = vadd.f32 0.0, %v2713
    %2715 = vdwg.mxu0
    %2716 = vmatprep.subr.bf16.mxu0 %v2144
    %2717 = vmatpush1.bf16.msra.mxu0 %v2143
    %2718 = vmatprep.subr.bf16.mxu0 %v2148
    %2719 = vmatpush1.bf16.msra.mxu0 %v2147
    %2720 = vmatprep.subr.bf16.mxu0 %v2152
    %2721 = vmatpush1.bf16.msra.mxu0 %v2151
    %2722 = vmatprep.subr.bf16.mxu0 %v2156
    %2723 = vmatpush1.bf16.msra.mxu0 %v2155
    %2724 = vmatprep.subr.bf16.mxu0 %v2160
    %2725 = vmatpush1.bf16.msra.mxu0 %v2159
    %2726 = vmatprep.subr.bf16.mxu0 %v2164
    %2727 = vmatpush1.bf16.msra.mxu0 %v2163
    %2728 = vmatprep.subr.bf16.mxu0 %v2168
    %2729 = vmatpush1.bf16.msra.mxu0 %v2167
    %2730 = vmatprep.subr.bf16.mxu0 %v2172
    %2731 = vmatpush1.bf16.msra.mxu0 %v2171
    %2732 = vmatprep.subr.bf16.mxu0 0
    %2733 = vmatpush1.bf16.msra.mxu0 0
    %2734 = vmatprep.subr.bf16.mxu0 0
    %2735 = vmatpush1.bf16.msra.mxu0 0
    %2736 = vmatprep.subr.bf16.mxu0 0
    %2737 = vmatpush1.bf16.msra.mxu0 0
    %2738 = vmatprep.subr.bf16.mxu0 0
    %2739 = vmatpush1.bf16.msra.mxu0 0
    %2740 = vmatprep.subr.bf16.mxu0 0
    %2741 = vmatpush1.bf16.msra.mxu0 0
    %2742 = vmatprep.subr.bf16.mxu0 0
    %2743 = vmatpush1.bf16.msra.mxu0 0
    %2744 = vmatprep.subr.bf16.mxu0 0
    %2745 = vmatpush1.bf16.msra.mxu0 0
    %2746 = vmatprep.subr.bf16.mxu0 0
    %2747 = vmatpush1.bf16.msra.mxu0 0
    %2748 = vmatprep.mubr.bf16.mxu0 0
    %2749 = vmatmul.mubr.bf16.gmra.mrb[0].mxu0 %v2672
    %v2750 = vpop.f32.mrb[0].mxu0
    %v2751 = vadd.f32 0.0, %v2750
    %v2752 = vpop.f32.mrb[0].mxu0
    %v2753 = vadd.f32 0.0, %v2752
    %v2754 = vpop.f32.mrb[0].mxu0
    %v2755 = vadd.f32 0.0, %v2754
    %v2756 = vpop.f32.mrb[0].mxu0
    %v2757 = vadd.f32 0.0, %v2756
    %2758 = vdwg.mxu0
    %v2759 = vunpack.c.l.bf16 %v2668
    %v2760 = vunpack.c.l.bf16 %v2669
    %v2761 = vunpack.c.l.bf16 %v2670
    %v2762 = vunpack.c.l.bf16 %v2671
    %v2763 = vunpack.c.h.bf16 %v2668
    %v2764 = vunpack.c.h.bf16 %v2669
    %v2765 = vunpack.c.h.bf16 %v2670
    %v2766 = vunpack.c.h.bf16 %v2671
    %v2767 = vadd.f32 %v2759, %v2708
    %v2768 = vadd.f32 %v2760, %v2710
    %v2769 = vadd.f32 %v2761, %v2751
    %v2770 = vadd.f32 %v2762, %v2753
    %v2771 = vadd.f32 %v2763, %v2712
    %v2772 = vadd.f32 %v2764, %v2714
    %v2773 = vadd.f32 %v2765, %v2755
    %v2774 = vadd.f32 %v2766, %v2757
    %v2775 = vxor.u32 %v2767, 2147483648
    %v2776 = vxor.u32 %v2771, 2147483648
    %v2777 = vmul.f32 %v2775, 1.442695
    %v2778 = vpow.pop %v2777
    %v2779 = vmul.f32 %v2776, 1.442695
    %v2780 = vpow.pop %v2779
    %v2781 = vadd.f32 %v2778, 1.0
    %v2782 = vadd.f32 %v2780, 1.0
    %v2783 = vrcp.pop %v2781
    %v2784 = vmul.f32 1.0, %v2783
    %v2785 = vrcp.pop %v2782
    %v2786 = vmul.f32 1.0, %v2785
    %v2787 = vxor.u32 %v2768, 2147483648
    %v2788 = vxor.u32 %v2772, 2147483648
    %v2789 = vmul.f32 %v2787, 1.442695
    %v2790 = vpow.pop %v2789
    %v2791 = vmul.f32 %v2788, 1.442695
    %v2792 = vpow.pop %v2791
    %v2793 = vadd.f32 %v2790, 1.0
    %v2794 = vadd.f32 %v2792, 1.0
    %v2795 = vrcp.pop %v2793
    %v2796 = vmul.f32 1.0, %v2795
    %v2797 = vrcp.pop %v2794
    %v2798 = vmul.f32 1.0, %v2797
    %v2799 = vtanh.pop %v2769
    %v2800 = vtanh.pop %v2773
    %v2801 = vxor.u32 %v2770, 2147483648
    %v2802 = vxor.u32 %v2774, 2147483648
    %v2803 = vmul.f32 %v2801, 1.442695
    %v2804 = vpow.pop %v2803
    %v2805 = vmul.f32 %v2802, 1.442695
    %v2806 = vpow.pop %v2805
    %v2807 = vadd.f32 %v2804, 1.0
    %v2808 = vadd.f32 %v2806, 1.0
    %v2809 = vrcp.pop %v2807
    %v2810 = vmul.f32 1.0, %v2809
    %v2811 = vrcp.pop %v2808
    %v2812 = vmul.f32 1.0, %v2811
    %v2813 = vmul.f32 %v2796, %v2661
    %v2814 = vmul.f32 %v2798, %v2662
    %v2815 = vmul.f32 %v2784, %v2799
    %v2816 = vmul.f32 %v2786, %v2800
    %v2817 = vadd.f32 %v2813, %v2815
    %v2818 = vadd.f32 %v2814, %v2816
    %v2819 = vtanh.pop %v2817
    %v2820 = vtanh.pop %v2818
    %v2821 = vmul.f32 %v2810, %v2819
    %v2822 = vmul.f32 %v2812, %v2820
    %s2823 = scalar_lea.vmem [#allocation3], 128
    %v2824 = vld [vmem:[%s2823] sm:$0xff]
    %v2825 = vld [vmem:[%s2823 + $0x8] sm:$0xff]
    %v2826 = vld [vmem:[%s2823 + $0x10] sm:$0xff]
    %v2827 = vld [vmem:[%s2823 + $0x18] sm:$0xff]
    %v2828 = vpack.c.bf16 %v2822, %v2821
    %2829 = vmatprep.subr.bf16.mxu0 %v2142
    %2830 = vmatpush1.bf16.msra.mxu0 %v2141
    %2831 = vmatprep.subr.bf16.mxu0 %v2146
    %2832 = vmatpush1.bf16.msra.mxu0 %v2145
    %2833 = vmatprep.subr.bf16.mxu0 %v2150
    %2834 = vmatpush1.bf16.msra.mxu0 %v2149
    %2835 = vmatprep.subr.bf16.mxu0 %v2154
    %2836 = vmatpush1.bf16.msra.mxu0 %v2153
    %2837 = vmatprep.subr.bf16.mxu0 %v2158
    %2838 = vmatpush1.bf16.msra.mxu0 %v2157
    %2839 = vmatprep.subr.bf16.mxu0 %v2162
    %2840 = vmatpush1.bf16.msra.mxu0 %v2161
    %2841 = vmatprep.subr.bf16.mxu0 %v2166
    %2842 = vmatpush1.bf16.msra.mxu0 %v2165
    %2843 = vmatprep.subr.bf16.mxu0 %v2170
    %2844 = vmatpush1.bf16.msra.mxu0 %v2169
    %2845 = vmatprep.subr.bf16.mxu0 0
    %2846 = vmatpush1.bf16.msra.mxu0 0
    %2847 = vmatprep.subr.bf16.mxu0 0
    %2848 = vmatpush1.bf16.msra.mxu0 0
    %2849 = vmatprep.subr.bf16.mxu0 0
    %2850 = vmatpush1.bf16.msra.mxu0 0
    %2851 = vmatprep.subr.bf16.mxu0 0
    %2852 = vmatpush1.bf16.msra.mxu0 0
    %2853 = vmatprep.subr.bf16.mxu0 0
    %2854 = vmatpush1.bf16.msra.mxu0 0
    %2855 = vmatprep.subr.bf16.mxu0 0
    %2856 = vmatpush1.bf16.msra.mxu0 0
    %2857 = vmatprep.subr.bf16.mxu0 0
    %2858 = vmatpush1.bf16.msra.mxu0 0
    %2859 = vmatprep.subr.bf16.mxu0 0
    %2860 = vmatpush1.bf16.msra.mxu0 0
    %2861 = vmatprep.mubr.bf16.mxu0 0
    %2862 = vmatmul.mubr.bf16.gmra.mrb[0].mxu0 %v2828
    %v2863 = vpop.f32.mrb[0].mxu0
    %v2864 = vadd.f32 0.0, %v2863
    %v2865 = vpop.f32.mrb[0].mxu0
    %v2866 = vadd.f32 0.0, %v2865
    %v2867 = vpop.f32.mrb[0].mxu0
    %v2868 = vadd.f32 0.0, %v2867
    %v2869 = vpop.f32.mrb[0].mxu0
    %v2870 = vadd.f32 0.0, %v2869
    %2871 = vdwg.mxu0
    %2872 = vmatprep.subr.bf16.mxu0 %v2144
    %2873 = vmatpush1.bf16.msra.mxu0 %v2143
    %2874 = vmatprep.subr.bf16.mxu0 %v2148
    %2875 = vmatpush1.bf16.msra.mxu0 %v2147
    %2876 = vmatprep.subr.bf16.mxu0 %v2152
    %2877 = vmatpush1.bf16.msra.mxu0 %v2151
    %2878 = vmatprep.subr.bf16.mxu0 %v2156
    %2879 = vmatpush1.bf16.msra.mxu0 %v2155
    %2880 = vmatprep.subr.bf16.mxu0 %v2160
    %2881 = vmatpush1.bf16.msra.mxu0 %v2159
    %2882 = vmatprep.subr.bf16.mxu0 %v2164
    %2883 = vmatpush1.bf16.msra.mxu0 %v2163
    %2884 = vmatprep.subr.bf16.mxu0 %v2168
    %2885 = vmatpush1.bf16.msra.mxu0 %v2167
    %2886 = vmatprep.subr.bf16.mxu0 %v2172
    %2887 = vmatpush1.bf16.msra.mxu0 %v2171
    %2888 = vmatprep.subr.bf16.mxu0 0
    %2889 = vmatpush1.bf16.msra.mxu0 0
    %2890 = vmatprep.subr.bf16.mxu0 0
    %2891 = vmatpush1.bf16.msra.mxu0 0
    %2892 = vmatprep.subr.bf16.mxu0 0
    %2893 = vmatpush1.bf16.msra.mxu0 0
    %2894 = vmatprep.subr.bf16.mxu0 0
    %2895 = vmatpush1.bf16.msra.mxu0 0
    %2896 = vmatprep.subr.bf16.mxu0 0
    %2897 = vmatpush1.bf16.msra.mxu0 0
    %2898 = vmatprep.subr.bf16.mxu0 0
    %2899 = vmatpush1.bf16.msra.mxu0 0
    %2900 = vmatprep.subr.bf16.mxu0 0
    %2901 = vmatpush1.bf16.msra.mxu0 0
    %2902 = vmatprep.subr.bf16.mxu0 0
    %2903 = vmatpush1.bf16.msra.mxu0 0
    %2904 = vmatprep.mubr.bf16.mxu0 0
    %2905 = vmatmul.mubr.bf16.gmra.mrb[0].mxu0 %v2828
    %v2906 = vpop.f32.mrb[0].mxu0
    %v2907 = vadd.f32 0.0, %v2906
    %v2908 = vpop.f32.mrb[0].mxu0
    %v2909 = vadd.f32 0.0, %v2908
    %v2910 = vpop.f32.mrb[0].mxu0
    %v2911 = vadd.f32 0.0, %v2910
    %v2912 = vpop.f32.mrb[0].mxu0
    %v2913 = vadd.f32 0.0, %v2912
    %2914 = vdwg.mxu0
    %v2915 = vunpack.c.l.bf16 %v2824
    %v2916 = vunpack.c.l.bf16 %v2825
    %v2917 = vunpack.c.l.bf16 %v2826
    %v2918 = vunpack.c.l.bf16 %v2827
    %v2919 = vunpack.c.h.bf16 %v2824
    %v2920 = vunpack.c.h.bf16 %v2825
    %v2921 = vunpack.c.h.bf16 %v2826
    %v2922 = vunpack.c.h.bf16 %v2827
    %v2923 = vadd.f32 %v2915, %v2864
    %v2924 = vadd.f32 %v2916, %v2866
    %v2925 = vadd.f32 %v2917, %v2907
    %v2926 = vadd.f32 %v2918, %v2909
    %v2927 = vadd.f32 %v2919, %v2868
    %v2928 = vadd.f32 %v2920, %v2870
    %v2929 = vadd.f32 %v2921, %v2911
    %v2930 = vadd.f32 %v2922, %v2913
    %v2931 = vxor.u32 %v2923, 2147483648
    %v2932 = vxor.u32 %v2927, 2147483648
    %v2933 = vmul.f32 %v2931, 1.442695
    %v2934 = vpow.pop %v2933
    %v2935 = vmul.f32 %v2932, 1.442695
    %v2936 = vpow.pop %v2935
    %v2937 = vadd.f32 %v2934, 1.0
    %v2938 = vadd.f32 %v2936, 1.0
    %v2939 = vrcp.pop %v2937
    %v2940 = vmul.f32 1.0, %v2939
    %v2941 = vrcp.pop %v2938
    %v2942 = vmul.f32 1.0, %v2941
    %v2943 = vxor.u32 %v2924, 2147483648
    %v2944 = vxor.u32 %v2928, 2147483648
    %v2945 = vmul.f32 %v2943, 1.442695
    %v2946 = vpow.pop %v2945
    %v2947 = vmul.f32 %v2944, 1.442695
    %v2948 = vpow.pop %v2947
    %v2949 = vadd.f32 %v2946, 1.0
    %v2950 = vadd.f32 %v2948, 1.0
    %v2951 = vrcp.pop %v2949
    %v2952 = vmul.f32 1.0, %v2951
    %v2953 = vrcp.pop %v2950
    %v2954 = vmul.f32 1.0, %v2953
    %v2955 = vtanh.pop %v2925
    %v2956 = vtanh.pop %v2929
    %v2957 = vxor.u32 %v2926, 2147483648
    %v2958 = vxor.u32 %v2930, 2147483648
    %v2959 = vmul.f32 %v2957, 1.442695
    %v2960 = vpow.pop %v2959
    %v2961 = vmul.f32 %v2958, 1.442695
    %v2962 = vpow.pop %v2961
    %v2963 = vadd.f32 %v2960, 1.0
    %v2964 = vadd.f32 %v2962, 1.0
    %v2965 = vrcp.pop %v2963
    %v2966 = vmul.f32 1.0, %v2965
    %v2967 = vrcp.pop %v2964
    %v2968 = vmul.f32 1.0, %v2967
    %v2969 = vmul.f32 %v2952, %v2817
    %v2970 = vmul.f32 %v2954, %v2818
    %v2971 = vmul.f32 %v2940, %v2955
    %v2972 = vmul.f32 %v2942, %v2956
    %v2973 = vadd.f32 %v2969, %v2971
    %v2974 = vadd.f32 %v2970, %v2972
    %v2975 = vtanh.pop %v2973
    %v2976 = vtanh.pop %v2974
    %v2977 = vmul.f32 %v2966, %v2975
    %v2978 = vmul.f32 %v2968, %v2976
    %s2979 = scalar_lea.vmem [#allocation3], 160
    %v2980 = vld [vmem:[%s2979] sm:$0xff]
    %v2981 = vld [vmem:[%s2979 + $0x8] sm:$0xff]
    %v2982 = vld [vmem:[%s2979 + $0x10] sm:$0xff]
    %v2983 = vld [vmem:[%s2979 + $0x18] sm:$0xff]
    %v2984 = vpack.c.bf16 %v2978, %v2977
    %2985 = vmatprep.subr.bf16.mxu0 %v2142
    %2986 = vmatpush1.bf16.msra.mxu0 %v2141
    %2987 = vmatprep.subr.bf16.mxu0 %v2146
    %2988 = vmatpush1.bf16.msra.mxu0 %v2145
    %2989 = vmatprep.subr.bf16.mxu0 %v2150
    %2990 = vmatpush1.bf16.msra.mxu0 %v2149
    %2991 = vmatprep.subr.bf16.mxu0 %v2154
    %2992 = vmatpush1.bf16.msra.mxu0 %v2153
    %2993 = vmatprep.subr.bf16.mxu0 %v2158
    %2994 = vmatpush1.bf16.msra.mxu0 %v2157
    %2995 = vmatprep.subr.bf16.mxu0 %v2162
    %2996 = vmatpush1.bf16.msra.mxu0 %v2161
    %2997 = vmatprep.subr.bf16.mxu0 %v2166
    %2998 = vmatpush1.bf16.msra.mxu0 %v2165
    %2999 = vmatprep.subr.bf16.mxu0 %v2170
    %3000 = vmatpush1.bf16.msra.mxu0 %v2169
    %3001 = vmatprep.subr.bf16.mxu0 0
    %3002 = vmatpush1.bf16.msra.mxu0 0
    %3003 = vmatprep.subr.bf16.mxu0 0
    %3004 = vmatpush1.bf16.msra.mxu0 0
    %3005 = vmatprep.subr.bf16.mxu0 0
    %3006 = vmatpush1.bf16.msra.mxu0 0
    %3007 = vmatprep.subr.bf16.mxu0 0
    %3008 = vmatpush1.bf16.msra.mxu0 0
    %3009 = vmatprep.subr.bf16.mxu0 0
    %3010 = vmatpush1.bf16.msra.mxu0 0
    %3011 = vmatprep.subr.bf16.mxu0 0
    %3012 = vmatpush1.bf16.msra.mxu0 0
    %3013 = vmatprep.subr.bf16.mxu0 0
    %3014 = vmatpush1.bf16.msra.mxu0 0
    %3015 = vmatprep.subr.bf16.mxu0 0
    %3016 = vmatpush1.bf16.msra.mxu0 0
    %3017 = vmatprep.mubr.bf16.mxu0 0
    %3018 = vmatmul.mubr.bf16.gmra.mrb[0].mxu0 %v2984
    %v3019 = vpop.f32.mrb[0].mxu0
    %v3020 = vadd.f32 0.0, %v3019
    %v3021 = vpop.f32.mrb[0].mxu0
    %v3022 = vadd.f32 0.0, %v3021
    %v3023 = vpop.f32.mrb[0].mxu0
    %v3024 = vadd.f32 0.0, %v3023
    %v3025 = vpop.f32.mrb[0].mxu0
    %v3026 = vadd.f32 0.0, %v3025
    %3027 = vdwg.mxu0
    %3028 = vmatprep.subr.bf16.mxu0 %v2144
    %3029 = vmatpush1.bf16.msra.mxu0 %v2143
    %3030 = vmatprep.subr.bf16.mxu0 %v2148
    %3031 = vmatpush1.bf16.msra.mxu0 %v2147
    %3032 = vmatprep.subr.bf16.mxu0 %v2152
    %3033 = vmatpush1.bf16.msra.mxu0 %v2151
    %3034 = vmatprep.subr.bf16.mxu0 %v2156
    %3035 = vmatpush1.bf16.msra.mxu0 %v2155
    %3036 = vmatprep.subr.bf16.mxu0 %v2160
    %3037 = vmatpush1.bf16.msra.mxu0 %v2159
    %3038 = vmatprep.subr.bf16.mxu0 %v2164
    %3039 = vmatpush1.bf16.msra.mxu0 %v2163
    %3040 = vmatprep.subr.bf16.mxu0 %v2168
    %3041 = vmatpush1.bf16.msra.mxu0 %v2167
    %3042 = vmatprep.subr.bf16.mxu0 %v2172
    %3043 = vmatpush1.bf16.msra.mxu0 %v2171
    %3044 = vmatprep.subr.bf16.mxu0 0
    %3045 = vmatpush1.bf16.msra.mxu0 0
    %3046 = vmatprep.subr.bf16.mxu0 0
    %3047 = vmatpush1.bf16.msra.mxu0 0
    %3048 = vmatprep.subr.bf16.mxu0 0
    %3049 = vmatpush1.bf16.msra.mxu0 0
    %3050 = vmatprep.subr.bf16.mxu0 0
    %3051 = vmatpush1.bf16.msra.mxu0 0
    %3052 = vmatprep.subr.bf16.mxu0 0
    %3053 = vmatpush1.bf16.msra.mxu0 0
    %3054 = vmatprep.subr.bf16.mxu0 0
    %3055 = vmatpush1.bf16.msra.mxu0 0
    %3056 = vmatprep.subr.bf16.mxu0 0
    %3057 = vmatpush1.bf16.msra.mxu0 0
    %3058 = vmatprep.subr.bf16.mxu0 0
    %3059 = vmatpush1.bf16.msra.mxu0 0
    %3060 = vmatprep.mubr.bf16.mxu0 0
    %3061 = vmatmul.mubr.bf16.gmra.mrb[0].mxu0 %v2984
    %v3062 = vpop.f32.mrb[0].mxu0
    %v3063 = vadd.f32 0.0, %v3062
    %v3064 = vpop.f32.mrb[0].mxu0
    %v3065 = vadd.f32 0.0, %v3064
    %v3066 = vpop.f32.mrb[0].mxu0
    %v3067 = vadd.f32 0.0, %v3066
    %v3068 = vpop.f32.mrb[0].mxu0
    %v3069 = vadd.f32 0.0, %v3068
    %3070 = vdwg.mxu0
    %v3071 = vunpack.c.l.bf16 %v2980
    %v3072 = vunpack.c.l.bf16 %v2981
    %v3073 = vunpack.c.l.bf16 %v2982
    %v3074 = vunpack.c.l.bf16 %v2983
    %v3075 = vunpack.c.h.bf16 %v2980
    %v3076 = vunpack.c.h.bf16 %v2981
    %v3077 = vunpack.c.h.bf16 %v2982
    %v3078 = vunpack.c.h.bf16 %v2983
    %v3079 = vadd.f32 %v3071, %v3020
    %v3080 = vadd.f32 %v3072, %v3022
    %v3081 = vadd.f32 %v3073, %v3063
    %v3082 = vadd.f32 %v3074, %v3065
    %v3083 = vadd.f32 %v3075, %v3024
    %v3084 = vadd.f32 %v3076, %v3026
    %v3085 = vadd.f32 %v3077, %v3067
    %v3086 = vadd.f32 %v3078, %v3069
    %v3087 = vxor.u32 %v3079, 2147483648
    %v3088 = vxor.u32 %v3083, 2147483648
    %v3089 = vmul.f32 %v3087, 1.442695
    %v3090 = vpow.pop %v3089
    %v3091 = vmul.f32 %v3088, 1.442695
    %v3092 = vpow.pop %v3091
    %v3093 = vadd.f32 %v3090, 1.0
    %v3094 = vadd.f32 %v3092, 1.0
    %v3095 = vrcp.pop %v3093
    %v3096 = vmul.f32 1.0, %v3095
    %v3097 = vrcp.pop %v3094
    %v3098 = vmul.f32 1.0, %v3097
    %v3099 = vxor.u32 %v3080, 2147483648
    %v3100 = vxor.u32 %v3084, 2147483648
    %v3101 = vmul.f32 %v3099, 1.442695
    %v3102 = vpow.pop %v3101
    %v3103 = vmul.f32 %v3100, 1.442695
    %v3104 = vpow.pop %v3103
    %v3105 = vadd.f32 %v3102, 1.0
    %v3106 = vadd.f32 %v3104, 1.0
    %v3107 = vrcp.pop %v3105
    %v3108 = vmul.f32 1.0, %v3107
    %v3109 = vrcp.pop %v3106
    %v3110 = vmul.f32 1.0, %v3109
    %v3111 = vtanh.pop %v3081
    %v3112 = vtanh.pop %v3085
    %v3113 = vxor.u32 %v3082, 2147483648
    %v3114 = vxor.u32 %v3086, 2147483648
    %v3115 = vmul.f32 %v3113, 1.442695
    %v3116 = vpow.pop %v3115
    %v3117 = vmul.f32 %v3114, 1.442695
    %v3118 = vpow.pop %v3117
    %v3119 = vadd.f32 %v3116, 1.0
    %v3120 = vadd.f32 %v3118, 1.0
    %v3121 = vrcp.pop %v3119
    %v3122 = vmul.f32 1.0, %v3121
    %v3123 = vrcp.pop %v3120
    %v3124 = vmul.f32 1.0, %v3123
    %v3125 = vmul.f32 %v3108, %v2973
    %v3126 = vmul.f32 %v3110, %v2974
    %v3127 = vmul.f32 %v3096, %v3111
    %v3128 = vmul.f32 %v3098, %v3112
    %v3129 = vadd.f32 %v3125, %v3127
    %v3130 = vadd.f32 %v3126, %v3128
    %v3131 = vtanh.pop %v3129
    %v3132 = vtanh.pop %v3130
    %v3133 = vmul.f32 %v3122, %v3131
    %v3134 = vmul.f32 %v3124, %v3132
    %s3135 = scalar_lea.vmem [#allocation3], 192
    %v3136 = vld [vmem:[%s3135] sm:$0xff]
    %v3137 = vld [vmem:[%s3135 + $0x8] sm:$0xff]
    %v3138 = vld [vmem:[%s3135 + $0x10] sm:$0xff]
    %v3139 = vld [vmem:[%s3135 + $0x18] sm:$0xff]
    %v3140 = vpack.c.bf16 %v3134, %v3133
    %3141 = vmatprep.subr.bf16.mxu0 %v2142
    %3142 = vmatpush1.bf16.msra.mxu0 %v2141
    %3143 = vmatprep.subr.bf16.mxu0 %v2146
    %3144 = vmatpush1.bf16.msra.mxu0 %v2145
    %3145 = vmatprep.subr.bf16.mxu0 %v2150
    %3146 = vmatpush1.bf16.msra.mxu0 %v2149
    %3147 = vmatprep.subr.bf16.mxu0 %v2154
    %3148 = vmatpush1.bf16.msra.mxu0 %v2153
    %3149 = vmatprep.subr.bf16.mxu0 %v2158
    %3150 = vmatpush1.bf16.msra.mxu0 %v2157
    %3151 = vmatprep.subr.bf16.mxu0 %v2162
    %3152 = vmatpush1.bf16.msra.mxu0 %v2161
    %3153 = vmatprep.subr.bf16.mxu0 %v2166
    %3154 = vmatpush1.bf16.msra.mxu0 %v2165
    %3155 = vmatprep.subr.bf16.mxu0 %v2170
    %3156 = vmatpush1.bf16.msra.mxu0 %v2169
    %3157 = vmatprep.subr.bf16.mxu0 0
    %3158 = vmatpush1.bf16.msra.mxu0 0
    %3159 = vmatprep.subr.bf16.mxu0 0
    %3160 = vmatpush1.bf16.msra.mxu0 0
    %3161 = vmatprep.subr.bf16.mxu0 0
    %3162 = vmatpush1.bf16.msra.mxu0 0
    %3163 = vmatprep.subr.bf16.mxu0 0
    %3164 = vmatpush1.bf16.msra.mxu0 0
    %3165 = vmatprep.subr.bf16.mxu0 0
    %3166 = vmatpush1.bf16.msra.mxu0 0
    %3167 = vmatprep.subr.bf16.mxu0 0
    %3168 = vmatpush1.bf16.msra.mxu0 0
    %3169 = vmatprep.subr.bf16.mxu0 0
    %3170 = vmatpush1.bf16.msra.mxu0 0
    %3171 = vmatprep.subr.bf16.mxu0 0
    %3172 = vmatpush1.bf16.msra.mxu0 0
    %3173 = vmatprep.mubr.bf16.mxu0 0
    %3174 = vmatmul.mubr.bf16.gmra.mrb[0].mxu0 %v3140
    %v3175 = vpop.f32.mrb[0].mxu0
    %v3176 = vadd.f32 0.0, %v3175
    %v3177 = vpop.f32.mrb[0].mxu0
    %v3178 = vadd.f32 0.0, %v3177
    %v3179 = vpop.f32.mrb[0].mxu0
    %v3180 = vadd.f32 0.0, %v3179
    %v3181 = vpop.f32.mrb[0].mxu0
    %v3182 = vadd.f32 0.0, %v3181
    %3183 = vdwg.mxu0
    %3184 = vmatprep.subr.bf16.mxu0 %v2144
    %3185 = vmatpush1.bf16.msra.mxu0 %v2143
    %3186 = vmatprep.subr.bf16.mxu0 %v2148
    %3187 = vmatpush1.bf16.msra.mxu0 %v2147
    %3188 = vmatprep.subr.bf16.mxu0 %v2152
    %3189 = vmatpush1.bf16.msra.mxu0 %v2151
    %3190 = vmatprep.subr.bf16.mxu0 %v2156
    %3191 = vmatpush1.bf16.msra.mxu0 %v2155
    %3192 = vmatprep.subr.bf16.mxu0 %v2160
    %3193 = vmatpush1.bf16.msra.mxu0 %v2159
    %3194 = vmatprep.subr.bf16.mxu0 %v2164
    %3195 = vmatpush1.bf16.msra.mxu0 %v2163
    %3196 = vmatprep.subr.bf16.mxu0 %v2168
    %3197 = vmatpush1.bf16.msra.mxu0 %v2167
    %3198 = vmatprep.subr.bf16.mxu0 %v2172
    %3199 = vmatpush1.bf16.msra.mxu0 %v2171
    %3200 = vmatprep.subr.bf16.mxu0 0
    %3201 = vmatpush1.bf16.msra.mxu0 0
    %3202 = vmatprep.subr.bf16.mxu0 0
    %3203 = vmatpush1.bf16.msra.mxu0 0
    %3204 = vmatprep.subr.bf16.mxu0 0
    %3205 = vmatpush1.bf16.msra.mxu0 0
    %3206 = vmatprep.subr.bf16.mxu0 0
    %3207 = vmatpush1.bf16.msra.mxu0 0
    %3208 = vmatprep.subr.bf16.mxu0 0
    %3209 = vmatpush1.bf16.msra.mxu0 0
    %3210 = vmatprep.subr.bf16.mxu0 0
    %3211 = vmatpush1.bf16.msra.mxu0 0
    %3212 = vmatprep.subr.bf16.mxu0 0
    %3213 = vmatpush1.bf16.msra.mxu0 0
    %3214 = vmatprep.subr.bf16.mxu0 0
    %3215 = vmatpush1.bf16.msra.mxu0 0
    %3216 = vmatprep.mubr.bf16.mxu0 0
    %3217 = vmatmul.mubr.bf16.gmra.mrb[0].mxu0 %v3140
    %v3218 = vpop.f32.mrb[0].mxu0
    %v3219 = vadd.f32 0.0, %v3218
    %v3220 = vpop.f32.mrb[0].mxu0
    %v3221 = vadd.f32 0.0, %v3220
    %v3222 = vpop.f32.mrb[0].mxu0
    %v3223 = vadd.f32 0.0, %v3222
    %v3224 = vpop.f32.mrb[0].mxu0
    %v3225 = vadd.f32 0.0, %v3224
    %3226 = vdwg.mxu0
    %v3227 = vunpack.c.l.bf16 %v3136
    %v3228 = vunpack.c.l.bf16 %v3137
    %v3229 = vunpack.c.l.bf16 %v3138
    %v3230 = vunpack.c.l.bf16 %v3139
    %v3231 = vunpack.c.h.bf16 %v3136
    %v3232 = vunpack.c.h.bf16 %v3137
    %v3233 = vunpack.c.h.bf16 %v3138
    %v3234 = vunpack.c.h.bf16 %v3139
    %v3235 = vadd.f32 %v3227, %v3176
    %v3236 = vadd.f32 %v3228, %v3178
    %v3237 = vadd.f32 %v3229, %v3219
    %v3238 = vadd.f32 %v3230, %v3221
    %v3239 = vadd.f32 %v3231, %v3180
    %v3240 = vadd.f32 %v3232, %v3182
    %v3241 = vadd.f32 %v3233, %v3223
    %v3242 = vadd.f32 %v3234, %v3225
    %v3243 = vxor.u32 %v3235, 2147483648
    %v3244 = vxor.u32 %v3239, 2147483648
    %v3245 = vmul.f32 %v3243, 1.442695
    %v3246 = vpow.pop %v3245
    %v3247 = vmul.f32 %v3244, 1.442695
    %v3248 = vpow.pop %v3247
    %v3249 = vadd.f32 %v3246, 1.0
    %v3250 = vadd.f32 %v3248, 1.0
    %v3251 = vrcp.pop %v3249
    %v3252 = vmul.f32 1.0, %v3251
    %v3253 = vrcp.pop %v3250
    %v3254 = vmul.f32 1.0, %v3253
    %v3255 = vxor.u32 %v3236, 2147483648
    %v3256 = vxor.u32 %v3240, 2147483648
    %v3257 = vmul.f32 %v3255, 1.442695
    %v3258 = vpow.pop %v3257
    %v3259 = vmul.f32 %v3256, 1.442695
    %v3260 = vpow.pop %v3259
    %v3261 = vadd.f32 %v3258, 1.0
    %v3262 = vadd.f32 %v3260, 1.0
    %v3263 = vrcp.pop %v3261
    %v3264 = vmul.f32 1.0, %v3263
    %v3265 = vrcp.pop %v3262
    %v3266 = vmul.f32 1.0, %v3265
    %v3267 = vtanh.pop %v3237
    %v3268 = vtanh.pop %v3241
    %v3269 = vxor.u32 %v3238, 2147483648
    %v3270 = vxor.u32 %v3242, 2147483648
    %v3271 = vmul.f32 %v3269, 1.442695
    %v3272 = vpow.pop %v3271
    %v3273 = vmul.f32 %v3270, 1.442695
    %v3274 = vpow.pop %v3273
    %v3275 = vadd.f32 %v3272, 1.0
    %v3276 = vadd.f32 %v3274, 1.0
    %v3277 = vrcp.pop %v3275
    %v3278 = vmul.f32 1.0, %v3277
    %v3279 = vrcp.pop %v3276
    %v3280 = vmul.f32 1.0, %v3279
    %v3281 = vmul.f32 %v3264, %v3129
    %v3282 = vmul.f32 %v3266, %v3130
    %v3283 = vmul.f32 %v3252, %v3267
    %v3284 = vmul.f32 %v3254, %v3268
    %v3285 = vadd.f32 %v3281, %v3283
    %v3286 = vadd.f32 %v3282, %v3284
    %v3287 = vtanh.pop %v3285
    %v3288 = vtanh.pop %v3286
    %v3289 = vmul.f32 %v3278, %v3287
    %v3290 = vmul.f32 %v3280, %v3288
    %s3291 = scalar_lea.vmem [#allocation3], 224
    %v3292 = vld [vmem:[%s3291] sm:$0xff]
    %v3293 = vld [vmem:[%s3291 + $0x8] sm:$0xff]
    %v3294 = vld [vmem:[%s3291 + $0x10] sm:$0xff]
    %v3295 = vld [vmem:[%s3291 + $0x18] sm:$0xff]
    %v3296 = vpack.c.bf16 %v3290, %v3289
    %3297 = vmatprep.subr.bf16.mxu0 %v2142
    %3298 = vmatpush1.bf16.msra.mxu0 %v2141
    %3299 = vmatprep.subr.bf16.mxu0 %v2146
    %3300 = vmatpush1.bf16.msra.mxu0 %v2145
    %3301 = vmatprep.subr.bf16.mxu0 %v2150
    %3302 = vmatpush1.bf16.msra.mxu0 %v2149
    %3303 = vmatprep.subr.bf16.mxu0 %v2154
    %3304 = vmatpush1.bf16.msra.mxu0 %v2153
    %3305 = vmatprep.subr.bf16.mxu0 %v2158
    %3306 = vmatpush1.bf16.msra.mxu0 %v2157
    %3307 = vmatprep.subr.bf16.mxu0 %v2162
    %3308 = vmatpush1.bf16.msra.mxu0 %v2161
    %3309 = vmatprep.subr.bf16.mxu0 %v2166
    %3310 = vmatpush1.bf16.msra.mxu0 %v2165
    %3311 = vmatprep.subr.bf16.mxu0 %v2170
    %3312 = vmatpush1.bf16.msra.mxu0 %v2169
    %3313 = vmatprep.subr.bf16.mxu0 0
    %3314 = vmatpush1.bf16.msra.mxu0 0
    %3315 = vmatprep.subr.bf16.mxu0 0
    %3316 = vmatpush1.bf16.msra.mxu0 0
    %3317 = vmatprep.subr.bf16.mxu0 0
    %3318 = vmatpush1.bf16.msra.mxu0 0
    %3319 = vmatprep.subr.bf16.mxu0 0
    %3320 = vmatpush1.bf16.msra.mxu0 0
    %3321 = vmatprep.subr.bf16.mxu0 0
    %3322 = vmatpush1.bf16.msra.mxu0 0
    %3323 = vmatprep.subr.bf16.mxu0 0
    %3324 = vmatpush1.bf16.msra.mxu0 0
    %3325 = vmatprep.subr.bf16.mxu0 0
    %3326 = vmatpush1.bf16.msra.mxu0 0
    %3327 = vmatprep.subr.bf16.mxu0 0
    %3328 = vmatpush1.bf16.msra.mxu0 0
    %3329 = vmatprep.mubr.bf16.mxu0 0
    %3330 = vmatmul.mubr.bf16.gmra.mrb[0].mxu0 %v3296
    %v3331 = vpop.f32.mrb[0].mxu0
    %v3332 = vadd.f32 0.0, %v3331
    %v3333 = vpop.f32.mrb[0].mxu0
    %v3334 = vadd.f32 0.0, %v3333
    %v3335 = vpop.f32.mrb[0].mxu0
    %v3336 = vadd.f32 0.0, %v3335
    %v3337 = vpop.f32.mrb[0].mxu0
    %v3338 = vadd.f32 0.0, %v3337
    %3339 = vdwg.mxu0
    %3340 = vmatprep.subr.bf16.mxu0 %v2144
    %3341 = vmatpush1.bf16.msra.mxu0 %v2143
    %3342 = vmatprep.subr.bf16.mxu0 %v2148
    %3343 = vmatpush1.bf16.msra.mxu0 %v2147
    %3344 = vmatprep.subr.bf16.mxu0 %v2152
    %3345 = vmatpush1.bf16.msra.mxu0 %v2151
    %3346 = vmatprep.subr.bf16.mxu0 %v2156
    %3347 = vmatpush1.bf16.msra.mxu0 %v2155
    %3348 = vmatprep.subr.bf16.mxu0 %v2160
    %3349 = vmatpush1.bf16.msra.mxu0 %v2159
    %3350 = vmatprep.subr.bf16.mxu0 %v2164
    %3351 = vmatpush1.bf16.msra.mxu0 %v2163
    %3352 = vmatprep.subr.bf16.mxu0 %v2168
    %3353 = vmatpush1.bf16.msra.mxu0 %v2167
    %3354 = vmatprep.subr.bf16.mxu0 %v2172
    %3355 = vmatpush1.bf16.msra.mxu0 %v2171
    %3356 = vmatprep.subr.bf16.mxu0 0
    %3357 = vmatpush1.bf16.msra.mxu0 0
    %3358 = vmatprep.subr.bf16.mxu0 0
    %3359 = vmatpush1.bf16.msra.mxu0 0
    %3360 = vmatprep.subr.bf16.mxu0 0
    %3361 = vmatpush1.bf16.msra.mxu0 0
    %3362 = vmatprep.subr.bf16.mxu0 0
    %3363 = vmatpush1.bf16.msra.mxu0 0
    %3364 = vmatprep.subr.bf16.mxu0 0
    %3365 = vmatpush1.bf16.msra.mxu0 0
    %3366 = vmatprep.subr.bf16.mxu0 0
    %3367 = vmatpush1.bf16.msra.mxu0 0
    %3368 = vmatprep.subr.bf16.mxu0 0
    %3369 = vmatpush1.bf16.msra.mxu0 0
    %3370 = vmatprep.subr.bf16.mxu0 0
    %3371 = vmatpush1.bf16.msra.mxu0 0
    %3372 = vmatprep.mubr.bf16.mxu0 0
    %3373 = vmatmul.mubr.bf16.gmra.mrb[0].mxu0 %v3296
    %v3374 = vpop.f32.mrb[0].mxu0
    %v3375 = vadd.f32 0.0, %v3374
    %v3376 = vpop.f32.mrb[0].mxu0
    %v3377 = vadd.f32 0.0, %v3376
    %v3378 = vpop.f32.mrb[0].mxu0
    %v3379 = vadd.f32 0.0, %v3378
    %v3380 = vpop.f32.mrb[0].mxu0
    %v3381 = vadd.f32 0.0, %v3380
    %3382 = vdwg.mxu0
    %v3383 = vunpack.c.l.bf16 %v3292
    %v3384 = vunpack.c.l.bf16 %v3293
    %v3385 = vunpack.c.l.bf16 %v3294
    %v3386 = vunpack.c.l.bf16 %v3295
    %v3387 = vunpack.c.h.bf16 %v3292
    %v3388 = vunpack.c.h.bf16 %v3293
    %v3389 = vunpack.c.h.bf16 %v3294
    %v3390 = vunpack.c.h.bf16 %v3295
    %v3391 = vadd.f32 %v3383, %v3332
    %v3392 = vadd.f32 %v3384, %v3334
    %v3393 = vadd.f32 %v3385, %v3375
    %v3394 = vadd.f32 %v3386, %v3377
    %v3395 = vadd.f32 %v3387, %v3336
    %v3396 = vadd.f32 %v3388, %v3338
    %v3397 = vadd.f32 %v3389, %v3379
    %v3398 = vadd.f32 %v3390, %v3381
    %v3399 = vxor.u32 %v3391, 2147483648
    %v3400 = vxor.u32 %v3395, 2147483648
    %v3401 = vmul.f32 %v3399, 1.442695
    %v3402 = vpow.pop %v3401
    %v3403 = vmul.f32 %v3400, 1.442695
    %v3404 = vpow.pop %v3403
    %v3405 = vadd.f32 %v3402, 1.0
    %v3406 = vadd.f32 %v3404, 1.0
    %v3407 = vrcp.pop %v3405
    %v3408 = vmul.f32 1.0, %v3407
    %v3409 = vrcp.pop %v3406
    %v3410 = vmul.f32 1.0, %v3409
    %v3411 = vxor.u32 %v3392, 2147483648
    %v3412 = vxor.u32 %v3396, 2147483648
    %v3413 = vmul.f32 %v3411, 1.442695
    %v3414 = vpow.pop %v3413
    %v3415 = vmul.f32 %v3412, 1.442695
    %v3416 = vpow.pop %v3415
    %v3417 = vadd.f32 %v3414, 1.0
    %v3418 = vadd.f32 %v3416, 1.0
    %v3419 = vrcp.pop %v3417
    %v3420 = vmul.f32 1.0, %v3419
    %v3421 = vrcp.pop %v3418
    %v3422 = vmul.f32 1.0, %v3421
    %v3423 = vtanh.pop %v3393
    %v3424 = vtanh.pop %v3397
    %v3425 = vxor.u32 %v3394, 2147483648
    %v3426 = vxor.u32 %v3398, 2147483648
    %v3427 = vmul.f32 %v3425, 1.442695
    %v3428 = vpow.pop %v3427
    %v3429 = vmul.f32 %v3426, 1.442695
    %v3430 = vpow.pop %v3429
    %v3431 = vadd.f32 %v3428, 1.0
    %v3432 = vadd.f32 %v3430, 1.0
    %v3433 = vrcp.pop %v3431
    %v3434 = vmul.f32 1.0, %v3433
    %v3435 = vrcp.pop %v3432
    %v3436 = vmul.f32 1.0, %v3435
    %v3437 = vmul.f32 %v3420, %v3285
    %v3438 = vmul.f32 %v3422, %v3286
    %v3439 = vmul.f32 %v3408, %v3423
    %v3440 = vmul.f32 %v3410, %v3424
    %v3441 = vadd.f32 %v3437, %v3439
    %v3442 = vadd.f32 %v3438, %v3440
    %v3443 = vtanh.pop %v3441
    %v3444 = vtanh.pop %v3442
    %v3445 = vmul.f32 %v3434, %v3443
    %v3446 = vmul.f32 %v3436, %v3444
    %3447 = vst [vmem:[#allocation4 + $0x10] sm:$0xff] %v3445
    %3448 = vst [vmem:[#allocation4 + $0x30] sm:$0xff] %v3446
    %3449 = vst [vmem:[#allocation4 + $0x18] sm:$0xff] %v3441
    %3450 = vst [vmem:[#allocation4 + $0x38] sm:$0xff] %v3442
    %v3451 = vld [vmem:[#allocation4] sm:$0xff]
    %v3452 = vld [vmem:[#allocation4 + $0x8] sm:$0xff]
    %v3453 = vld [vmem:[#allocation4 + $0x10] sm:$0xff]
    %v3454 = vld [vmem:[#allocation4 + $0x18] sm:$0xff]
    %v3455 = vld [vmem:[#allocation4 + $0x20] sm:$0xff]
    %v3456 = vld [vmem:[#allocation4 + $0x28] sm:$0xff]
    %v3457 = vld [vmem:[#allocation4 + $0x30] sm:$0xff]
    %v3458 = vld [vmem:[#allocation4 + $0x38] sm:$0xff]
    %v3459 = vtanh.pop %v3451
    %v3460 = vtanh.pop %v3452
    %v3461 = vtanh.pop %v3453
    %v3462 = vtanh.pop %v3454
    %v3463 = vtanh.pop %v3455
    %v3464 = vtanh.pop %v3456
    %v3465 = vtanh.pop %v3457
    %v3466 = vtanh.pop %v3458
    %v3467 = vpack.c.bf16 %v3463, %v3459
    %v3468 = vpack.c.bf16 %v3464, %v3460
    %v3469 = vpack.c.bf16 %v3465, %v3461
    %v3470 = vpack.c.bf16 %v3466, %v3462
    %v3471 = vld [vmem:[#allocation5] sm:$0xf]
    %v3472 = vld [vmem:[#allocation5 + $0x4] sm:$0xf]
    %v3473 = vld [vmem:[#allocation5 + $0x8] sm:$0xf]
    %v3474 = vld [vmem:[#allocation5 + $0xc] sm:$0xf]
    %v3475 = vld [vmem:[#allocation5 + $0x10] sm:$0xf]
    %v3476 = vld [vmem:[#allocation5 + $0x14] sm:$0xf]
    %v3477 = vld [vmem:[#allocation5 + $0x18] sm:$0xf]
    %v3478 = vld [vmem:[#allocation5 + $0x1c] sm:$0xf]
    %v3479 = vld [vmem:[#allocation5 + $0x20] sm:$0xf]
    %v3480 = vld [vmem:[#allocation5 + $0x24] sm:$0xf]
    %v3481 = vld [vmem:[#allocation5 + $0x28] sm:$0xf]
    %v3482 = vld [vmem:[#allocation5 + $0x2c] sm:$0xf]
    %v3483 = vld [vmem:[#allocation5 + $0x30] sm:$0xf]
    %v3484 = vld [vmem:[#allocation5 + $0x34] sm:$0xf]
    %v3485 = vld [vmem:[#allocation5 + $0x38] sm:$0xf]
    %v3486 = vld [vmem:[#allocation5 + $0x3c] sm:$0xf]
    %v3487 = vld [vmem:[#allocation5 + $0x40] sm:$0xf]
    %v3488 = vld [vmem:[#allocation5 + $0x44] sm:$0xf]
    %v3489 = vld [vmem:[#allocation5 + $0x48] sm:$0xf]
    %v3490 = vld [vmem:[#allocation5 + $0x4c] sm:$0xf]
    %v3491 = vld [vmem:[#allocation5 + $0x50] sm:$0xf]
    %v3492 = vld [vmem:[#allocation5 + $0x54] sm:$0xf]
    %v3493 = vld [vmem:[#allocation5 + $0x58] sm:$0xf]
    %v3494 = vld [vmem:[#allocation5 + $0x5c] sm:$0xf]
    %v3495 = vld [vmem:[#allocation5 + $0x60] sm:$0xf]
    %v3496 = vld [vmem:[#allocation5 + $0x64] sm:$0xf]
    %v3497 = vld [vmem:[#allocation5 + $0x68] sm:$0xf]
    %v3498 = vld [vmem:[#allocation5 + $0x6c] sm:$0xf]
    %v3499 = vld [vmem:[#allocation5 + $0x70] sm:$0xf]
    %v3500 = vld [vmem:[#allocation5 + $0x74] sm:$0xf]
    %v3501 = vld [vmem:[#allocation5 + $0x78] sm:$0xf]
    %v3502 = vld [vmem:[#allocation5 + $0x7c] sm:$0xf]
    %v3503 = vld [vmem:[#allocation5 + $0x80] sm:$0xf]
    %v3504 = vld [vmem:[#allocation5 + $0x84] sm:$0xf]
    %v3505 = vld [vmem:[#allocation5 + $0x88] sm:$0xf]
    %v3506 = vld [vmem:[#allocation5 + $0x8c] sm:$0xf]
    %v3507 = vld [vmem:[#allocation5 + $0x90] sm:$0xf]
    %v3508 = vld [vmem:[#allocation5 + $0x94] sm:$0xf]
    %v3509 = vld [vmem:[#allocation5 + $0x98] sm:$0xf]
    %v3510 = vld [vmem:[#allocation5 + $0x9c] sm:$0xf]
    %v3511 = vld [vmem:[#allocation5 + $0xa0] sm:$0xf]
    %v3512 = vld [vmem:[#allocation5 + $0xa4] sm:$0xf]
    %v3513 = vld [vmem:[#allocation5 + $0xa8] sm:$0xf]
    %v3514 = vld [vmem:[#allocation5 + $0xac] sm:$0xf]
    %v3515 = vld [vmem:[#allocation5 + $0xb0] sm:$0xf]
    %v3516 = vld [vmem:[#allocation5 + $0xb4] sm:$0xf]
    %v3517 = vld [vmem:[#allocation5 + $0xb8] sm:$0xf]
    %v3518 = vld [vmem:[#allocation5 + $0xbc] sm:$0xf]
    %v3519 = vld [vmem:[#allocation5 + $0xc0] sm:$0xf]
    %v3520 = vld [vmem:[#allocation5 + $0xc4] sm:$0xf]
    %v3521 = vld [vmem:[#allocation5 + $0xc8] sm:$0xf]
    %v3522 = vld [vmem:[#allocation5 + $0xcc] sm:$0xf]
    %v3523 = vld [vmem:[#allocation5 + $0xd0] sm:$0xf]
    %v3524 = vld [vmem:[#allocation5 + $0xd4] sm:$0xf]
    %v3525 = vld [vmem:[#allocation5 + $0xd8] sm:$0xf]
    %v3526 = vld [vmem:[#allocation5 + $0xdc] sm:$0xf]
    %v3527 = vld [vmem:[#allocation5 + $0xe0] sm:$0xf]
    %v3528 = vld [vmem:[#allocation5 + $0xe4] sm:$0xf]
    %v3529 = vld [vmem:[#allocation5 + $0xe8] sm:$0xf]
    %v3530 = vld [vmem:[#allocation5 + $0xec] sm:$0xf]
    %v3531 = vld [vmem:[#allocation5 + $0xf0] sm:$0xf]
    %v3532 = vld [vmem:[#allocation5 + $0xf4] sm:$0xf]
    %v3533 = vld [vmem:[#allocation5 + $0xf8] sm:$0xf]
    %v3534 = vld [vmem:[#allocation5 + $0xfc] sm:$0xf]
    %v3535 = vld [vmem:[%s5] sm:$0x1]
    %v3537 = vlaneseq
    %v3538 = vshrl.u32 %v3537, 7
    %v3539 = vsub.s32 0, %v3538
    %v3540 = vrot.slane %v3535, %v3539
    %v3606 = vunpack.c.l.b16 %v3471
    %v3607 = vunpack.c.l.b16 %v3472
    %v3608 = vunpack.c.l.b16 %v3473
    %v3609 = vunpack.c.l.b16 %v3474
    %v3610 = vunpack.c.l.b16 %v3475
    %v3611 = vunpack.c.l.b16 %v3476
    %v3612 = vunpack.c.l.b16 %v3477
    %v3613 = vunpack.c.l.b16 %v3478
    %v3614 = vunpack.c.l.b16 %v3479
    %v3615 = vunpack.c.l.b16 %v3480
    %v3616 = vunpack.c.l.b16 %v3481
    %v3617 = vunpack.c.l.b16 %v3482
    %v3618 = vunpack.c.l.b16 %v3483
    %v3619 = vunpack.c.l.b16 %v3484
    %v3620 = vunpack.c.l.b16 %v3485
    %v3621 = vunpack.c.l.b16 %v3486
    %v3622 = vunpack.c.l.b16 %v3487
    %v3623 = vunpack.c.l.b16 %v3488
    %v3624 = vunpack.c.l.b16 %v3489
    %v3625 = vunpack.c.l.b16 %v3490
    %v3626 = vunpack.c.l.b16 %v3491
    %v3627 = vunpack.c.l.b16 %v3492
    %v3628 = vunpack.c.l.b16 %v3493
    %v3629 = vunpack.c.l.b16 %v3494
    %v3630 = vunpack.c.l.b16 %v3495
    %v3631 = vunpack.c.l.b16 %v3496
    %v3632 = vunpack.c.l.b16 %v3497
    %v3633 = vunpack.c.l.b16 %v3498
    %v3634 = vunpack.c.l.b16 %v3499
    %v3635 = vunpack.c.l.b16 %v3500
    %v3636 = vunpack.c.l.b16 %v3501
    %v3637 = vunpack.c.l.b16 %v3502
    %v3638 = vunpack.c.l.b16 %v3503
    %v3639 = vunpack.c.l.b16 %v3504
    %v3640 = vunpack.c.l.b16 %v3505
    %v3641 = vunpack.c.l.b16 %v3506
    %v3642 = vunpack.c.l.b16 %v3507
    %v3643 = vunpack.c.l.b16 %v3508
    %v3644 = vunpack.c.l.b16 %v3509
    %v3645 = vunpack.c.l.b16 %v3510
    %v3646 = vunpack.c.l.b16 %v3511
    %v3647 = vunpack.c.l.b16 %v3512
    %v3648 = vunpack.c.l.b16 %v3513
    %v3649 = vunpack.c.l.b16 %v3514
    %v3650 = vunpack.c.l.b16 %v3515
    %v3651 = vunpack.c.l.b16 %v3516
    %v3652 = vunpack.c.l.b16 %v3517
    %v3653 = vunpack.c.l.b16 %v3518
    %v3654 = vunpack.c.l.b16 %v3519
    %v3655 = vunpack.c.l.b16 %v3520
    %v3656 = vunpack.c.l.b16 %v3521
    %v3657 = vunpack.c.l.b16 %v3522
    %v3658 = vunpack.c.l.b16 %v3523
    %v3659 = vunpack.c.l.b16 %v3524
    %v3660 = vunpack.c.l.b16 %v3525
    %v3661 = vunpack.c.l.b16 %v3526
    %v3662 = vunpack.c.l.b16 %v3527
    %v3663 = vunpack.c.l.b16 %v3528
    %v3664 = vunpack.c.l.b16 %v3529
    %v3665 = vunpack.c.l.b16 %v3530
    %v3666 = vunpack.c.l.b16 %v3531
    %v3667 = vunpack.c.l.b16 %v3532
    %v3668 = vunpack.c.l.b16 %v3533
    %v3669 = vunpack.c.l.b16 %v3534
    %v3670 = vpack.c.b16 %v3607, %v3606
    %v3671 = vpack.c.b16 %v3609, %v3608
    %v3672 = vpack.c.b16 %v3611, %v3610
    %v3673 = vpack.c.b16 %v3613, %v3612
    %v3674 = vpack.c.b16 %v3615, %v3614
    %v3675 = vpack.c.b16 %v3617, %v3616
    %v3676 = vpack.c.b16 %v3619, %v3618
    %v3677 = vpack.c.b16 %v3621, %v3620
    %v3678 = vpack.c.b16 %v3623, %v3622
    %v3679 = vpack.c.b16 %v3625, %v3624
    %v3680 = vpack.c.b16 %v3627, %v3626
    %v3681 = vpack.c.b16 %v3629, %v3628
    %v3682 = vpack.c.b16 %v3631, %v3630
    %v3683 = vpack.c.b16 %v3633, %v3632
    %v3684 = vpack.c.b16 %v3635, %v3634
    %v3685 = vpack.c.b16 %v3637, %v3636
    %v3686 = vpack.c.b16 %v3639, %v3638
    %v3687 = vpack.c.b16 %v3641, %v3640
    %v3688 = vpack.c.b16 %v3643, %v3642
    %v3689 = vpack.c.b16 %v3645, %v3644
    %v3690 = vpack.c.b16 %v3647, %v3646
    %v3691 = vpack.c.b16 %v3649, %v3648
    %v3692 = vpack.c.b16 %v3651, %v3650
    %v3693 = vpack.c.b16 %v3653, %v3652
    %v3694 = vpack.c.b16 %v3655, %v3654
    %v3695 = vpack.c.b16 %v3657, %v3656
    %v3696 = vpack.c.b16 %v3659, %v3658
    %v3697 = vpack.c.b16 %v3661, %v3660
    %v3698 = vpack.c.b16 %v3663, %v3662
    %v3699 = vpack.c.b16 %v3665, %v3664
    %v3700 = vpack.c.b16 %v3667, %v3666
    %v3701 = vpack.c.b16 %v3669, %v3668
    %3734 = vmatprep.subr.bf16.mxu0 0
    %3735 = vmatpush1.bf16.msra.mxu0 %v3670
    %3736 = vmatprep.subr.bf16.mxu0 0
    %3737 = vmatpush1.bf16.msra.mxu0 %v3671
    %3738 = vmatprep.subr.bf16.mxu0 0
    %3739 = vmatpush1.bf16.msra.mxu0 %v3672
    %3740 = vmatprep.subr.bf16.mxu0 0
    %3741 = vmatpush1.bf16.msra.mxu0 %v3673
    %3742 = vmatprep.subr.bf16.mxu0 0
    %3743 = vmatpush1.bf16.msra.mxu0 %v3674
    %3744 = vmatprep.subr.bf16.mxu0 0
    %3745 = vmatpush1.bf16.msra.mxu0 %v3675
    %3746 = vmatprep.subr.bf16.mxu0 0
    %3747 = vmatpush1.bf16.msra.mxu0 %v3676
    %3748 = vmatprep.subr.bf16.mxu0 0
    %3749 = vmatpush1.bf16.msra.mxu0 %v3677
    %3750 = vmatprep.subr.bf16.mxu0 0
    %3751 = vmatpush1.bf16.msra.mxu0 %v3678
    %3752 = vmatprep.subr.bf16.mxu0 0
    %3753 = vmatpush1.bf16.msra.mxu0 %v3679
    %3754 = vmatprep.subr.bf16.mxu0 0
    %3755 = vmatpush1.bf16.msra.mxu0 %v3680
    %3756 = vmatprep.subr.bf16.mxu0 0
    %3757 = vmatpush1.bf16.msra.mxu0 %v3681
    %3758 = vmatprep.subr.bf16.mxu0 0
    %3759 = vmatpush1.bf16.msra.mxu0 %v3682
    %3760 = vmatprep.subr.bf16.mxu0 0
    %3761 = vmatpush1.bf16.msra.mxu0 %v3683
    %3762 = vmatprep.subr.bf16.mxu0 0
    %3763 = vmatpush1.bf16.msra.mxu0 %v3684
    %3764 = vmatprep.subr.bf16.mxu0 0
    %3765 = vmatpush1.bf16.msra.mxu0 %v3685
    %3766 = vmatprep.mubr.bf16.mxu0 %v3468
    %3767 = vmatmul.mubr.bf16.gmra.mrb[0].mxu0 %v3467
    %v3768 = vpop.f32.mrb[0].mxu0
    %v3769 = vadd.f32 %v3540, %v3768
    %v3770 = vpop.f32.mrb[0].mxu0
    %v3771 = vpop.f32.mrb[0].mxu0
    %v3772 = vadd.f32 %v3540, %v3771
    %v3773 = vpop.f32.mrb[0].mxu0
    %3774 = vdwg.mxu0
    %3775 = vmatprep.subr.bf16.mxu0 0
    %3776 = vmatpush1.bf16.msra.mxu0 %v3686
    %3777 = vmatprep.subr.bf16.mxu0 0
    %3778 = vmatpush1.bf16.msra.mxu0 %v3687
    %3779 = vmatprep.subr.bf16.mxu0 0
    %3780 = vmatpush1.bf16.msra.mxu0 %v3688
    %3781 = vmatprep.subr.bf16.mxu0 0
    %3782 = vmatpush1.bf16.msra.mxu0 %v3689
    %3783 = vmatprep.subr.bf16.mxu0 0
    %3784 = vmatpush1.bf16.msra.mxu0 %v3690
    %3785 = vmatprep.subr.bf16.mxu0 0
    %3786 = vmatpush1.bf16.msra.mxu0 %v3691
    %3787 = vmatprep.subr.bf16.mxu0 0
    %3788 = vmatpush1.bf16.msra.mxu0 %v3692
    %3789 = vmatprep.subr.bf16.mxu0 0
    %3790 = vmatpush1.bf16.msra.mxu0 %v3693
    %3791 = vmatprep.subr.bf16.mxu0 0
    %3792 = vmatpush1.bf16.msra.mxu0 %v3694
    %3793 = vmatprep.subr.bf16.mxu0 0
    %3794 = vmatpush1.bf16.msra.mxu0 %v3695
    %3795 = vmatprep.subr.bf16.mxu0 0
    %3796 = vmatpush1.bf16.msra.mxu0 %v3696
    %3797 = vmatprep.subr.bf16.mxu0 0
    %3798 = vmatpush1.bf16.msra.mxu0 %v3697
    %3799 = vmatprep.subr.bf16.mxu0 0
    %3800 = vmatpush1.bf16.msra.mxu0 %v3698
    %3801 = vmatprep.subr.bf16.mxu0 0
    %3802 = vmatpush1.bf16.msra.mxu0 %v3699
    %3803 = vmatprep.subr.bf16.mxu0 0
    %3804 = vmatpush1.bf16.msra.mxu0 %v3700
    %3805 = vmatprep.subr.bf16.mxu0 0
    %3806 = vmatpush1.bf16.msra.mxu0 %v3701
    %3807 = vmatprep.mubr.bf16.mxu0 %v3470
    %3808 = vmatmul.mubr.bf16.gmra.mrb[0].mxu0 %v3469
    %v3809 = vpop.f32.mrb[0].mxu0
    %v3810 = vadd.f32 %v3769, %v3809
    %v3811 = vpop.f32.mrb[0].mxu0
    %v3812 = vpop.f32.mrb[0].mxu0
    %v3813 = vadd.f32 %v3772, %v3812
    %v3814 = vpop.f32.mrb[0].mxu0
    %3815 = vdwg.mxu0
    %3816 = vst [vmem:[%s6] sm:$0xff] %v3810
    %3817 = vst [vmem:[%s6 + $0x8] sm:$0xff] %v3813
    // Predicated region
    $region30: #{qst_encoder_forward.3} parent=1 // pred_check
      _
    $region31: #{qst_encoder_forward.3} parent=1 // pred_check_branch
      %3819 = sbr.rel (0) target = $region33
    $region32: #{qst_encoder_forward.3} parent=1 // pred_region
      _
    $region33: #{qst_encoder_forward.3} parent=1 // pred_fallthru
      _
    // Predicated region
    $region34: #{qst_encoder_forward.3} parent=1 // pred_check
      _
    $region35: #{qst_encoder_forward.3} parent=1 // pred_check_branch
      %3821 = sbr.rel (0) target = $region37
    $region36: #{qst_encoder_forward.3} parent=1 // pred_region
      _
    $region37: #{qst_encoder_forward.3} parent=1 // pred_fallthru
      _
    %3822 = vsyncpa [#allocation6], 1

</llo_original>
